<compile_context>
chip_gen: v5e
topology: v5e:2x2
jax: 0.10.0
libtpu: 0.0.40
codegen_flags: <defaults>
</compile_context>

<pallas_src>
import jax
import jax.numpy as jnp
from jax.experimental import pallas as pl
from jax.experimental.pallas import tpu as pltpu

# ---- model dimensions (small, consistent with the module's forward) ----
SRC_LEN = 8      # input_sentence.shape[0]
TGT_LEN = 8      # target_sentence.shape[0]
BATCH = 4        # input_sentence.shape[1]
INPUT_DIM = 20   # source vocab
OUTPUT_DIM = 24  # target vocab (decoder.output_dim)
EMB_DIM = 16
ENC_HID = 32
DEC_HID = 32

# -------- packed-parameter layout: one (rows, 128) f32 slab, one DMA --------
_PIECES = (
    ("w_if",        EMB_DIM + 1,     3 * ENC_HID),   # enc fwd input proj (+bias row)
    ("w_ib",        EMB_DIM + 1,     3 * ENC_HID),   # enc bwd input proj (+bias row)
    ("w_hf",        ENC_HID,         3 * ENC_HID),   # enc fwd hidden proj
    ("w_hb",        ENC_HID,         3 * ENC_HID),   # enc bwd hidden proj
    ("bh_f",        BATCH,           3 * ENC_HID),   # enc fwd hidden bias (replicated)
    ("bh_b",        BATCH,           3 * ENC_HID),
    ("w_fc_f",      ENC_HID,         DEC_HID),       # bridge fc, fwd half
    ("w_fc_b",      ENC_HID,         DEC_HID),       # bridge fc, bwd half
    ("b_fc",        BATCH,           DEC_HID),
    ("w_e_aug",     2 * ENC_HID + 1, DEC_HID),       # attn enc-side weight (+attn_b row)
    ("w_hid",       DEC_HID,         4 * DEC_HID),   # fused [attn_wh | dec_wh] = (32,128)
    ("v_col",       DEC_HID,         1),             # attn v as a column
    ("w_xi_aug",    EMB_DIM + 1,     3 * DEC_HID),   # dec input proj, emb cols (+dec_bi)
    ("w_wi",        2 * ENC_HID,     3 * DEC_HID),   # dec input proj, weighted cols
    ("bh_d",        BATCH,           3 * DEC_HID),
    ("w_out_h",     DEC_HID,         OUTPUT_DIM),
    ("w_out_w",     2 * ENC_HID,     OUTPUT_DIM),
    ("w_out_e_aug", EMB_DIM + 1,     OUTPUT_DIM),    # out proj, emb cols (+out_b)
)


def _build_offsets():
    offs, r = {}, 0
    for name, rows, cols in _PIECES:
        offs[name] = (r, rows, cols)
        r += ((rows + 7) // 8) * 8        # keep every piece 8-sublane aligned
    return offs, r


_OFFS, _PACK_ROWS = _build_offsets()      # 552 rows total (~283 KB)
_PACK_COLS = 128


def _mm(x, w):
    """x:(M, K) @ w:(K, N) -> (M, N); plain NN matmul, f32 accumulation."""
    return jax.lax.dot_general(
        x, w, dimension_numbers=(((1,), (0,)), ((), ())),
        preferred_element_type=jnp.float32)


def seq2seq_kernel(src_ref, tgt_ref, p_ref, out_ref, h_scr, w_scr):
    B, S, T = BATCH, SRC_LEN, TGT_LEN
    H, D, V = ENC_HID, DEC_HID, OUTPUT_DIM

    def get(name):
        r0, rows, cols = _OFFS[name]
        return p_ref[pl.ds(r0, rows), pl.ds(0, cols)]

    def gru_gates(gi, gh, h, hid):
        # PyTorch GRUCell gate order (r, z, n); biases already folded into gi/gh.
        rz = jax.nn.sigmoid(gi[:, :2 * hid] + gh[:, :2 * hid])
        r = rz[:, :hid]
        z = rz[:, hid:]
        n = jnp.tanh(gi[:, 2 * hid:] + r * gh[:, 2 * hid:])
        return (1.0 - z) * n + z * h

    # ----------------------- encoder (bidirectional GRU) -----------------------
    src = src_ref[...]                              # (S*B, E+1), trailing ones col
    gi_f_all = _mm(src, get("w_if"))                # (S*B, 3H), input bias folded
    gi_b_all = _mm(src, get("w_ib"))
    wh_f = get("w_hf"); wh_b = get("w_hb")
    bh_f = get("bh_f"); bh_b = get("bh_b")

    h_f = jnp.zeros((B, H), jnp.float32)
    h_b = jnp.zeros((B, H), jnp.float32)
    fwd = [None] * S
    bwd = [None] * S
    # fwd/bwd are independent dependency chains; the fused unrolled loop lets
    # their per-step matmuls overlap.  (A block-diagonal 8-row packing would
    # halve the MXU pushes per step but needs per-step state restitching;
    # deliberately skipped to keep the serial chain simple.)
    for t in range(S):
        tb = S - 1 - t
        h_f = gru_gates(gi_f_all[t * B:(t + 1) * B, :],
                        _mm(h_f, wh_f) + bh_f, h_f, H)
        h_b = gru_gates(gi_b_all[tb * B:(tb + 1) * B, :],
                        _mm(h_b, wh_b) + bh_b, h_b, H)
        fwd[t] = h_f
        bwd[tb] = h_b

    # bridge: hidden = tanh(fc(cat(h_f, h_b))) as split matmuls (no concat)
    hid = jnp.tanh(_mm(h_f, get("w_fc_f")) + _mm(h_b, get("w_fc_b")) + get("b_fc"))

    # Encoder outputs in s-major rows (row = s*B + b), augmented with a ones
    # column: the same selector matmul later yields both the weighted context
    # and the per-batch softmax denominator, and attn_b folds into e_term.
    enc_fb = jnp.concatenate(
        [jnp.concatenate(fwd, axis=0), jnp.concatenate(bwd, axis=0)], axis=1)  # (S*B, 2H)
    enc_aug = jnp.concatenate(
        [enc_fb, jnp.ones((S * B, 1), jnp.float32)], axis=1)                   # (S*B, 2H+1)

    # --------------- loop-invariant decoder / attention terms ---------------
    e_term = _mm(enc_aug, get("w_e_aug"))           # (S*B, D), attn_b folded
    w_hid = get("w_hid")                            # (D, 4D): [attn_wh | dec_wh]
    v_col = get("v_col")                            # (D, 1)
    w_wi = get("w_wi")                              # (2H, 3D)
    bh_d = get("bh_d")                              # (B, 3D)
    tgt = tgt_ref[...]                              # ((T-1)*B, E+1)
    gi_x_all = _mm(tgt, get("w_xi_aug"))            # ((T-1)*B, 3D), dec_bi folded
    pred_x = _mm(tgt, get("w_out_e_aug"))           # ((T-1)*B, V), out_b folded

    # Per-batch selector (row r belongs to batch r % B): one MXU op later sums
    # the context over S and produces the denominator in its last lane.
    r_bs = jax.lax.broadcasted_iota(jnp.int32, (B, S * B), 0)
    c_bs = jax.lax.broadcasted_iota(jnp.int32, (B, S * B), 1) % B
    sel_t = (r_bs == c_bs).astype(jnp.float32)      # (B, S*B)

    # ----------- decoder recurrence (teacher forcing), fully unrolled -----------
    for t in range(1, T):
        # One fused MXU op per step for everything depending on hid:
        # lanes [0, D) -> attention h_term, lanes [D, 4D) -> GRU hidden gates.
        fused = _mm(hid, w_hid)                     # (B, 4D) == one 128-lane tile
        h_term = fused[:, :D]
        gh = fused[:, D:] + bh_d                    # (B, 3D)

        # Broadcast h_term over the S source positions with sublane-doubling
        # concats (idle-slot copies) instead of a selector-matrix MXU op.
        h_bcast = h_term
        while h_bcast.shape[0] < S * B:             # S*B == B * 2**3 here
            h_bcast = jnp.concatenate([h_bcast, h_bcast], axis=0)

        energy = jnp.tanh(e_term + h_bcast)         # (S*B, D)
        score = _mm(energy, v_col)                  # (S*B, 1), MXU reduce
        # no max-subtraction: energy is tanh-bounded so |score| <= ||attn_v||_1
        ex = jnp.exp(score)
        wa = _mm(sel_t, ex * enc_aug)               # (B, 2H+1): [ctx_unnorm | denom]
        weighted = wa[:, :2 * H] * pl.reciprocal(wa[:, 2 * H:], approx=True)

        # decoder GRU step: cat(embedded, weighted) @ Wi.T == split-matmul sum
        gi = gi_x_all[(t - 1) * B:t * B, :] + _mm(weighted, w_wi)   # (B, 3D)
        hid = gru_gates(gi, gh, hid, D)

        # spill per-step results to VMEM scratch (vst slot is otherwise idle)
        # instead of keeping them live in vregs until the output projection.
        h_scr[pl.ds((t - 1) * B, B), :] = hid
        w_scr[pl.ds((t - 1) * B, B), :] = weighted

    # ---- batched output projection + one aligned full-slab output store ----
    pred = (_mm(h_scr[...], get("w_out_h"))
            + _mm(w_scr[...], get("w_out_w")) + pred_x)              # ((T-1)*B, V)
    # outputs[0] stays zero, exactly like torch.zeros(...) in the reference.
    out_ref[...] = jnp.concatenate(
        [jnp.zeros((B, V), jnp.float32), pred], axis=0)


def pack_params(p):
    """One-time repack of every weight/bias into a single (rows, 128) f32 slab.

    Weights are pre-transposed to (In, Out) column blocks; per-gate input
    biases become augmented weight rows (activations carry a ones column);
    recurrence/bridge biases are replicated to BATCH rows so the kernel never
    broadcasts across sublanes.  Call once outside the per-step path.
    """
    E, H, D = EMB_DIM, ENC_HID, DEC_HID
    vals = {
        "w_if": jnp.concatenate([p["enc_wi_f"].T, p["enc_bi_f"]], axis=0),
        "w_ib": jnp.concatenate([p["enc_wi_b"].T, p["enc_bi_b"]], axis=0),
        "w_hf": p["enc_wh_f"].T,
        "w_hb": p["enc_wh_b"].T,
        "bh_f": jnp.tile(p["enc_bh_f"], (BATCH, 1)),
        "bh_b": jnp.tile(p["enc_bh_b"], (BATCH, 1)),
        "w_fc_f": p["enc_wfc"][:, :H].T,
        "w_fc_b": p["enc_wfc"][:, H:].T,
        "b_fc": jnp.tile(p["enc_bfc"], (BATCH, 1)),
        "w_e_aug": jnp.concatenate([p["attn_w"][:, D:].T, p["attn_b"]], axis=0),
        "w_hid": jnp.concatenate([p["attn_w"][:, :D].T, p["dec_wh"].T], axis=1),
        "v_col": p["attn_v"].T,
        "w_xi_aug": jnp.concatenate([p["dec_wi"][:, :E].T, p["dec_bi"]], axis=0),
        "w_wi": p["dec_wi"][:, E:].T,
        "bh_d": jnp.tile(p["dec_bh"], (BATCH, 1)),
        "w_out_h": p["out_w"][:, :D].T,
        "w_out_w": p["out_w"][:, D:D + 2 * H].T,
        "w_out_e_aug": jnp.concatenate([p["out_w"][:, D + 2 * H:].T, p["out_b"]], axis=0),
    }
    packed = jnp.zeros((_PACK_ROWS, _PACK_COLS), jnp.float32)
    for name, rows, cols in _PIECES:
        r0 = _OFFS[name][0]
        packed = packed.at[r0:r0 + rows, :cols].set(vals[name].astype(jnp.float32))
    return packed


def seq2seq_forward(src_tokens, tgt_tokens, enc_emb, dec_emb, packed):
    """Teacher-forced Seq2Seq forward; returns (TGT_LEN, BATCH, OUTPUT_DIM)."""
    E = EMB_DIM
    # embedding lookups (data-dependent gathers) stay as JAX glue
    src2 = enc_emb[src_tokens].reshape(SRC_LEN * BATCH, E)
    tgt2 = dec_emb[tgt_tokens][:TGT_LEN - 1].reshape((TGT_LEN - 1) * BATCH, E)
    # trailing ones column folds all input-projection biases into the weights
    src_aug = jnp.concatenate(
        [src2, jnp.ones((SRC_LEN * BATCH, 1), jnp.float32)], axis=1)
    tgt_aug = jnp.concatenate(
        [tgt2, jnp.ones(((TGT_LEN - 1) * BATCH, 1), jnp.float32)], axis=1)

    vmem = pl.BlockSpec(memory_space=pltpu.MemorySpace.VMEM)
    out2 = pl.pallas_call(
        seq2seq_kernel,
        out_shape=jax.ShapeDtypeStruct((TGT_LEN * BATCH, OUTPUT_DIM), jnp.float32),
        in_specs=[vmem, vmem, vmem],
        out_specs=vmem,
        scratch_shapes=[
            pltpu.VMEM(((TGT_LEN - 1) * BATCH, DEC_HID), jnp.float32),
            pltpu.VMEM(((TGT_LEN - 1) * BATCH, 2 * ENC_HID), jnp.float32),
        ],
    )(src_aug, tgt_aug, packed)
    # Kernel produces a lane-dense 2-D slab; reshape back to (T, B, V).
    return out2.reshape(TGT_LEN, BATCH, OUTPUT_DIM)


def init_params(key):
    keys = iter(jax.random.split(key, 32))

    def w(shape, scale=0.1):
        return (scale * jax.random.normal(next(keys), shape)).astype(jnp.float32)

    p = {}
    p['enc_embedding'] = w((INPUT_DIM, EMB_DIM))
    p['dec_embedding'] = w((OUTPUT_DIM, EMB_DIM))
    # encoder bidirectional GRU (PyTorch layout: (out_features, in_features))
    p['enc_wi_f'] = w((3 * ENC_HID, EMB_DIM))
    p['enc_wh_f'] = w((3 * ENC_HID, ENC_HID))
    p['enc_bi_f'] = w((1, 3 * ENC_HID))
    p['enc_bh_f'] = w((1, 3 * ENC_HID))
    p['enc_wi_b'] = w((3 * ENC_HID, EMB_DIM))
    p['enc_wh_b'] = w((3 * ENC_HID, ENC_HID))
    p['enc_bi_b'] = w((1, 3 * ENC_HID))
    p['enc_bh_b'] = w((1, 3 * ENC_HID))
    # encoder hidden bridge fc
    p['enc_wfc'] = w((DEC_HID, 2 * ENC_HID))
    p['enc_bfc'] = w((1, DEC_HID))
    # attention
    p['attn_w'] = w((DEC_HID, DEC_HID + 2 * ENC_HID))
    p['attn_b'] = w((1, DEC_HID))
    p['attn_v'] = w((1, DEC_HID))
    # decoder GRU (input = cat(embedded, weighted))
    p['dec_wi'] = w((3 * DEC_HID, EMB_DIM + 2 * ENC_HID))
    p['dec_wh'] = w((3 * DEC_HID, DEC_HID))
    p['dec_bi'] = w((1, 3 * DEC_HID))
    p['dec_bh'] = w((1, 3 * DEC_HID))
    # fc_out(cat(output, weighted, embedded))
    p['out_w'] = w((OUTPUT_DIM, DEC_HID + 2 * ENC_HID + EMB_DIM))
    p['out_b'] = w((1, OUTPUT_DIM))
    return p


def reference_forward(src_tokens, tgt_tokens, p):
    """Pure-JAX reference mirroring the PyTorch forward (teacher forcing)."""
    src_emb = p['enc_embedding'][src_tokens]
    tgt_emb = p['dec_embedding'][tgt_tokens]

    def gru(x, h, wi, wh, bi, bh, hid):
        gi = x @ wi.T + bi[0]
        gh = h @ wh.T + bh[0]
        r = jax.nn.sigmoid(gi[:, :hid] + gh[:, :hid])
        z = jax.nn.sigmoid(gi[:, hid:2 * hid] + gh[:, hid:2 * hid])
        n = jnp.tanh(gi[:, 2 * hid:] + r * gh[:, 2 * hid:])
        return (1 - z) * n + z * h

    hf = jnp.zeros((BATCH, ENC_HID), jnp.float32)
    hb = jnp.zeros((BATCH, ENC_HID), jnp.float32)
    fwd, bwd = [], [None] * SRC_LEN
    for t in range(SRC_LEN):
        hf = gru(src_emb[t], hf, p['enc_wi_f'], p['enc_wh_f'],
                 p['enc_bi_f'], p['enc_bh_f'], ENC_HID)
        fwd.append(hf)
    for t in range(SRC_LEN - 1, -1, -1):
        hb = gru(src_emb[t], hb, p['enc_wi_b'], p['enc_wh_b'],
                 p['enc_bi_b'], p['enc_bh_b'], ENC_HID)
        bwd[t] = hb
    enc_out = jnp.concatenate([jnp.stack(fwd), jnp.stack(bwd)], axis=-1)  # (S,B,2H)
    hidden = jnp.tanh(jnp.concatenate([hf, hb], -1) @ p['enc_wfc'].T + p['enc_bfc'][0])

    outputs = [jnp.zeros((BATCH, OUTPUT_DIM), jnp.float32)]
    for t in range(1, TGT_LEN):
        x = tgt_emb[t - 1]
        w_hh = p['attn_w'][:, :DEC_HID]
        w_e = p['attn_w'][:, DEC_HID:]
        energy = jnp.tanh((hidden @ w_hh.T + p['attn_b'][0])[None]
                          + jnp.einsum('sbe,de->sbd', enc_out, w_e))
        score = jnp.einsum('sbd,d->sb', energy, p['attn_v'][0])
        a = jax.nn.softmax(score, axis=0)
        weighted = jnp.einsum('sb,sbe->be', a, enc_out)
        rnn_in = jnp.concatenate([x, weighted], -1)
        hidden = gru(rnn_in, hidden, p['dec_wi'], p['dec_wh'],
                     p['dec_bi'], p['dec_bh'], DEC_HID)
        pred = jnp.concatenate([hidden, weighted, x], -1) @ p['out_w'].T + p['out_b'][0]
        outputs.append(pred)
    return jnp.stack(outputs)


if __name__ == "__main__":
    key = jax.random.PRNGKey(0)
    pkey, skey, tkey = jax.random.split(key, 3)
    params = init_params(pkey)
    src = jax.random.randint(skey, (SRC_LEN, BATCH), 0, INPUT_DIM, dtype=jnp.int32)
    tgt = jax.random.randint(tkey, (TGT_LEN, BATCH), 0, OUTPUT_DIM, dtype=jnp.int32)

    packed = pack_params(params)          # one-time repack, off the per-call path
    fwd_fn = jax.jit(seq2seq_forward)
    out = fwd_fn(src, tgt, params['enc_embedding'], params['dec_embedding'], packed)
    out = jax.block_until_ready(out)

    ref = reference_forward(src, tgt, params)
    assert out.shape == (TGT_LEN, BATCH, OUTPUT_DIM)
    max_err = float(jnp.max(jnp.abs(out - ref)))
    # Tolerance 2e-3 accommodates the approximate EUP reciprocal in the softmax.
    assert jnp.allclose(out, ref, atol=2e-3, rtol=2e-3), max_err
    print("KERNEL_OK")
</pallas_src>

<mosaic_0001>
module attributes {stable_mosaic.version = 11 : i64} {
  func.func @seq2seq_kernel(%arg0: memref<32x17xf32, #tpu.memory_space<vmem>>, %arg1: memref<28x17xf32, #tpu.memory_space<vmem>>, %arg2: memref<552x128xf32, #tpu.memory_space<vmem>>, %arg3: memref<32x24xf32, #tpu.memory_space<vmem>>, %arg4: memref<28x32xf32, #tpu.memory_space<vmem>>, %arg5: memref<28x64xf32, #tpu.memory_space<vmem>>) attributes {dimension_semantics = [], scalar_prefetch = 0 : i64, scratch_operands = 2 : i64, tpu.core_type = #tpu.core_type<tc>} {
    %c0 = arith.constant 0 : index
    %c0_0 = arith.constant 0 : index
    %0 = vector.load %arg0[%c0, %c0_0] : memref<32x17xf32, #tpu.memory_space<vmem>>, vector<32x17xf32>
    %c0_1 = arith.constant 0 : index
    %c0_2 = arith.constant 0 : index
    %1 = vector.load %arg2[%c0_1, %c0_2] : memref<552x128xf32, #tpu.memory_space<vmem>>, vector<17x96xf32>
    %cst = arith.constant dense<0.000000e+00> : vector<32x96xf32>
    %2 = tpu.matmul %0, %1, %cst {dimension_numbers = #tpu.dot_dimension_numbers<[1], [0], [0], [1], [0, 0, 1, 1], [], []>} : vector<32x17xf32>, vector<17x96xf32>, vector<32x96xf32> -> vector<32x96xf32>
    %c24 = arith.constant 24 : index
    %c0_3 = arith.constant 0 : index
    %3 = vector.load %arg2[%c24, %c0_3] : memref<552x128xf32, #tpu.memory_space<vmem>>, vector<17x96xf32>
    %cst_4 = arith.constant dense<0.000000e+00> : vector<32x96xf32>
    %4 = tpu.matmul %0, %3, %cst_4 {dimension_numbers = #tpu.dot_dimension_numbers<[1], [0], [0], [1], [0, 0, 1, 1], [], []>} : vector<32x17xf32>, vector<17x96xf32>, vector<32x96xf32> -> vector<32x96xf32>
    %c48 = arith.constant 48 : index
    %c0_5 = arith.constant 0 : index
    %5 = vector.load %arg2[%c48, %c0_5] : memref<552x128xf32, #tpu.memory_space<vmem>>, vector<32x96xf32>
    %c80 = arith.constant 80 : index
    %c0_6 = arith.constant 0 : index
    %6 = vector.load %arg2[%c80, %c0_6] : memref<552x128xf32, #tpu.memory_space<vmem>>, vector<32x96xf32>
    %c112 = arith.constant 112 : index
    %c0_7 = arith.constant 0 : index
    %7 = vector.load %arg2[%c112, %c0_7] : memref<552x128xf32, #tpu.memory_space<vmem>>, vector<4x96xf32>
    %c120 = arith.constant 120 : index
    %c0_8 = arith.constant 0 : index
    %8 = vector.load %arg2[%c120, %c0_8] : memref<552x128xf32, #tpu.memory_space<vmem>>, vector<4x96xf32>
    %cst_9 = arith.constant 0.000000e+00 : f32
    %9 = vector.broadcast %cst_9 : f32 to vector<4x32xf32>
    %cst_10 = arith.constant 0.000000e+00 : f32
    %10 = vector.broadcast %cst_10 : f32 to vector<4x32xf32>
    %11 = vector.extract_strided_slice %2 {offsets = [0, 0], sizes = [4, 96], strides = [1, 1]} : vector<32x96xf32> to vector<4x96xf32>
    %cst_11 = arith.constant dense<0.000000e+00> : vector<4x96xf32>
    %12 = tpu.matmul %9, %5, %cst_11 {dimension_numbers = #tpu.dot_dimension_numbers<[1], [0], [0], [1], [0, 0, 1, 1], [], []>} : vector<4x32xf32>, vector<32x96xf32>, vector<4x96xf32> -> vector<4x96xf32>
    %13 = arith.addf %12, %7 : vector<4x96xf32>
    %14 = vector.extract_strided_slice %11 {offsets = [0, 0], sizes = [4, 64], strides = [1, 1]} : vector<4x96xf32> to vector<4x64xf32>
    %15 = vector.extract_strided_slice %13 {offsets = [0, 0], sizes = [4, 64], strides = [1, 1]} : vector<4x96xf32> to vector<4x64xf32>
    %16 = arith.addf %14, %15 : vector<4x64xf32>
    %17 = arith.negf %16 : vector<4x64xf32>
    %18 = math.exp %17 : vector<4x64xf32>
    %cst_12 = arith.constant 1.000000e+00 : f32
    %19 = vector.broadcast %cst_12 : f32 to vector<4x64xf32>
    %20 = arith.addf %19, %18 : vector<4x64xf32>
    %21 = arith.divf %19, %20 : vector<4x64xf32>
    %22 = vector.extract_strided_slice %21 {offsets = [0, 0], sizes = [4, 32], strides = [1, 1]} : vector<4x64xf32> to vector<4x32xf32>
    %23 = vector.extract_strided_slice %21 {offsets = [0, 32], sizes = [4, 32], strides = [1, 1]} : vector<4x64xf32> to vector<4x32xf32>
    %24 = vector.extract_strided_slice %11 {offsets = [0, 64], sizes = [4, 32], strides = [1, 1]} : vector<4x96xf32> to vector<4x32xf32>
    %25 = vector.extract_strided_slice %13 {offsets = [0, 64], sizes = [4, 32], strides = [1, 1]} : vector<4x96xf32> to vector<4x32xf32>
    %26 = arith.mulf %22, %25 : vector<4x32xf32>
    %27 = arith.addf %24, %26 : vector<4x32xf32>
    %28 = math.tanh %27 : vector<4x32xf32>
    %cst_13 = arith.constant 1.000000e+00 : f32
    %29 = vector.broadcast %cst_13 : f32 to vector<4x32xf32>
    %30 = arith.subf %29, %23 : vector<4x32xf32>
    %31 = arith.mulf %30, %28 : vector<4x32xf32>
    %32 = arith.mulf %23, %9 : vector<4x32xf32>
    %33 = arith.addf %31, %32 : vector<4x32xf32>
    %34 = vector.extract_strided_slice %4 {offsets = [28, 0], sizes = [4, 96], strides = [1, 1]} : vector<32x96xf32> to vector<4x96xf32>
    %cst_14 = arith.constant dense<0.000000e+00> : vector<4x96xf32>
    %35 = tpu.matmul %10, %6, %cst_14 {dimension_numbers = #tpu.dot_dimension_numbers<[1], [0], [0], [1], [0, 0, 1, 1], [], []>} : vector<4x32xf32>, vector<32x96xf32>, vector<4x96xf32> -> vector<4x96xf32>
    %36 = arith.addf %35, %8 : vector<4x96xf32>
    %37 = vector.extract_strided_slice %34 {offsets = [0, 0], sizes = [4, 64], strides = [1, 1]} : vector<4x96xf32> to vector<4x64xf32>
    %38 = vector.extract_strided_slice %36 {offsets = [0, 0], sizes = [4, 64], strides = [1, 1]} : vector<4x96xf32> to vector<4x64xf32>
    %39 = arith.addf %37, %38 : vector<4x64xf32>
    %40 = arith.negf %39 : vector<4x64xf32>
    %41 = math.exp %40 : vector<4x64xf32>
    %cst_15 = arith.constant 1.000000e+00 : f32
    %42 = vector.broadcast %cst_15 : f32 to vector<4x64xf32>
    %43 = arith.addf %42, %41 : vector<4x64xf32>
    %44 = arith.divf %42, %43 : vector<4x64xf32>
    %45 = vector.extract_strided_slice %44 {offsets = [0, 0], sizes = [4, 32], strides = [1, 1]} : vector<4x64xf32> to vector<4x32xf32>
    %46 = vector.extract_strided_slice %44 {offsets = [0, 32], sizes = [4, 32], strides = [1, 1]} : vector<4x64xf32> to vector<4x32xf32>
    %47 = vector.extract_strided_slice %34 {offsets = [0, 64], sizes = [4, 32], strides = [1, 1]} : vector<4x96xf32> to vector<4x32xf32>
    %48 = vector.extract_strided_slice %36 {offsets = [0, 64], sizes = [4, 32], strides = [1, 1]} : vector<4x96xf32> to vector<4x32xf32>
    %49 = arith.mulf %45, %48 : vector<4x32xf32>
    %50 = arith.addf %47, %49 : vector<4x32xf32>
    %51 = math.tanh %50 : vector<4x32xf32>
    %cst_16 = arith.constant 1.000000e+00 : f32
    %52 = vector.broadcast %cst_16 : f32 to vector<4x32xf32>
    %53 = arith.subf %52, %46 : vector<4x32xf32>
    %54 = arith.mulf %53, %51 : vector<4x32xf32>
    %55 = arith.mulf %46, %10 : vector<4x32xf32>
    %56 = arith.addf %54, %55 : vector<4x32xf32>
    %57 = vector.extract_strided_slice %2 {offsets = [4, 0], sizes = [4, 96], strides = [1, 1]} : vector<32x96xf32> to vector<4x96xf32>
    %cst_17 = arith.constant dense<0.000000e+00> : vector<4x96xf32>
    %58 = tpu.matmul %33, %5, %cst_17 {dimension_numbers = #tpu.dot_dimension_numbers<[1], [0], [0], [1], [0, 0, 1, 1], [], []>} : vector<4x32xf32>, vector<32x96xf32>, vector<4x96xf32> -> vector<4x96xf32>
    %59 = arith.addf %58, %7 : vector<4x96xf32>
    %60 = vector.extract_strided_slice %57 {offsets = [0, 0], sizes = [4, 64], strides = [1, 1]} : vector<4x96xf32> to vector<4x64xf32>
    %61 = vector.extract_strided_slice %59 {offsets = [0, 0], sizes = [4, 64], strides = [1, 1]} : vector<4x96xf32> to vector<4x64xf32>
    %62 = arith.addf %60, %61 : vector<4x64xf32>
    %63 = arith.negf %62 : vector<4x64xf32>
    %64 = math.exp %63 : vector<4x64xf32>
    %cst_18 = arith.constant 1.000000e+00 : f32
    %65 = vector.broadcast %cst_18 : f32 to vector<4x64xf32>
    %66 = arith.addf %65, %64 : vector<4x64xf32>
    %67 = arith.divf %65, %66 : vector<4x64xf32>
    %68 = vector.extract_strided_slice %67 {offsets = [0, 0], sizes = [4, 32], strides = [1, 1]} : vector<4x64xf32> to vector<4x32xf32>
    %69 = vector.extract_strided_slice %67 {offsets = [0, 32], sizes = [4, 32], strides = [1, 1]} : vector<4x64xf32> to vector<4x32xf32>
    %70 = vector.extract_strided_slice %57 {offsets = [0, 64], sizes = [4, 32], strides = [1, 1]} : vector<4x96xf32> to vector<4x32xf32>
    %71 = vector.extract_strided_slice %59 {offsets = [0, 64], sizes = [4, 32], strides = [1, 1]} : vector<4x96xf32> to vector<4x32xf32>
    %72 = arith.mulf %68, %71 : vector<4x32xf32>
    %73 = arith.addf %70, %72 : vector<4x32xf32>
    %74 = math.tanh %73 : vector<4x32xf32>
    %cst_19 = arith.constant 1.000000e+00 : f32
    %75 = vector.broadcast %cst_19 : f32 to vector<4x32xf32>
    %76 = arith.subf %75, %69 : vector<4x32xf32>
    %77 = arith.mulf %76, %74 : vector<4x32xf32>
    %78 = arith.mulf %69, %33 : vector<4x32xf32>
    %79 = arith.addf %77, %78 : vector<4x32xf32>
    %80 = vector.extract_strided_slice %4 {offsets = [24, 0], sizes = [4, 96], strides = [1, 1]} : vector<32x96xf32> to vector<4x96xf32>
    %cst_20 = arith.constant dense<0.000000e+00> : vector<4x96xf32>
    %81 = tpu.matmul %56, %6, %cst_20 {dimension_numbers = #tpu.dot_dimension_numbers<[1], [0], [0], [1], [0, 0, 1, 1], [], []>} : vector<4x32xf32>, vector<32x96xf32>, vector<4x96xf32> -> vector<4x96xf32>
    %82 = arith.addf %81, %8 : vector<4x96xf32>
    %83 = vector.extract_strided_slice %80 {offsets = [0, 0], sizes = [4, 64], strides = [1, 1]} : vector<4x96xf32> to vector<4x64xf32>
    %84 = vector.extract_strided_slice %82 {offsets = [0, 0], sizes = [4, 64], strides = [1, 1]} : vector<4x96xf32> to vector<4x64xf32>
    %85 = arith.addf %83, %84 : vector<4x64xf32>
    %86 = arith.negf %85 : vector<4x64xf32>
    %87 = math.exp %86 : vector<4x64xf32>
    %cst_21 = arith.constant 1.000000e+00 : f32
    %88 = vector.broadcast %cst_21 : f32 to vector<4x64xf32>
    %89 = arith.addf %88, %87 : vector<4x64xf32>
    %90 = arith.divf %88, %89 : vector<4x64xf32>
    %91 = vector.extract_strided_slice %90 {offsets = [0, 0], sizes = [4, 32], strides = [1, 1]} : vector<4x64xf32> to vector<4x32xf32>
    %92 = vector.extract_strided_slice %90 {offsets = [0, 32], sizes = [4, 32], strides = [1, 1]} : vector<4x64xf32> to vector<4x32xf32>
    %93 = vector.extract_strided_slice %80 {offsets = [0, 64], sizes = [4, 32], strides = [1, 1]} : vector<4x96xf32> to vector<4x32xf32>
    %94 = vector.extract_strided_slice %82 {offsets = [0, 64], sizes = [4, 32], strides = [1, 1]} : vector<4x96xf32> to vector<4x32xf32>
    %95 = arith.mulf %91, %94 : vector<4x32xf32>
    %96 = arith.addf %93, %95 : vector<4x32xf32>
    %97 = math.tanh %96 : vector<4x32xf32>
    %cst_22 = arith.constant 1.000000e+00 : f32
    %98 = vector.broadcast %cst_22 : f32 to vector<4x32xf32>
    %99 = arith.subf %98, %92 : vector<4x32xf32>
    %100 = arith.mulf %99, %97 : vector<4x32xf32>
    %101 = arith.mulf %92, %56 : vector<4x32xf32>
    %102 = arith.addf %100, %101 : vector<4x32xf32>
    %103 = vector.extract_strided_slice %2 {offsets = [8, 0], sizes = [4, 96], strides = [1, 1]} : vector<32x96xf32> to vector<4x96xf32>
    %cst_23 = arith.constant dense<0.000000e+00> : vector<4x96xf32>
    %104 = tpu.matmul %79, %5, %cst_23 {dimension_numbers = #tpu.dot_dimension_numbers<[1], [0], [0], [1], [0, 0, 1, 1], [], []>} : vector<4x32xf32>, vector<32x96xf32>, vector<4x96xf32> -> vector<4x96xf32>
    %105 = arith.addf %104, %7 : vector<4x96xf32>
    %106 = vector.extract_strided_slice %103 {offsets = [0, 0], sizes = [4, 64], strides = [1, 1]} : vector<4x96xf32> to vector<4x64xf32>
    %107 = vector.extract_strided_slice %105 {offsets = [0, 0], sizes = [4, 64], strides = [1, 1]} : vector<4x96xf32> to vector<4x64xf32>
    %108 = arith.addf %106, %107 : vector<4x64xf32>
    %109 = arith.negf %108 : vector<4x64xf32>
    %110 = math.exp %109 : vector<4x64xf32>
    %cst_24 = arith.constant 1.000000e+00 : f32
    %111 = vector.broadcast %cst_24 : f32 to vector<4x64xf32>
    %112 = arith.addf %111, %110 : vector<4x64xf32>
    %113 = arith.divf %111, %112 : vector<4x64xf32>
    %114 = vector.extract_strided_slice %113 {offsets = [0, 0], sizes = [4, 32], strides = [1, 1]} : vector<4x64xf32> to vector<4x32xf32>
    %115 = vector.extract_strided_slice %113 {offsets = [0, 32], sizes = [4, 32], strides = [1, 1]} : vector<4x64xf32> to vector<4x32xf32>
    %116 = vector.extract_strided_slice %103 {offsets = [0, 64], sizes = [4, 32], strides = [1, 1]} : vector<4x96xf32> to vector<4x32xf32>
    %117 = vector.extract_strided_slice %105 {offsets = [0, 64], sizes = [4, 32], strides = [1, 1]} : vector<4x96xf32> to vector<4x32xf32>
    %118 = arith.mulf %114, %117 : vector<4x32xf32>
    %119 = arith.addf %116, %118 : vector<4x32xf32>
    %120 = math.tanh %119 : vector<4x32xf32>
    %cst_25 = arith.constant 1.000000e+00 : f32
    %121 = vector.broadcast %cst_25 : f32 to vector<4x32xf32>
    %122 = arith.subf %121, %115 : vector<4x32xf32>
    %123 = arith.mulf %122, %120 : vector<4x32xf32>
    %124 = arith.mulf %115, %79 : vector<4x32xf32>
    %125 = arith.addf %123, %124 : vector<4x32xf32>
    %126 = vector.extract_strided_slice %4 {offsets = [20, 0], sizes = [4, 96], strides = [1, 1]} : vector<32x96xf32> to vector<4x96xf32>
    %cst_26 = arith.constant dense<0.000000e+00> : vector<4x96xf32>
    %127 = tpu.matmul %102, %6, %cst_26 {dimension_numbers = #tpu.dot_dimension_numbers<[1], [0], [0], [1], [0, 0, 1, 1], [], []>} : vector<4x32xf32>, vector<32x96xf32>, vector<4x96xf32> -> vector<4x96xf32>
    %128 = arith.addf %127, %8 : vector<4x96xf32>
    %129 = vector.extract_strided_slice %126 {offsets = [0, 0], sizes = [4, 64], strides = [1, 1]} : vector<4x96xf32> to vector<4x64xf32>
    %130 = vector.extract_strided_slice %128 {offsets = [0, 0], sizes = [4, 64], strides = [1, 1]} : vector<4x96xf32> to vector<4x64xf32>
    %131 = arith.addf %129, %130 : vector<4x64xf32>
    %132 = arith.negf %131 : vector<4x64xf32>
    %133 = math.exp %132 : vector<4x64xf32>
    %cst_27 = arith.constant 1.000000e+00 : f32
    %134 = vector.broadcast %cst_27 : f32 to vector<4x64xf32>
    %135 = arith.addf %134, %133 : vector<4x64xf32>
    %136 = arith.divf %134, %135 : vector<4x64xf32>
    %137 = vector.extract_strided_slice %136 {offsets = [0, 0], sizes = [4, 32], strides = [1, 1]} : vector<4x64xf32> to vector<4x32xf32>
    %138 = vector.extract_strided_slice %136 {offsets = [0, 32], sizes = [4, 32], strides = [1, 1]} : vector<4x64xf32> to vector<4x32xf32>
    %139 = vector.extract_strided_slice %126 {offsets = [0, 64], sizes = [4, 32], strides = [1, 1]} : vector<4x96xf32> to vector<4x32xf32>
    %140 = vector.extract_strided_slice %128 {offsets = [0, 64], sizes = [4, 32], strides = [1, 1]} : vector<4x96xf32> to vector<4x32xf32>
    %141 = arith.mulf %137, %140 : vector<4x32xf32>
    %142 = arith.addf %139, %141 : vector<4x32xf32>
    %143 = math.tanh %142 : vector<4x32xf32>
    %cst_28 = arith.constant 1.000000e+00 : f32
    %144 = vector.broadcast %cst_28 : f32 to vector<4x32xf32>
    %145 = arith.subf %144, %138 : vector<4x32xf32>
    %146 = arith.mulf %145, %143 : vector<4x32xf32>
    %147 = arith.mulf %138, %102 : vector<4x32xf32>
    %148 = arith.addf %146, %147 : vector<4x32xf32>
    %149 = vector.extract_strided_slice %2 {offsets = [12, 0], sizes = [4, 96], strides = [1, 1]} : vector<32x96xf32> to vector<4x96xf32>
    %cst_29 = arith.constant dense<0.000000e+00> : vector<4x96xf32>
    %150 = tpu.matmul %125, %5, %cst_29 {dimension_numbers = #tpu.dot_dimension_numbers<[1], [0], [0], [1], [0, 0, 1, 1], [], []>} : vector<4x32xf32>, vector<32x96xf32>, vector<4x96xf32> -> vector<4x96xf32>
    %151 = arith.addf %150, %7 : vector<4x96xf32>
    %152 = vector.extract_strided_slice %149 {offsets = [0, 0], sizes = [4, 64], strides = [1, 1]} : vector<4x96xf32> to vector<4x64xf32>
    %153 = vector.extract_strided_slice %151 {offsets = [0, 0], sizes = [4, 64], strides = [1, 1]} : vector<4x96xf32> to vector<4x64xf32>
    %154 = arith.addf %152, %153 : vector<4x64xf32>
    %155 = arith.negf %154 : vector<4x64xf32>
    %156 = math.exp %155 : vector<4x64xf32>
    %cst_30 = arith.constant 1.000000e+00 : f32
    %157 = vector.broadcast %cst_30 : f32 to vector<4x64xf32>
    %158 = arith.addf %157, %156 : vector<4x64xf32>
    %159 = arith.divf %157, %158 : vector<4x64xf32>
    %160 = vector.extract_strided_slice %159 {offsets = [0, 0], sizes = [4, 32], strides = [1, 1]} : vector<4x64xf32> to vector<4x32xf32>
    %161 = vector.extract_strided_slice %159 {offsets = [0, 32], sizes = [4, 32], strides = [1, 1]} : vector<4x64xf32> to vector<4x32xf32>
    %162 = vector.extract_strided_slice %149 {offsets = [0, 64], sizes = [4, 32], strides = [1, 1]} : vector<4x96xf32> to vector<4x32xf32>
    %163 = vector.extract_strided_slice %151 {offsets = [0, 64], sizes = [4, 32], strides = [1, 1]} : vector<4x96xf32> to vector<4x32xf32>
    %164 = arith.mulf %160, %163 : vector<4x32xf32>
    %165 = arith.addf %162, %164 : vector<4x32xf32>
    %166 = math.tanh %165 : vector<4x32xf32>
    %cst_31 = arith.constant 1.000000e+00 : f32
    %167 = vector.broadcast %cst_31 : f32 to vector<4x32xf32>
    %168 = arith.subf %167, %161 : vector<4x32xf32>
    %169 = arith.mulf %168, %166 : vector<4x32xf32>
    %170 = arith.mulf %161, %125 : vector<4x32xf32>
    %171 = arith.addf %169, %170 : vector<4x32xf32>
    %172 = vector.extract_strided_slice %4 {offsets = [16, 0], sizes = [4, 96], strides = [1, 1]} : vector<32x96xf32> to vector<4x96xf32>
    %cst_32 = arith.constant dense<0.000000e+00> : vector<4x96xf32>
    %173 = tpu.matmul %148, %6, %cst_32 {dimension_numbers = #tpu.dot_dimension_numbers<[1], [0], [0], [1], [0, 0, 1, 1], [], []>} : vector<4x32xf32>, vector<32x96xf32>, vector<4x96xf32> -> vector<4x96xf32>
    %174 = arith.addf %173, %8 : vector<4x96xf32>
    %175 = vector.extract_strided_slice %172 {offsets = [0, 0], sizes = [4, 64], strides = [1, 1]} : vector<4x96xf32> to vector<4x64xf32>
    %176 = vector.extract_strided_slice %174 {offsets = [0, 0], sizes = [4, 64], strides = [1, 1]} : vector<4x96xf32> to vector<4x64xf32>
    %177 = arith.addf %175, %176 : vector<4x64xf32>
    %178 = arith.negf %177 : vector<4x64xf32>
    %179 = math.exp %178 : vector<4x64xf32>
    %cst_33 = arith.constant 1.000000e+00 : f32
    %180 = vector.broadcast %cst_33 : f32 to vector<4x64xf32>
    %181 = arith.addf %180, %179 : vector<4x64xf32>
    %182 = arith.divf %180, %181 : vector<4x64xf32>
    %183 = vector.extract_strided_slice %182 {offsets = [0, 0], sizes = [4, 32], strides = [1, 1]} : vector<4x64xf32> to vector<4x32xf32>
    %184 = vector.extract_strided_slice %182 {offsets = [0, 32], sizes = [4, 32], strides = [1, 1]} : vector<4x64xf32> to vector<4x32xf32>
    %185 = vector.extract_strided_slice %172 {offsets = [0, 64], sizes = [4, 32], strides = [1, 1]} : vector<4x96xf32> to vector<4x32xf32>
    %186 = vector.extract_strided_slice %174 {offsets = [0, 64], sizes = [4, 32], strides = [1, 1]} : vector<4x96xf32> to vector<4x32xf32>
    %187 = arith.mulf %183, %186 : vector<4x32xf32>
    %188 = arith.addf %185, %187 : vector<4x32xf32>
    %189 = math.tanh %188 : vector<4x32xf32>
    %cst_34 = arith.constant 1.000000e+00 : f32
    %190 = vector.broadcast %cst_34 : f32 to vector<4x32xf32>
    %191 = arith.subf %190, %184 : vector<4x32xf32>
    %192 = arith.mulf %191, %189 : vector<4x32xf32>
    %193 = arith.mulf %184, %148 : vector<4x32xf32>
    %194 = arith.addf %192, %193 : vector<4x32xf32>
    %195 = vector.extract_strided_slice %2 {offsets = [16, 0], sizes = [4, 96], strides = [1, 1]} : vector<32x96xf32> to vector<4x96xf32>
    %cst_35 = arith.constant dense<0.000000e+00> : vector<4x96xf32>
    %196 = tpu.matmul %171, %5, %cst_35 {dimension_numbers = #tpu.dot_dimension_numbers<[1], [0], [0], [1], [0, 0, 1, 1], [], []>} : vector<4x32xf32>, vector<32x96xf32>, vector<4x96xf32> -> vector<4x96xf32>
    %197 = arith.addf %196, %7 : vector<4x96xf32>
    %198 = vector.extract_strided_slice %195 {offsets = [0, 0], sizes = [4, 64], strides = [1, 1]} : vector<4x96xf32> to vector<4x64xf32>
    %199 = vector.extract_strided_slice %197 {offsets = [0, 0], sizes = [4, 64], strides = [1, 1]} : vector<4x96xf32> to vector<4x64xf32>
    %200 = arith.addf %198, %199 : vector<4x64xf32>
    %201 = arith.negf %200 : vector<4x64xf32>
    %202 = math.exp %201 : vector<4x64xf32>
    %cst_36 = arith.constant 1.000000e+00 : f32
    %203 = vector.broadcast %cst_36 : f32 to vector<4x64xf32>
    %204 = arith.addf %203, %202 : vector<4x64xf32>
    %205 = arith.divf %203, %204 : vector<4x64xf32>
    %206 = vector.extract_strided_slice %205 {offsets = [0, 0], sizes = [4, 32], strides = [1, 1]} : vector<4x64xf32> to vector<4x32xf32>
    %207 = vector.extract_strided_slice %205 {offsets = [0, 32], sizes = [4, 32], strides = [1, 1]} : vector<4x64xf32> to vector<4x32xf32>
    %208 = vector.extract_strided_slice %195 {offsets = [0, 64], sizes = [4, 32], strides = [1, 1]} : vector<4x96xf32> to vector<4x32xf32>
    %209 = vector.extract_strided_slice %197 {offsets = [0, 64], sizes = [4, 32], strides = [1, 1]} : vector<4x96xf32> to vector<4x32xf32>
    %210 = arith.mulf %206, %209 : vector<4x32xf32>
    %211 = arith.addf %208, %210 : vector<4x32xf32>
    %212 = math.tanh %211 : vector<4x32xf32>
    %cst_37 = arith.constant 1.000000e+00 : f32
    %213 = vector.broadcast %cst_37 : f32 to vector<4x32xf32>
    %214 = arith.subf %213, %207 : vector<4x32xf32>
    %215 = arith.mulf %214, %212 : vector<4x32xf32>
    %216 = arith.mulf %207, %171 : vector<4x32xf32>
    %217 = arith.addf %215, %216 : vector<4x32xf32>
    %218 = vector.extract_strided_slice %4 {offsets = [12, 0], sizes = [4, 96], strides = [1, 1]} : vector<32x96xf32> to vector<4x96xf32>
    %cst_38 = arith.constant dense<0.000000e+00> : vector<4x96xf32>
    %219 = tpu.matmul %194, %6, %cst_38 {dimension_numbers = #tpu.dot_dimension_numbers<[1], [0], [0], [1], [0, 0, 1, 1], [], []>} : vector<4x32xf32>, vector<32x96xf32>, vector<4x96xf32> -> vector<4x96xf32>
    %220 = arith.addf %219, %8 : vector<4x96xf32>
    %221 = vector.extract_strided_slice %218 {offsets = [0, 0], sizes = [4, 64], strides = [1, 1]} : vector<4x96xf32> to vector<4x64xf32>
    %222 = vector.extract_strided_slice %220 {offsets = [0, 0], sizes = [4, 64], strides = [1, 1]} : vector<4x96xf32> to vector<4x64xf32>
    %223 = arith.addf %221, %222 : vector<4x64xf32>
    %224 = arith.negf %223 : vector<4x64xf32>
    %225 = math.exp %224 : vector<4x64xf32>
    %cst_39 = arith.constant 1.000000e+00 : f32
    %226 = vector.broadcast %cst_39 : f32 to vector<4x64xf32>
    %227 = arith.addf %226, %225 : vector<4x64xf32>
    %228 = arith.divf %226, %227 : vector<4x64xf32>
    %229 = vector.extract_strided_slice %228 {offsets = [0, 0], sizes = [4, 32], strides = [1, 1]} : vector<4x64xf32> to vector<4x32xf32>
    %230 = vector.extract_strided_slice %228 {offsets = [0, 32], sizes = [4, 32], strides = [1, 1]} : vector<4x64xf32> to vector<4x32xf32>
    %231 = vector.extract_strided_slice %218 {offsets = [0, 64], sizes = [4, 32], strides = [1, 1]} : vector<4x96xf32> to vector<4x32xf32>
    %232 = vector.extract_strided_slice %220 {offsets = [0, 64], sizes = [4, 32], strides = [1, 1]} : vector<4x96xf32> to vector<4x32xf32>
    %233 = arith.mulf %229, %232 : vector<4x32xf32>
    %234 = arith.addf %231, %233 : vector<4x32xf32>
    %235 = math.tanh %234 : vector<4x32xf32>
    %cst_40 = arith.constant 1.000000e+00 : f32
    %236 = vector.broadcast %cst_40 : f32 to vector<4x32xf32>
    %237 = arith.subf %236, %230 : vector<4x32xf32>
    %238 = arith.mulf %237, %235 : vector<4x32xf32>
    %239 = arith.mulf %230, %194 : vector<4x32xf32>
    %240 = arith.addf %238, %239 : vector<4x32xf32>
    %241 = vector.extract_strided_slice %2 {offsets = [20, 0], sizes = [4, 96], strides = [1, 1]} : vector<32x96xf32> to vector<4x96xf32>
    %cst_41 = arith.constant dense<0.000000e+00> : vector<4x96xf32>
    %242 = tpu.matmul %217, %5, %cst_41 {dimension_numbers = #tpu.dot_dimension_numbers<[1], [0], [0], [1], [0, 0, 1, 1], [], []>} : vector<4x32xf32>, vector<32x96xf32>, vector<4x96xf32> -> vector<4x96xf32>
    %243 = arith.addf %242, %7 : vector<4x96xf32>
    %244 = vector.extract_strided_slice %241 {offsets = [0, 0], sizes = [4, 64], strides = [1, 1]} : vector<4x96xf32> to vector<4x64xf32>
    %245 = vector.extract_strided_slice %243 {offsets = [0, 0], sizes = [4, 64], strides = [1, 1]} : vector<4x96xf32> to vector<4x64xf32>
    %246 = arith.addf %244, %245 : vector<4x64xf32>
    %247 = arith.negf %246 : vector<4x64xf32>
    %248 = math.exp %247 : vector<4x64xf32>
    %cst_42 = arith.constant 1.000000e+00 : f32
    %249 = vector.broadcast %cst_42 : f32 to vector<4x64xf32>
    %250 = arith.addf %249, %248 : vector<4x64xf32>
    %251 = arith.divf %249, %250 : vector<4x64xf32>
    %252 = vector.extract_strided_slice %251 {offsets = [0, 0], sizes = [4, 32], strides = [1, 1]} : vector<4x64xf32> to vector<4x32xf32>
    %253 = vector.extract_strided_slice %251 {offsets = [0, 32], sizes = [4, 32], strides = [1, 1]} : vector<4x64xf32> to vector<4x32xf32>
    %254 = vector.extract_strided_slice %241 {offsets = [0, 64], sizes = [4, 32], strides = [1, 1]} : vector<4x96xf32> to vector<4x32xf32>
    %255 = vector.extract_strided_slice %243 {offsets = [0, 64], sizes = [4, 32], strides = [1, 1]} : vector<4x96xf32> to vector<4x32xf32>
    %256 = arith.mulf %252, %255 : vector<4x32xf32>
    %257 = arith.addf %254, %256 : vector<4x32xf32>
    %258 = math.tanh %257 : vector<4x32xf32>
    %cst_43 = arith.constant 1.000000e+00 : f32
    %259 = vector.broadcast %cst_43 : f32 to vector<4x32xf32>
    %260 = arith.subf %259, %253 : vector<4x32xf32>
    %261 = arith.mulf %260, %258 : vector<4x32xf32>
    %262 = arith.mulf %253, %217 : vector<4x32xf32>
    %263 = arith.addf %261, %262 : vector<4x32xf32>
    %264 = vector.extract_strided_slice %4 {offsets = [8, 0], sizes = [4, 96], strides = [1, 1]} : vector<32x96xf32> to vector<4x96xf32>
    %cst_44 = arith.constant dense<0.000000e+00> : vector<4x96xf32>
    %265 = tpu.matmul %240, %6, %cst_44 {dimension_numbers = #tpu.dot_dimension_numbers<[1], [0], [0], [1], [0, 0, 1, 1], [], []>} : vector<4x32xf32>, vector<32x96xf32>, vector<4x96xf32> -> vector<4x96xf32>
    %266 = arith.addf %265, %8 : vector<4x96xf32>
    %267 = vector.extract_strided_slice %264 {offsets = [0, 0], sizes = [4, 64], strides = [1, 1]} : vector<4x96xf32> to vector<4x64xf32>
    %268 = vector.extract_strided_slice %266 {offsets = [0, 0], sizes = [4, 64], strides = [1, 1]} : vector<4x96xf32> to vector<4x64xf32>
    %269 = arith.addf %267, %268 : vector<4x64xf32>
    %270 = arith.negf %269 : vector<4x64xf32>
    %271 = math.exp %270 : vector<4x64xf32>
    %cst_45 = arith.constant 1.000000e+00 : f32
    %272 = vector.broadcast %cst_45 : f32 to vector<4x64xf32>
    %273 = arith.addf %272, %271 : vector<4x64xf32>
    %274 = arith.divf %272, %273 : vector<4x64xf32>
    %275 = vector.extract_strided_slice %274 {offsets = [0, 0], sizes = [4, 32], strides = [1, 1]} : vector<4x64xf32> to vector<4x32xf32>
    %276 = vector.extract_strided_slice %274 {offsets = [0, 32], sizes = [4, 32], strides = [1, 1]} : vector<4x64xf32> to vector<4x32xf32>
    %277 = vector.extract_strided_slice %264 {offsets = [0, 64], sizes = [4, 32], strides = [1, 1]} : vector<4x96xf32> to vector<4x32xf32>
    %278 = vector.extract_strided_slice %266 {offsets = [0, 64], sizes = [4, 32], strides = [1, 1]} : vector<4x96xf32> to vector<4x32xf32>
    %279 = arith.mulf %275, %278 : vector<4x32xf32>
    %280 = arith.addf %277, %279 : vector<4x32xf32>
    %281 = math.tanh %280 : vector<4x32xf32>
    %cst_46 = arith.constant 1.000000e+00 : f32
    %282 = vector.broadcast %cst_46 : f32 to vector<4x32xf32>
    %283 = arith.subf %282, %276 : vector<4x32xf32>
    %284 = arith.mulf %283, %281 : vector<4x32xf32>
    %285 = arith.mulf %276, %240 : vector<4x32xf32>
    %286 = arith.addf %284, %285 : vector<4x32xf32>
    %287 = vector.extract_strided_slice %2 {offsets = [24, 0], sizes = [4, 96], strides = [1, 1]} : vector<32x96xf32> to vector<4x96xf32>
    %cst_47 = arith.constant dense<0.000000e+00> : vector<4x96xf32>
    %288 = tpu.matmul %263, %5, %cst_47 {dimension_numbers = #tpu.dot_dimension_numbers<[1], [0], [0], [1], [0, 0, 1, 1], [], []>} : vector<4x32xf32>, vector<32x96xf32>, vector<4x96xf32> -> vector<4x96xf32>
    %289 = arith.addf %288, %7 : vector<4x96xf32>
    %290 = vector.extract_strided_slice %287 {offsets = [0, 0], sizes = [4, 64], strides = [1, 1]} : vector<4x96xf32> to vector<4x64xf32>
    %291 = vector.extract_strided_slice %289 {offsets = [0, 0], sizes = [4, 64], strides = [1, 1]} : vector<4x96xf32> to vector<4x64xf32>
    %292 = arith.addf %290, %291 : vector<4x64xf32>
    %293 = arith.negf %292 : vector<4x64xf32>
    %294 = math.exp %293 : vector<4x64xf32>
    %cst_48 = arith.constant 1.000000e+00 : f32
    %295 = vector.broadcast %cst_48 : f32 to vector<4x64xf32>
    %296 = arith.addf %295, %294 : vector<4x64xf32>
    %297 = arith.divf %295, %296 : vector<4x64xf32>
    %298 = vector.extract_strided_slice %297 {offsets = [0, 0], sizes = [4, 32], strides = [1, 1]} : vector<4x64xf32> to vector<4x32xf32>
    %299 = vector.extract_strided_slice %297 {offsets = [0, 32], sizes = [4, 32], strides = [1, 1]} : vector<4x64xf32> to vector<4x32xf32>
    %300 = vector.extract_strided_slice %287 {offsets = [0, 64], sizes = [4, 32], strides = [1, 1]} : vector<4x96xf32> to vector<4x32xf32>
    %301 = vector.extract_strided_slice %289 {offsets = [0, 64], sizes = [4, 32], strides = [1, 1]} : vector<4x96xf32> to vector<4x32xf32>
    %302 = arith.mulf %298, %301 : vector<4x32xf32>
    %303 = arith.addf %300, %302 : vector<4x32xf32>
    %304 = math.tanh %303 : vector<4x32xf32>
    %cst_49 = arith.constant 1.000000e+00 : f32
    %305 = vector.broadcast %cst_49 : f32 to vector<4x32xf32>
    %306 = arith.subf %305, %299 : vector<4x32xf32>
    %307 = arith.mulf %306, %304 : vector<4x32xf32>
    %308 = arith.mulf %299, %263 : vector<4x32xf32>
    %309 = arith.addf %307, %308 : vector<4x32xf32>
    %310 = vector.extract_strided_slice %4 {offsets = [4, 0], sizes = [4, 96], strides = [1, 1]} : vector<32x96xf32> to vector<4x96xf32>
    %cst_50 = arith.constant dense<0.000000e+00> : vector<4x96xf32>
    %311 = tpu.matmul %286, %6, %cst_50 {dimension_numbers = #tpu.dot_dimension_numbers<[1], [0], [0], [1], [0, 0, 1, 1], [], []>} : vector<4x32xf32>, vector<32x96xf32>, vector<4x96xf32> -> vector<4x96xf32>
    %312 = arith.addf %311, %8 : vector<4x96xf32>
    %313 = vector.extract_strided_slice %310 {offsets = [0, 0], sizes = [4, 64], strides = [1, 1]} : vector<4x96xf32> to vector<4x64xf32>
    %314 = vector.extract_strided_slice %312 {offsets = [0, 0], sizes = [4, 64], strides = [1, 1]} : vector<4x96xf32> to vector<4x64xf32>
    %315 = arith.addf %313, %314 : vector<4x64xf32>
    %316 = arith.negf %315 : vector<4x64xf32>
    %317 = math.exp %316 : vector<4x64xf32>
    %cst_51 = arith.constant 1.000000e+00 : f32
    %318 = vector.broadcast %cst_51 : f32 to vector<4x64xf32>
    %319 = arith.addf %318, %317 : vector<4x64xf32>
    %320 = arith.divf %318, %319 : vector<4x64xf32>
    %321 = vector.extract_strided_slice %320 {offsets = [0, 0], sizes = [4, 32], strides = [1, 1]} : vector<4x64xf32> to vector<4x32xf32>
    %322 = vector.extract_strided_slice %320 {offsets = [0, 32], sizes = [4, 32], strides = [1, 1]} : vector<4x64xf32> to vector<4x32xf32>
    %323 = vector.extract_strided_slice %310 {offsets = [0, 64], sizes = [4, 32], strides = [1, 1]} : vector<4x96xf32> to vector<4x32xf32>
    %324 = vector.extract_strided_slice %312 {offsets = [0, 64], sizes = [4, 32], strides = [1, 1]} : vector<4x96xf32> to vector<4x32xf32>
    %325 = arith.mulf %321, %324 : vector<4x32xf32>
    %326 = arith.addf %323, %325 : vector<4x32xf32>
    %327 = math.tanh %326 : vector<4x32xf32>
    %cst_52 = arith.constant 1.000000e+00 : f32
    %328 = vector.broadcast %cst_52 : f32 to vector<4x32xf32>
    %329 = arith.subf %328, %322 : vector<4x32xf32>
    %330 = arith.mulf %329, %327 : vector<4x32xf32>
    %331 = arith.mulf %322, %286 : vector<4x32xf32>
    %332 = arith.addf %330, %331 : vector<4x32xf32>
    %333 = vector.extract_strided_slice %2 {offsets = [28, 0], sizes = [4, 96], strides = [1, 1]} : vector<32x96xf32> to vector<4x96xf32>
    %cst_53 = arith.constant dense<0.000000e+00> : vector<4x96xf32>
    %334 = tpu.matmul %309, %5, %cst_53 {dimension_numbers = #tpu.dot_dimension_numbers<[1], [0], [0], [1], [0, 0, 1, 1], [], []>} : vector<4x32xf32>, vector<32x96xf32>, vector<4x96xf32> -> vector<4x96xf32>
    %335 = arith.addf %334, %7 : vector<4x96xf32>
    %336 = vector.extract_strided_slice %333 {offsets = [0, 0], sizes = [4, 64], strides = [1, 1]} : vector<4x96xf32> to vector<4x64xf32>
    %337 = vector.extract_strided_slice %335 {offsets = [0, 0], sizes = [4, 64], strides = [1, 1]} : vector<4x96xf32> to vector<4x64xf32>
    %338 = arith.addf %336, %337 : vector<4x64xf32>
    %339 = arith.negf %338 : vector<4x64xf32>
    %340 = math.exp %339 : vector<4x64xf32>
    %cst_54 = arith.constant 1.000000e+00 : f32
    %341 = vector.broadcast %cst_54 : f32 to vector<4x64xf32>
    %342 = arith.addf %341, %340 : vector<4x64xf32>
    %343 = arith.divf %341, %342 : vector<4x64xf32>
    %344 = vector.extract_strided_slice %343 {offsets = [0, 0], sizes = [4, 32], strides = [1, 1]} : vector<4x64xf32> to vector<4x32xf32>
    %345 = vector.extract_strided_slice %343 {offsets = [0, 32], sizes = [4, 32], strides = [1, 1]} : vector<4x64xf32> to vector<4x32xf32>
    %346 = vector.extract_strided_slice %333 {offsets = [0, 64], sizes = [4, 32], strides = [1, 1]} : vector<4x96xf32> to vector<4x32xf32>
    %347 = vector.extract_strided_slice %335 {offsets = [0, 64], sizes = [4, 32], strides = [1, 1]} : vector<4x96xf32> to vector<4x32xf32>
    %348 = arith.mulf %344, %347 : vector<4x32xf32>
    %349 = arith.addf %346, %348 : vector<4x32xf32>
    %350 = math.tanh %349 : vector<4x32xf32>
    %cst_55 = arith.constant 1.000000e+00 : f32
    %351 = vector.broadcast %cst_55 : f32 to vector<4x32xf32>
    %352 = arith.subf %351, %345 : vector<4x32xf32>
    %353 = arith.mulf %352, %350 : vector<4x32xf32>
    %354 = arith.mulf %345, %309 : vector<4x32xf32>
    %355 = arith.addf %353, %354 : vector<4x32xf32>
    %356 = vector.extract_strided_slice %4 {offsets = [0, 0], sizes = [4, 96], strides = [1, 1]} : vector<32x96xf32> to vector<4x96xf32>
    %cst_56 = arith.constant dense<0.000000e+00> : vector<4x96xf32>
    %357 = tpu.matmul %332, %6, %cst_56 {dimension_numbers = #tpu.dot_dimension_numbers<[1], [0], [0], [1], [0, 0, 1, 1], [], []>} : vector<4x32xf32>, vector<32x96xf32>, vector<4x96xf32> -> vector<4x96xf32>
    %358 = arith.addf %357, %8 : vector<4x96xf32>
    %359 = vector.extract_strided_slice %356 {offsets = [0, 0], sizes = [4, 64], strides = [1, 1]} : vector<4x96xf32> to vector<4x64xf32>
    %360 = vector.extract_strided_slice %358 {offsets = [0, 0], sizes = [4, 64], strides = [1, 1]} : vector<4x96xf32> to vector<4x64xf32>
    %361 = arith.addf %359, %360 : vector<4x64xf32>
    %362 = arith.negf %361 : vector<4x64xf32>
    %363 = math.exp %362 : vector<4x64xf32>
    %cst_57 = arith.constant 1.000000e+00 : f32
    %364 = vector.broadcast %cst_57 : f32 to vector<4x64xf32>
    %365 = arith.addf %364, %363 : vector<4x64xf32>
    %366 = arith.divf %364, %365 : vector<4x64xf32>
    %367 = vector.extract_strided_slice %366 {offsets = [0, 0], sizes = [4, 32], strides = [1, 1]} : vector<4x64xf32> to vector<4x32xf32>
    %368 = vector.extract_strided_slice %366 {offsets = [0, 32], sizes = [4, 32], strides = [1, 1]} : vector<4x64xf32> to vector<4x32xf32>
    %369 = vector.extract_strided_slice %356 {offsets = [0, 64], sizes = [4, 32], strides = [1, 1]} : vector<4x96xf32> to vector<4x32xf32>
    %370 = vector.extract_strided_slice %358 {offsets = [0, 64], sizes = [4, 32], strides = [1, 1]} : vector<4x96xf32> to vector<4x32xf32>
    %371 = arith.mulf %367, %370 : vector<4x32xf32>
    %372 = arith.addf %369, %371 : vector<4x32xf32>
    %373 = math.tanh %372 : vector<4x32xf32>
    %cst_58 = arith.constant 1.000000e+00 : f32
    %374 = vector.broadcast %cst_58 : f32 to vector<4x32xf32>
    %375 = arith.subf %374, %368 : vector<4x32xf32>
    %376 = arith.mulf %375, %373 : vector<4x32xf32>
    %377 = arith.mulf %368, %332 : vector<4x32xf32>
    %378 = arith.addf %376, %377 : vector<4x32xf32>
    %c128 = arith.constant 128 : index
    %c0_59 = arith.constant 0 : index
    %379 = vector.load %arg2[%c128, %c0_59] : memref<552x128xf32, #tpu.memory_space<vmem>>, vector<32x32xf32>
    %cst_60 = arith.constant dense<0.000000e+00> : vector<4x32xf32>
    %380 = tpu.matmul %355, %379, %cst_60 {dimension_numbers = #tpu.dot_dimension_numbers<[1], [0], [0], [1], [0, 0, 1, 1], [], []>} : vector<4x32xf32>, vector<32x32xf32>, vector<4x32xf32> -> vector<4x32xf32>
    %c160 = arith.constant 160 : index
    %c0_61 = arith.constant 0 : index
    %381 = vector.load %arg2[%c160, %c0_61] : memref<552x128xf32, #tpu.memory_space<vmem>>, vector<32x32xf32>
    %cst_62 = arith.constant dense<0.000000e+00> : vector<4x32xf32>
    %382 = tpu.matmul %378, %381, %cst_62 {dimension_numbers = #tpu.dot_dimension_numbers<[1], [0], [0], [1], [0, 0, 1, 1], [], []>} : vector<4x32xf32>, vector<32x32xf32>, vector<4x32xf32> -> vector<4x32xf32>
    %383 = arith.addf %380, %382 : vector<4x32xf32>
    %c192 = arith.constant 192 : index
    %c0_63 = arith.constant 0 : index
    %384 = vector.load %arg2[%c192, %c0_63] : memref<552x128xf32, #tpu.memory_space<vmem>>, vector<4x32xf32>
    %385 = arith.addf %383, %384 : vector<4x32xf32>
    %386 = math.tanh %385 : vector<4x32xf32>
    %387 = tpu.concatenate %33, %79, %125, %171, %217, %263, %309, %355 in 0 : vector<4x32xf32>, vector<4x32xf32>, vector<4x32xf32>, vector<4x32xf32>, vector<4x32xf32>, vector<4x32xf32>, vector<4x32xf32>, vector<4x32xf32> -> vector<32x32xf32>
    %388 = tpu.concatenate %378, %332, %286, %240, %194, %148, %102, %56 in 0 : vector<4x32xf32>, vector<4x32xf32>, vector<4x32xf32>, vector<4x32xf32>, vector<4x32xf32>, vector<4x32xf32>, vector<4x32xf32>, vector<4x32xf32> -> vector<32x32xf32>
    %389 = tpu.concatenate %387, %388 in 1 : vector<32x32xf32>, vector<32x32xf32> -> vector<32x64xf32>
    %cst_64 = arith.constant 1.000000e+00 : f32
    %390 = vector.broadcast %cst_64 : f32 to vector<32x1xf32>
    %391 = tpu.concatenate %389, %390 in 1 : vector<32x64xf32>, vector<32x1xf32> -> vector<32x65xf32>
    %c200 = arith.constant 200 : index
    %c0_65 = arith.constant 0 : index
    %392 = vector.load %arg2[%c200, %c0_65] : memref<552x128xf32, #tpu.memory_space<vmem>>, vector<65x32xf32>
    %cst_66 = arith.constant dense<0.000000e+00> : vector<32x32xf32>
    %393 = tpu.matmul %391, %392, %cst_66 {dimension_numbers = #tpu.dot_dimension_numbers<[1], [0], [0], [1], [0, 0, 1, 1], [], []>} : vector<32x65xf32>, vector<65x32xf32>, vector<32x32xf32> -> vector<32x32xf32>
    %c272 = arith.constant 272 : index
    %c0_67 = arith.constant 0 : index
    %394 = vector.load %arg2[%c272, %c0_67] : memref<552x128xf32, #tpu.memory_space<vmem>>, vector<32x128xf32>
    %c304 = arith.constant 304 : index
    %c0_68 = arith.constant 0 : index
    %395 = vector.load %arg2[%c304, %c0_68] : memref<552x128xf32, #tpu.memory_space<vmem>>, vector<32x1xf32>
    %c360 = arith.constant 360 : index
    %c0_69 = arith.constant 0 : index
    %396 = vector.load %arg2[%c360, %c0_69] : memref<552x128xf32, #tpu.memory_space<vmem>>, vector<64x96xf32>
    %c424 = arith.constant 424 : index
    %c0_70 = arith.constant 0 : index
    %397 = vector.load %arg2[%c424, %c0_70] : memref<552x128xf32, #tpu.memory_space<vmem>>, vector<4x96xf32>
    %c0_71 = arith.constant 0 : index
    %c0_72 = arith.constant 0 : index
    %398 = vector.load %arg1[%c0_71, %c0_72] : memref<28x17xf32, #tpu.memory_space<vmem>>, vector<28x17xf32>
    %c336 = arith.constant 336 : index
    %c0_73 = arith.constant 0 : index
    %399 = vector.load %arg2[%c336, %c0_73] : memref<552x128xf32, #tpu.memory_space<vmem>>, vector<17x96xf32>
    %cst_74 = arith.constant dense<0.000000e+00> : vector<28x96xf32>
    %400 = tpu.matmul %398, %399, %cst_74 {dimension_numbers = #tpu.dot_dimension_numbers<[1], [0], [0], [1], [0, 0, 1, 1], [], []>} : vector<28x17xf32>, vector<17x96xf32>, vector<28x96xf32> -> vector<28x96xf32>
    %c528 = arith.constant 528 : index
    %c0_75 = arith.constant 0 : index
    %401 = vector.load %arg2[%c528, %c0_75] : memref<552x128xf32, #tpu.memory_space<vmem>>, vector<17x24xf32>
    %cst_76 = arith.constant dense<0.000000e+00> : vector<28x24xf32>
    %402 = tpu.matmul %398, %401, %cst_76 {dimension_numbers = #tpu.dot_dimension_numbers<[1], [0], [0], [1], [0, 0, 1, 1], [], []>} : vector<28x17xf32>, vector<17x24xf32>, vector<28x24xf32> -> vector<28x24xf32>
    %403 = tpu.iota {dimensions = array<i32: 0>} : vector<4x32xi32>
    %404 = tpu.iota {dimensions = array<i32: 1>} : vector<4x32xi32>
    %c4_i32 = arith.constant 4 : i32
    %c0_i32 = arith.constant 0 : i32
    %405 = arith.cmpi eq, %c4_i32, %c0_i32 : i32
    %c1_i32 = arith.constant 1 : i32
    %406 = arith.select %405, %c1_i32, %c4_i32 : i32
    %407 = vector.broadcast %406 : i32 to vector<4x32xi32>
    %408 = arith.remsi %404, %407 : vector<4x32xi32>
    %c0_i32_77 = arith.constant 0 : i32
    %409 = vector.broadcast %c0_i32_77 : i32 to vector<4x32xi32>
    %410 = arith.cmpi ne, %408, %409 : vector<4x32xi32>
    %c0_i32_78 = arith.constant 0 : i32
    %411 = vector.broadcast %c0_i32_78 : i32 to vector<4x32xi32>
    %412 = arith.cmpi slt, %408, %411 : vector<4x32xi32>
    %c0_i32_79 = arith.constant 0 : i32
    %413 = arith.cmpi slt, %406, %c0_i32_79 : i32
    %414 = vector.broadcast %413 : i1 to vector<4x32xi1>
    %415 = vector.broadcast %414 : vector<4x32xi1> to vector<4x32xi1>
    %416 = arith.xori %412, %415 : vector<4x32xi1>
    %417 = arith.andi %416, %410 : vector<4x32xi1>
    %418 = vector.broadcast %406 : i32 to vector<4x32xi32>
    %419 = arith.addi %408, %418 : vector<4x32xi32>
    %420 = arith.select %417, %419, %408 : vector<4x32xi1>, vector<4x32xi32>
    %421 = arith.cmpi eq, %403, %420 : vector<4x32xi32>
    %422 = arith.extui %421 : vector<4x32xi1> to vector<4x32xi32>
    %423 = arith.sitofp %422 : vector<4x32xi32> to vector<4x32xf32>
    %cst_80 = arith.constant dense<0.000000e+00> : vector<4x128xf32>
    %424 = tpu.matmul %386, %394, %cst_80 {dimension_numbers = #tpu.dot_dimension_numbers<[1], [0], [0], [1], [0, 0, 1, 1], [], []>} : vector<4x32xf32>, vector<32x128xf32>, vector<4x128xf32> -> vector<4x128xf32>
    %425 = vector.extract_strided_slice %424 {offsets = [0, 0], sizes = [4, 32], strides = [1, 1]} : vector<4x128xf32> to vector<4x32xf32>
    %426 = vector.extract_strided_slice %424 {offsets = [0, 32], sizes = [4, 96], strides = [1, 1]} : vector<4x128xf32> to vector<4x96xf32>
    %427 = arith.addf %426, %397 : vector<4x96xf32>
    %428 = tpu.concatenate %425, %425 in 0 : vector<4x32xf32>, vector<4x32xf32> -> vector<8x32xf32>
    %429 = tpu.concatenate %428, %428 in 0 : vector<8x32xf32>, vector<8x32xf32> -> vector<16x32xf32>
    %430 = tpu.concatenate %429, %429 in 0 : vector<16x32xf32>, vector<16x32xf32> -> vector<32x32xf32>
    %431 = arith.addf %393, %430 : vector<32x32xf32>
    %432 = math.tanh %431 : vector<32x32xf32>
    %cst_81 = arith.constant dense<0.000000e+00> : vector<32x1xf32>
    %433 = tpu.matmul %432, %395, %cst_81 {dimension_numbers = #tpu.dot_dimension_numbers<[1], [0], [0], [1], [0, 0, 1, 1], [], []>} : vector<32x32xf32>, vector<32x1xf32>, vector<32x1xf32> -> vector<32x1xf32>
    %434 = math.exp %433 : vector<32x1xf32>
    %435 = vector.broadcast %434 : vector<32x1xf32> to vector<32x65xf32>
    %436 = arith.mulf %435, %391 : vector<32x65xf32>
    %cst_82 = arith.constant dense<0.000000e+00> : vector<4x65xf32>
    %437 = tpu.matmul %423, %436, %cst_82 {dimension_numbers = #tpu.dot_dimension_numbers<[1], [0], [0], [1], [0, 0, 1, 1], [], []>} : vector<4x32xf32>, vector<32x65xf32>, vector<4x65xf32> -> vector<4x65xf32>
    %438 = vector.extract_strided_slice %437 {offsets = [0, 0], sizes = [4, 64], strides = [1, 1]} : vector<4x65xf32> to vector<4x64xf32>
    %439 = vector.extract_strided_slice %437 {offsets = [0, 64], sizes = [4, 1], strides = [1, 1]} : vector<4x65xf32> to vector<4x1xf32>
    %440 = tpu.reciprocal %439 {approx = true} : vector<4x1xf32> -> vector<4x1xf32>
    %441 = vector.broadcast %440 : vector<4x1xf32> to vector<4x64xf32>
    %442 = arith.mulf %438, %441 : vector<4x64xf32>
    %443 = vector.extract_strided_slice %400 {offsets = [0, 0], sizes = [4, 96], strides = [1, 1]} : vector<28x96xf32> to vector<4x96xf32>
    %cst_83 = arith.constant dense<0.000000e+00> : vector<4x96xf32>
    %444 = tpu.matmul %442, %396, %cst_83 {dimension_numbers = #tpu.dot_dimension_numbers<[1], [0], [0], [1], [0, 0, 1, 1], [], []>} : vector<4x64xf32>, vector<64x96xf32>, vector<4x96xf32> -> vector<4x96xf32>
    %445 = arith.addf %443, %444 : vector<4x96xf32>
    %446 = vector.extract_strided_slice %445 {offsets = [0, 0], sizes = [4, 64], strides = [1, 1]} : vector<4x96xf32> to vector<4x64xf32>
    %447 = vector.extract_strided_slice %427 {offsets = [0, 0], sizes = [4, 64], strides = [1, 1]} : vector<4x96xf32> to vector<4x64xf32>
    %448 = arith.addf %446, %447 : vector<4x64xf32>
    %449 = arith.negf %448 : vector<4x64xf32>
    %450 = math.exp %449 : vector<4x64xf32>
    %cst_84 = arith.constant 1.000000e+00 : f32
    %451 = vector.broadcast %cst_84 : f32 to vector<4x64xf32>
    %452 = arith.addf %451, %450 : vector<4x64xf32>
    %453 = arith.divf %451, %452 : vector<4x64xf32>
    %454 = vector.extract_strided_slice %453 {offsets = [0, 0], sizes = [4, 32], strides = [1, 1]} : vector<4x64xf32> to vector<4x32xf32>
    %455 = vector.extract_strided_slice %453 {offsets = [0, 32], sizes = [4, 32], strides = [1, 1]} : vector<4x64xf32> to vector<4x32xf32>
    %456 = vector.extract_strided_slice %445 {offsets = [0, 64], sizes = [4, 32], strides = [1, 1]} : vector<4x96xf32> to vector<4x32xf32>
    %457 = vector.extract_strided_slice %427 {offsets = [0, 64], sizes = [4, 32], strides = [1, 1]} : vector<4x96xf32> to vector<4x32xf32>
    %458 = arith.mulf %454, %457 : vector<4x32xf32>
    %459 = arith.addf %456, %458 : vector<4x32xf32>
    %460 = math.tanh %459 : vector<4x32xf32>
    %cst_85 = arith.constant 1.000000e+00 : f32
    %461 = vector.broadcast %cst_85 : f32 to vector<4x32xf32>
    %462 = arith.subf %461, %455 : vector<4x32xf32>
    %463 = arith.mulf %462, %460 : vector<4x32xf32>
    %464 = arith.mulf %455, %386 : vector<4x32xf32>
    %465 = arith.addf %463, %464 : vector<4x32xf32>
    %c0_86 = arith.constant 0 : index
    %c0_87 = arith.constant 0 : index
    %466 = vector.load %arg4[%c0_86, %c0_87] : memref<28x32xf32, #tpu.memory_space<vmem>>, vector<4x32xf32>
    tpu.vector_store %arg4[%c0_86, %c0_87], %465 {strides = array<i32>} : memref<28x32xf32, #tpu.memory_space<vmem>>, vector<4x32xf32>,
    %c0_88 = arith.constant 0 : index
    %c0_89 = arith.constant 0 : index
    %467 = vector.load %arg5[%c0_88, %c0_89] : memref<28x64xf32, #tpu.memory_space<vmem>>, vector<4x64xf32>
    tpu.vector_store %arg5[%c0_88, %c0_89], %442 {strides = array<i32>} : memref<28x64xf32, #tpu.memory_space<vmem>>, vector<4x64xf32>,
    %cst_90 = arith.constant dense<0.000000e+00> : vector<4x128xf32>
    %468 = tpu.matmul %465, %394, %cst_90 {dimension_numbers = #tpu.dot_dimension_numbers<[1], [0], [0], [1], [0, 0, 1, 1], [], []>} : vector<4x32xf32>, vector<32x128xf32>, vector<4x128xf32> -> vector<4x128xf32>
    %469 = vector.extract_strided_slice %468 {offsets = [0, 0], sizes = [4, 32], strides = [1, 1]} : vector<4x128xf32> to vector<4x32xf32>
    %470 = vector.extract_strided_slice %468 {offsets = [0, 32], sizes = [4, 96], strides = [1, 1]} : vector<4x128xf32> to vector<4x96xf32>
    %471 = arith.addf %470, %397 : vector<4x96xf32>
    %472 = tpu.concatenate %469, %469 in 0 : vector<4x32xf32>, vector<4x32xf32> -> vector<8x32xf32>
    %473 = tpu.concatenate %472, %472 in 0 : vector<8x32xf32>, vector<8x32xf32> -> vector<16x32xf32>
    %474 = tpu.concatenate %473, %473 in 0 : vector<16x32xf32>, vector<16x32xf32> -> vector<32x32xf32>
    %475 = arith.addf %393, %474 : vector<32x32xf32>
    %476 = math.tanh %475 : vector<32x32xf32>
    %cst_91 = arith.constant dense<0.000000e+00> : vector<32x1xf32>
    %477 = tpu.matmul %476, %395, %cst_91 {dimension_numbers = #tpu.dot_dimension_numbers<[1], [0], [0], [1], [0, 0, 1, 1], [], []>} : vector<32x32xf32>, vector<32x1xf32>, vector<32x1xf32> -> vector<32x1xf32>
    %478 = math.exp %477 : vector<32x1xf32>
    %479 = vector.broadcast %478 : vector<32x1xf32> to vector<32x65xf32>
    %480 = arith.mulf %479, %391 : vector<32x65xf32>
    %cst_92 = arith.constant dense<0.000000e+00> : vector<4x65xf32>
    %481 = tpu.matmul %423, %480, %cst_92 {dimension_numbers = #tpu.dot_dimension_numbers<[1], [0], [0], [1], [0, 0, 1, 1], [], []>} : vector<4x32xf32>, vector<32x65xf32>, vector<4x65xf32> -> vector<4x65xf32>
    %482 = vector.extract_strided_slice %481 {offsets = [0, 0], sizes = [4, 64], strides = [1, 1]} : vector<4x65xf32> to vector<4x64xf32>
    %483 = vector.extract_strided_slice %481 {offsets = [0, 64], sizes = [4, 1], strides = [1, 1]} : vector<4x65xf32> to vector<4x1xf32>
    %484 = tpu.reciprocal %483 {approx = true} : vector<4x1xf32> -> vector<4x1xf32>
    %485 = vector.broadcast %484 : vector<4x1xf32> to vector<4x64xf32>
    %486 = arith.mulf %482, %485 : vector<4x64xf32>
    %487 = vector.extract_strided_slice %400 {offsets = [4, 0], sizes = [4, 96], strides = [1, 1]} : vector<28x96xf32> to vector<4x96xf32>
    %cst_93 = arith.constant dense<0.000000e+00> : vector<4x96xf32>
    %488 = tpu.matmul %486, %396, %cst_93 {dimension_numbers = #tpu.dot_dimension_numbers<[1], [0], [0], [1], [0, 0, 1, 1], [], []>} : vector<4x64xf32>, vector<64x96xf32>, vector<4x96xf32> -> vector<4x96xf32>
    %489 = arith.addf %487, %488 : vector<4x96xf32>
    %490 = vector.extract_strided_slice %489 {offsets = [0, 0], sizes = [4, 64], strides = [1, 1]} : vector<4x96xf32> to vector<4x64xf32>
    %491 = vector.extract_strided_slice %471 {offsets = [0, 0], sizes = [4, 64], strides = [1, 1]} : vector<4x96xf32> to vector<4x64xf32>
    %492 = arith.addf %490, %491 : vector<4x64xf32>
    %493 = arith.negf %492 : vector<4x64xf32>
    %494 = math.exp %493 : vector<4x64xf32>
    %cst_94 = arith.constant 1.000000e+00 : f32
    %495 = vector.broadcast %cst_94 : f32 to vector<4x64xf32>
    %496 = arith.addf %495, %494 : vector<4x64xf32>
    %497 = arith.divf %495, %496 : vector<4x64xf32>
    %498 = vector.extract_strided_slice %497 {offsets = [0, 0], sizes = [4, 32], strides = [1, 1]} : vector<4x64xf32> to vector<4x32xf32>
    %499 = vector.extract_strided_slice %497 {offsets = [0, 32], sizes = [4, 32], strides = [1, 1]} : vector<4x64xf32> to vector<4x32xf32>
    %500 = vector.extract_strided_slice %489 {offsets = [0, 64], sizes = [4, 32], strides = [1, 1]} : vector<4x96xf32> to vector<4x32xf32>
    %501 = vector.extract_strided_slice %471 {offsets = [0, 64], sizes = [4, 32], strides = [1, 1]} : vector<4x96xf32> to vector<4x32xf32>
    %502 = arith.mulf %498, %501 : vector<4x32xf32>
    %503 = arith.addf %500, %502 : vector<4x32xf32>
    %504 = math.tanh %503 : vector<4x32xf32>
    %cst_95 = arith.constant 1.000000e+00 : f32
    %505 = vector.broadcast %cst_95 : f32 to vector<4x32xf32>
    %506 = arith.subf %505, %499 : vector<4x32xf32>
    %507 = arith.mulf %506, %504 : vector<4x32xf32>
    %508 = arith.mulf %499, %465 : vector<4x32xf32>
    %509 = arith.addf %507, %508 : vector<4x32xf32>
    %c4 = arith.constant 4 : index
    %c0_96 = arith.constant 0 : index
    %510 = vector.load %arg4[%c4, %c0_96] : memref<28x32xf32, #tpu.memory_space<vmem>>, vector<4x32xf32>
    tpu.vector_store %arg4[%c4, %c0_96], %509 {strides = array<i32>} : memref<28x32xf32, #tpu.memory_space<vmem>>, vector<4x32xf32>,
    %c4_97 = arith.constant 4 : index
    %c0_98 = arith.constant 0 : index
    %511 = vector.load %arg5[%c4_97, %c0_98] : memref<28x64xf32, #tpu.memory_space<vmem>>, vector<4x64xf32>
    tpu.vector_store %arg5[%c4_97, %c0_98], %486 {strides = array<i32>} : memref<28x64xf32, #tpu.memory_space<vmem>>, vector<4x64xf32>,
    %cst_99 = arith.constant dense<0.000000e+00> : vector<4x128xf32>
    %512 = tpu.matmul %509, %394, %cst_99 {dimension_numbers = #tpu.dot_dimension_numbers<[1], [0], [0], [1], [0, 0, 1, 1], [], []>} : vector<4x32xf32>, vector<32x128xf32>, vector<4x128xf32> -> vector<4x128xf32>
    %513 = vector.extract_strided_slice %512 {offsets = [0, 0], sizes = [4, 32], strides = [1, 1]} : vector<4x128xf32> to vector<4x32xf32>
    %514 = vector.extract_strided_slice %512 {offsets = [0, 32], sizes = [4, 96], strides = [1, 1]} : vector<4x128xf32> to vector<4x96xf32>
    %515 = arith.addf %514, %397 : vector<4x96xf32>
    %516 = tpu.concatenate %513, %513 in 0 : vector<4x32xf32>, vector<4x32xf32> -> vector<8x32xf32>
    %517 = tpu.concatenate %516, %516 in 0 : vector<8x32xf32>, vector<8x32xf32> -> vector<16x32xf32>
    %518 = tpu.concatenate %517, %517 in 0 : vector<16x32xf32>, vector<16x32xf32> -> vector<32x32xf32>
    %519 = arith.addf %393, %518 : vector<32x32xf32>
    %520 = math.tanh %519 : vector<32x32xf32>
    %cst_100 = arith.constant dense<0.000000e+00> : vector<32x1xf32>
    %521 = tpu.matmul %520, %395, %cst_100 {dimension_numbers = #tpu.dot_dimension_numbers<[1], [0], [0], [1], [0, 0, 1, 1], [], []>} : vector<32x32xf32>, vector<32x1xf32>, vector<32x1xf32> -> vector<32x1xf32>
    %522 = math.exp %521 : vector<32x1xf32>
    %523 = vector.broadcast %522 : vector<32x1xf32> to vector<32x65xf32>
    %524 = arith.mulf %523, %391 : vector<32x65xf32>
    %cst_101 = arith.constant dense<0.000000e+00> : vector<4x65xf32>
    %525 = tpu.matmul %423, %524, %cst_101 {dimension_numbers = #tpu.dot_dimension_numbers<[1], [0], [0], [1], [0, 0, 1, 1], [], []>} : vector<4x32xf32>, vector<32x65xf32>, vector<4x65xf32> -> vector<4x65xf32>
    %526 = vector.extract_strided_slice %525 {offsets = [0, 0], sizes = [4, 64], strides = [1, 1]} : vector<4x65xf32> to vector<4x64xf32>
    %527 = vector.extract_strided_slice %525 {offsets = [0, 64], sizes = [4, 1], strides = [1, 1]} : vector<4x65xf32> to vector<4x1xf32>
    %528 = tpu.reciprocal %527 {approx = true} : vector<4x1xf32> -> vector<4x1xf32>
    %529 = vector.broadcast %528 : vector<4x1xf32> to vector<4x64xf32>
    %530 = arith.mulf %526, %529 : vector<4x64xf32>
    %531 = vector.extract_strided_slice %400 {offsets = [8, 0], sizes = [4, 96], strides = [1, 1]} : vector<28x96xf32> to vector<4x96xf32>
    %cst_102 = arith.constant dense<0.000000e+00> : vector<4x96xf32>
    %532 = tpu.matmul %530, %396, %cst_102 {dimension_numbers = #tpu.dot_dimension_numbers<[1], [0], [0], [1], [0, 0, 1, 1], [], []>} : vector<4x64xf32>, vector<64x96xf32>, vector<4x96xf32> -> vector<4x96xf32>
    %533 = arith.addf %531, %532 : vector<4x96xf32>
    %534 = vector.extract_strided_slice %533 {offsets = [0, 0], sizes = [4, 64], strides = [1, 1]} : vector<4x96xf32> to vector<4x64xf32>
    %535 = vector.extract_strided_slice %515 {offsets = [0, 0], sizes = [4, 64], strides = [1, 1]} : vector<4x96xf32> to vector<4x64xf32>
    %536 = arith.addf %534, %535 : vector<4x64xf32>
    %537 = arith.negf %536 : vector<4x64xf32>
    %538 = math.exp %537 : vector<4x64xf32>
    %cst_103 = arith.constant 1.000000e+00 : f32
    %539 = vector.broadcast %cst_103 : f32 to vector<4x64xf32>
    %540 = arith.addf %539, %538 : vector<4x64xf32>
    %541 = arith.divf %539, %540 : vector<4x64xf32>
    %542 = vector.extract_strided_slice %541 {offsets = [0, 0], sizes = [4, 32], strides = [1, 1]} : vector<4x64xf32> to vector<4x32xf32>
    %543 = vector.extract_strided_slice %541 {offsets = [0, 32], sizes = [4, 32], strides = [1, 1]} : vector<4x64xf32> to vector<4x32xf32>
    %544 = vector.extract_strided_slice %533 {offsets = [0, 64], sizes = [4, 32], strides = [1, 1]} : vector<4x96xf32> to vector<4x32xf32>
    %545 = vector.extract_strided_slice %515 {offsets = [0, 64], sizes = [4, 32], strides = [1, 1]} : vector<4x96xf32> to vector<4x32xf32>
    %546 = arith.mulf %542, %545 : vector<4x32xf32>
    %547 = arith.addf %544, %546 : vector<4x32xf32>
    %548 = math.tanh %547 : vector<4x32xf32>
    %cst_104 = arith.constant 1.000000e+00 : f32
    %549 = vector.broadcast %cst_104 : f32 to vector<4x32xf32>
    %550 = arith.subf %549, %543 : vector<4x32xf32>
    %551 = arith.mulf %550, %548 : vector<4x32xf32>
    %552 = arith.mulf %543, %509 : vector<4x32xf32>
    %553 = arith.addf %551, %552 : vector<4x32xf32>
    %c8 = arith.constant 8 : index
    %c0_105 = arith.constant 0 : index
    %554 = vector.load %arg4[%c8, %c0_105] : memref<28x32xf32, #tpu.memory_space<vmem>>, vector<4x32xf32>
    tpu.vector_store %arg4[%c8, %c0_105], %553 {strides = array<i32>} : memref<28x32xf32, #tpu.memory_space<vmem>>, vector<4x32xf32>,
    %c8_106 = arith.constant 8 : index
    %c0_107 = arith.constant 0 : index
    %555 = vector.load %arg5[%c8_106, %c0_107] : memref<28x64xf32, #tpu.memory_space<vmem>>, vector<4x64xf32>
    tpu.vector_store %arg5[%c8_106, %c0_107], %530 {strides = array<i32>} : memref<28x64xf32, #tpu.memory_space<vmem>>, vector<4x64xf32>,
    %cst_108 = arith.constant dense<0.000000e+00> : vector<4x128xf32>
    %556 = tpu.matmul %553, %394, %cst_108 {dimension_numbers = #tpu.dot_dimension_numbers<[1], [0], [0], [1], [0, 0, 1, 1], [], []>} : vector<4x32xf32>, vector<32x128xf32>, vector<4x128xf32> -> vector<4x128xf32>
    %557 = vector.extract_strided_slice %556 {offsets = [0, 0], sizes = [4, 32], strides = [1, 1]} : vector<4x128xf32> to vector<4x32xf32>
    %558 = vector.extract_strided_slice %556 {offsets = [0, 32], sizes = [4, 96], strides = [1, 1]} : vector<4x128xf32> to vector<4x96xf32>
    %559 = arith.addf %558, %397 : vector<4x96xf32>
    %560 = tpu.concatenate %557, %557 in 0 : vector<4x32xf32>, vector<4x32xf32> -> vector<8x32xf32>
    %561 = tpu.concatenate %560, %560 in 0 : vector<8x32xf32>, vector<8x32xf32> -> vector<16x32xf32>
    %562 = tpu.concatenate %561, %561 in 0 : vector<16x32xf32>, vector<16x32xf32> -> vector<32x32xf32>
    %563 = arith.addf %393, %562 : vector<32x32xf32>
    %564 = math.tanh %563 : vector<32x32xf32>
    %cst_109 = arith.constant dense<0.000000e+00> : vector<32x1xf32>
    %565 = tpu.matmul %564, %395, %cst_109 {dimension_numbers = #tpu.dot_dimension_numbers<[1], [0], [0], [1], [0, 0, 1, 1], [], []>} : vector<32x32xf32>, vector<32x1xf32>, vector<32x1xf32> -> vector<32x1xf32>
    %566 = math.exp %565 : vector<32x1xf32>
    %567 = vector.broadcast %566 : vector<32x1xf32> to vector<32x65xf32>
    %568 = arith.mulf %567, %391 : vector<32x65xf32>
    %cst_110 = arith.constant dense<0.000000e+00> : vector<4x65xf32>
    %569 = tpu.matmul %423, %568, %cst_110 {dimension_numbers = #tpu.dot_dimension_numbers<[1], [0], [0], [1], [0, 0, 1, 1], [], []>} : vector<4x32xf32>, vector<32x65xf32>, vector<4x65xf32> -> vector<4x65xf32>
    %570 = vector.extract_strided_slice %569 {offsets = [0, 0], sizes = [4, 64], strides = [1, 1]} : vector<4x65xf32> to vector<4x64xf32>
    %571 = vector.extract_strided_slice %569 {offsets = [0, 64], sizes = [4, 1], strides = [1, 1]} : vector<4x65xf32> to vector<4x1xf32>
    %572 = tpu.reciprocal %571 {approx = true} : vector<4x1xf32> -> vector<4x1xf32>
    %573 = vector.broadcast %572 : vector<4x1xf32> to vector<4x64xf32>
    %574 = arith.mulf %570, %573 : vector<4x64xf32>
    %575 = vector.extract_strided_slice %400 {offsets = [12, 0], sizes = [4, 96], strides = [1, 1]} : vector<28x96xf32> to vector<4x96xf32>
    %cst_111 = arith.constant dense<0.000000e+00> : vector<4x96xf32>
    %576 = tpu.matmul %574, %396, %cst_111 {dimension_numbers = #tpu.dot_dimension_numbers<[1], [0], [0], [1], [0, 0, 1, 1], [], []>} : vector<4x64xf32>, vector<64x96xf32>, vector<4x96xf32> -> vector<4x96xf32>
    %577 = arith.addf %575, %576 : vector<4x96xf32>
    %578 = vector.extract_strided_slice %577 {offsets = [0, 0], sizes = [4, 64], strides = [1, 1]} : vector<4x96xf32> to vector<4x64xf32>
    %579 = vector.extract_strided_slice %559 {offsets = [0, 0], sizes = [4, 64], strides = [1, 1]} : vector<4x96xf32> to vector<4x64xf32>
    %580 = arith.addf %578, %579 : vector<4x64xf32>
    %581 = arith.negf %580 : vector<4x64xf32>
    %582 = math.exp %581 : vector<4x64xf32>
    %cst_112 = arith.constant 1.000000e+00 : f32
    %583 = vector.broadcast %cst_112 : f32 to vector<4x64xf32>
    %584 = arith.addf %583, %582 : vector<4x64xf32>
    %585 = arith.divf %583, %584 : vector<4x64xf32>
    %586 = vector.extract_strided_slice %585 {offsets = [0, 0], sizes = [4, 32], strides = [1, 1]} : vector<4x64xf32> to vector<4x32xf32>
    %587 = vector.extract_strided_slice %585 {offsets = [0, 32], sizes = [4, 32], strides = [1, 1]} : vector<4x64xf32> to vector<4x32xf32>
    %588 = vector.extract_strided_slice %577 {offsets = [0, 64], sizes = [4, 32], strides = [1, 1]} : vector<4x96xf32> to vector<4x32xf32>
    %589 = vector.extract_strided_slice %559 {offsets = [0, 64], sizes = [4, 32], strides = [1, 1]} : vector<4x96xf32> to vector<4x32xf32>
    %590 = arith.mulf %586, %589 : vector<4x32xf32>
    %591 = arith.addf %588, %590 : vector<4x32xf32>
    %592 = math.tanh %591 : vector<4x32xf32>
    %cst_113 = arith.constant 1.000000e+00 : f32
    %593 = vector.broadcast %cst_113 : f32 to vector<4x32xf32>
    %594 = arith.subf %593, %587 : vector<4x32xf32>
    %595 = arith.mulf %594, %592 : vector<4x32xf32>
    %596 = arith.mulf %587, %553 : vector<4x32xf32>
    %597 = arith.addf %595, %596 : vector<4x32xf32>
    %c12 = arith.constant 12 : index
    %c0_114 = arith.constant 0 : index
    %598 = vector.load %arg4[%c12, %c0_114] : memref<28x32xf32, #tpu.memory_space<vmem>>, vector<4x32xf32>
    tpu.vector_store %arg4[%c12, %c0_114], %597 {strides = array<i32>} : memref<28x32xf32, #tpu.memory_space<vmem>>, vector<4x32xf32>,
    %c12_115 = arith.constant 12 : index
    %c0_116 = arith.constant 0 : index
    %599 = vector.load %arg5[%c12_115, %c0_116] : memref<28x64xf32, #tpu.memory_space<vmem>>, vector<4x64xf32>
    tpu.vector_store %arg5[%c12_115, %c0_116], %574 {strides = array<i32>} : memref<28x64xf32, #tpu.memory_space<vmem>>, vector<4x64xf32>,
    %cst_117 = arith.constant dense<0.000000e+00> : vector<4x128xf32>
    %600 = tpu.matmul %597, %394, %cst_117 {dimension_numbers = #tpu.dot_dimension_numbers<[1], [0], [0], [1], [0, 0, 1, 1], [], []>} : vector<4x32xf32>, vector<32x128xf32>, vector<4x128xf32> -> vector<4x128xf32>
    %601 = vector.extract_strided_slice %600 {offsets = [0, 0], sizes = [4, 32], strides = [1, 1]} : vector<4x128xf32> to vector<4x32xf32>
    %602 = vector.extract_strided_slice %600 {offsets = [0, 32], sizes = [4, 96], strides = [1, 1]} : vector<4x128xf32> to vector<4x96xf32>
    %603 = arith.addf %602, %397 : vector<4x96xf32>
    %604 = tpu.concatenate %601, %601 in 0 : vector<4x32xf32>, vector<4x32xf32> -> vector<8x32xf32>
    %605 = tpu.concatenate %604, %604 in 0 : vector<8x32xf32>, vector<8x32xf32> -> vector<16x32xf32>
    %606 = tpu.concatenate %605, %605 in 0 : vector<16x32xf32>, vector<16x32xf32> -> vector<32x32xf32>
    %607 = arith.addf %393, %606 : vector<32x32xf32>
    %608 = math.tanh %607 : vector<32x32xf32>
    %cst_118 = arith.constant dense<0.000000e+00> : vector<32x1xf32>
    %609 = tpu.matmul %608, %395, %cst_118 {dimension_numbers = #tpu.dot_dimension_numbers<[1], [0], [0], [1], [0, 0, 1, 1], [], []>} : vector<32x32xf32>, vector<32x1xf32>, vector<32x1xf32> -> vector<32x1xf32>
    %610 = math.exp %609 : vector<32x1xf32>
    %611 = vector.broadcast %610 : vector<32x1xf32> to vector<32x65xf32>
    %612 = arith.mulf %611, %391 : vector<32x65xf32>
    %cst_119 = arith.constant dense<0.000000e+00> : vector<4x65xf32>
    %613 = tpu.matmul %423, %612, %cst_119 {dimension_numbers = #tpu.dot_dimension_numbers<[1], [0], [0], [1], [0, 0, 1, 1], [], []>} : vector<4x32xf32>, vector<32x65xf32>, vector<4x65xf32> -> vector<4x65xf32>
    %614 = vector.extract_strided_slice %613 {offsets = [0, 0], sizes = [4, 64], strides = [1, 1]} : vector<4x65xf32> to vector<4x64xf32>
    %615 = vector.extract_strided_slice %613 {offsets = [0, 64], sizes = [4, 1], strides = [1, 1]} : vector<4x65xf32> to vector<4x1xf32>
    %616 = tpu.reciprocal %615 {approx = true} : vector<4x1xf32> -> vector<4x1xf32>
    %617 = vector.broadcast %616 : vector<4x1xf32> to vector<4x64xf32>
    %618 = arith.mulf %614, %617 : vector<4x64xf32>
    %619 = vector.extract_strided_slice %400 {offsets = [16, 0], sizes = [4, 96], strides = [1, 1]} : vector<28x96xf32> to vector<4x96xf32>
    %cst_120 = arith.constant dense<0.000000e+00> : vector<4x96xf32>
    %620 = tpu.matmul %618, %396, %cst_120 {dimension_numbers = #tpu.dot_dimension_numbers<[1], [0], [0], [1], [0, 0, 1, 1], [], []>} : vector<4x64xf32>, vector<64x96xf32>, vector<4x96xf32> -> vector<4x96xf32>
    %621 = arith.addf %619, %620 : vector<4x96xf32>
    %622 = vector.extract_strided_slice %621 {offsets = [0, 0], sizes = [4, 64], strides = [1, 1]} : vector<4x96xf32> to vector<4x64xf32>
    %623 = vector.extract_strided_slice %603 {offsets = [0, 0], sizes = [4, 64], strides = [1, 1]} : vector<4x96xf32> to vector<4x64xf32>
    %624 = arith.addf %622, %623 : vector<4x64xf32>
    %625 = arith.negf %624 : vector<4x64xf32>
    %626 = math.exp %625 : vector<4x64xf32>
    %cst_121 = arith.constant 1.000000e+00 : f32
    %627 = vector.broadcast %cst_121 : f32 to vector<4x64xf32>
    %628 = arith.addf %627, %626 : vector<4x64xf32>
    %629 = arith.divf %627, %628 : vector<4x64xf32>
    %630 = vector.extract_strided_slice %629 {offsets = [0, 0], sizes = [4, 32], strides = [1, 1]} : vector<4x64xf32> to vector<4x32xf32>
    %631 = vector.extract_strided_slice %629 {offsets = [0, 32], sizes = [4, 32], strides = [1, 1]} : vector<4x64xf32> to vector<4x32xf32>
    %632 = vector.extract_strided_slice %621 {offsets = [0, 64], sizes = [4, 32], strides = [1, 1]} : vector<4x96xf32> to vector<4x32xf32>
    %633 = vector.extract_strided_slice %603 {offsets = [0, 64], sizes = [4, 32], strides = [1, 1]} : vector<4x96xf32> to vector<4x32xf32>
    %634 = arith.mulf %630, %633 : vector<4x32xf32>
    %635 = arith.addf %632, %634 : vector<4x32xf32>
    %636 = math.tanh %635 : vector<4x32xf32>
    %cst_122 = arith.constant 1.000000e+00 : f32
    %637 = vector.broadcast %cst_122 : f32 to vector<4x32xf32>
    %638 = arith.subf %637, %631 : vector<4x32xf32>
    %639 = arith.mulf %638, %636 : vector<4x32xf32>
    %640 = arith.mulf %631, %597 : vector<4x32xf32>
    %641 = arith.addf %639, %640 : vector<4x32xf32>
    %c16 = arith.constant 16 : index
    %c0_123 = arith.constant 0 : index
    %642 = vector.load %arg4[%c16, %c0_123] : memref<28x32xf32, #tpu.memory_space<vmem>>, vector<4x32xf32>
    tpu.vector_store %arg4[%c16, %c0_123], %641 {strides = array<i32>} : memref<28x32xf32, #tpu.memory_space<vmem>>, vector<4x32xf32>,
    %c16_124 = arith.constant 16 : index
    %c0_125 = arith.constant 0 : index
    %643 = vector.load %arg5[%c16_124, %c0_125] : memref<28x64xf32, #tpu.memory_space<vmem>>, vector<4x64xf32>
    tpu.vector_store %arg5[%c16_124, %c0_125], %618 {strides = array<i32>} : memref<28x64xf32, #tpu.memory_space<vmem>>, vector<4x64xf32>,
    %cst_126 = arith.constant dense<0.000000e+00> : vector<4x128xf32>
    %644 = tpu.matmul %641, %394, %cst_126 {dimension_numbers = #tpu.dot_dimension_numbers<[1], [0], [0], [1], [0, 0, 1, 1], [], []>} : vector<4x32xf32>, vector<32x128xf32>, vector<4x128xf32> -> vector<4x128xf32>
    %645 = vector.extract_strided_slice %644 {offsets = [0, 0], sizes = [4, 32], strides = [1, 1]} : vector<4x128xf32> to vector<4x32xf32>
    %646 = vector.extract_strided_slice %644 {offsets = [0, 32], sizes = [4, 96], strides = [1, 1]} : vector<4x128xf32> to vector<4x96xf32>
    %647 = arith.addf %646, %397 : vector<4x96xf32>
    %648 = tpu.concatenate %645, %645 in 0 : vector<4x32xf32>, vector<4x32xf32> -> vector<8x32xf32>
    %649 = tpu.concatenate %648, %648 in 0 : vector<8x32xf32>, vector<8x32xf32> -> vector<16x32xf32>
    %650 = tpu.concatenate %649, %649 in 0 : vector<16x32xf32>, vector<16x32xf32> -> vector<32x32xf32>
    %651 = arith.addf %393, %650 : vector<32x32xf32>
    %652 = math.tanh %651 : vector<32x32xf32>
    %cst_127 = arith.constant dense<0.000000e+00> : vector<32x1xf32>
    %653 = tpu.matmul %652, %395, %cst_127 {dimension_numbers = #tpu.dot_dimension_numbers<[1], [0], [0], [1], [0, 0, 1, 1], [], []>} : vector<32x32xf32>, vector<32x1xf32>, vector<32x1xf32> -> vector<32x1xf32>
    %654 = math.exp %653 : vector<32x1xf32>
    %655 = vector.broadcast %654 : vector<32x1xf32> to vector<32x65xf32>
    %656 = arith.mulf %655, %391 : vector<32x65xf32>
    %cst_128 = arith.constant dense<0.000000e+00> : vector<4x65xf32>
    %657 = tpu.matmul %423, %656, %cst_128 {dimension_numbers = #tpu.dot_dimension_numbers<[1], [0], [0], [1], [0, 0, 1, 1], [], []>} : vector<4x32xf32>, vector<32x65xf32>, vector<4x65xf32> -> vector<4x65xf32>
    %658 = vector.extract_strided_slice %657 {offsets = [0, 0], sizes = [4, 64], strides = [1, 1]} : vector<4x65xf32> to vector<4x64xf32>
    %659 = vector.extract_strided_slice %657 {offsets = [0, 64], sizes = [4, 1], strides = [1, 1]} : vector<4x65xf32> to vector<4x1xf32>
    %660 = tpu.reciprocal %659 {approx = true} : vector<4x1xf32> -> vector<4x1xf32>
    %661 = vector.broadcast %660 : vector<4x1xf32> to vector<4x64xf32>
    %662 = arith.mulf %658, %661 : vector<4x64xf32>
    %663 = vector.extract_strided_slice %400 {offsets = [20, 0], sizes = [4, 96], strides = [1, 1]} : vector<28x96xf32> to vector<4x96xf32>
    %cst_129 = arith.constant dense<0.000000e+00> : vector<4x96xf32>
    %664 = tpu.matmul %662, %396, %cst_129 {dimension_numbers = #tpu.dot_dimension_numbers<[1], [0], [0], [1], [0, 0, 1, 1], [], []>} : vector<4x64xf32>, vector<64x96xf32>, vector<4x96xf32> -> vector<4x96xf32>
    %665 = arith.addf %663, %664 : vector<4x96xf32>
    %666 = vector.extract_strided_slice %665 {offsets = [0, 0], sizes = [4, 64], strides = [1, 1]} : vector<4x96xf32> to vector<4x64xf32>
    %667 = vector.extract_strided_slice %647 {offsets = [0, 0], sizes = [4, 64], strides = [1, 1]} : vector<4x96xf32> to vector<4x64xf32>
    %668 = arith.addf %666, %667 : vector<4x64xf32>
    %669 = arith.negf %668 : vector<4x64xf32>
    %670 = math.exp %669 : vector<4x64xf32>
    %cst_130 = arith.constant 1.000000e+00 : f32
    %671 = vector.broadcast %cst_130 : f32 to vector<4x64xf32>
    %672 = arith.addf %671, %670 : vector<4x64xf32>
    %673 = arith.divf %671, %672 : vector<4x64xf32>
    %674 = vector.extract_strided_slice %673 {offsets = [0, 0], sizes = [4, 32], strides = [1, 1]} : vector<4x64xf32> to vector<4x32xf32>
    %675 = vector.extract_strided_slice %673 {offsets = [0, 32], sizes = [4, 32], strides = [1, 1]} : vector<4x64xf32> to vector<4x32xf32>
    %676 = vector.extract_strided_slice %665 {offsets = [0, 64], sizes = [4, 32], strides = [1, 1]} : vector<4x96xf32> to vector<4x32xf32>
    %677 = vector.extract_strided_slice %647 {offsets = [0, 64], sizes = [4, 32], strides = [1, 1]} : vector<4x96xf32> to vector<4x32xf32>
    %678 = arith.mulf %674, %677 : vector<4x32xf32>
    %679 = arith.addf %676, %678 : vector<4x32xf32>
    %680 = math.tanh %679 : vector<4x32xf32>
    %cst_131 = arith.constant 1.000000e+00 : f32
    %681 = vector.broadcast %cst_131 : f32 to vector<4x32xf32>
    %682 = arith.subf %681, %675 : vector<4x32xf32>
    %683 = arith.mulf %682, %680 : vector<4x32xf32>
    %684 = arith.mulf %675, %641 : vector<4x32xf32>
    %685 = arith.addf %683, %684 : vector<4x32xf32>
    %c20 = arith.constant 20 : index
    %c0_132 = arith.constant 0 : index
    %686 = vector.load %arg4[%c20, %c0_132] : memref<28x32xf32, #tpu.memory_space<vmem>>, vector<4x32xf32>
    tpu.vector_store %arg4[%c20, %c0_132], %685 {strides = array<i32>} : memref<28x32xf32, #tpu.memory_space<vmem>>, vector<4x32xf32>,
    %c20_133 = arith.constant 20 : index
    %c0_134 = arith.constant 0 : index
    %687 = vector.load %arg5[%c20_133, %c0_134] : memref<28x64xf32, #tpu.memory_space<vmem>>, vector<4x64xf32>
    tpu.vector_store %arg5[%c20_133, %c0_134], %662 {strides = array<i32>} : memref<28x64xf32, #tpu.memory_space<vmem>>, vector<4x64xf32>,
    %cst_135 = arith.constant dense<0.000000e+00> : vector<4x128xf32>
    %688 = tpu.matmul %685, %394, %cst_135 {dimension_numbers = #tpu.dot_dimension_numbers<[1], [0], [0], [1], [0, 0, 1, 1], [], []>} : vector<4x32xf32>, vector<32x128xf32>, vector<4x128xf32> -> vector<4x128xf32>
    %689 = vector.extract_strided_slice %688 {offsets = [0, 0], sizes = [4, 32], strides = [1, 1]} : vector<4x128xf32> to vector<4x32xf32>
    %690 = vector.extract_strided_slice %688 {offsets = [0, 32], sizes = [4, 96], strides = [1, 1]} : vector<4x128xf32> to vector<4x96xf32>
    %691 = arith.addf %690, %397 : vector<4x96xf32>
    %692 = tpu.concatenate %689, %689 in 0 : vector<4x32xf32>, vector<4x32xf32> -> vector<8x32xf32>
    %693 = tpu.concatenate %692, %692 in 0 : vector<8x32xf32>, vector<8x32xf32> -> vector<16x32xf32>
    %694 = tpu.concatenate %693, %693 in 0 : vector<16x32xf32>, vector<16x32xf32> -> vector<32x32xf32>
    %695 = arith.addf %393, %694 : vector<32x32xf32>
    %696 = math.tanh %695 : vector<32x32xf32>
    %cst_136 = arith.constant dense<0.000000e+00> : vector<32x1xf32>
    %697 = tpu.matmul %696, %395, %cst_136 {dimension_numbers = #tpu.dot_dimension_numbers<[1], [0], [0], [1], [0, 0, 1, 1], [], []>} : vector<32x32xf32>, vector<32x1xf32>, vector<32x1xf32> -> vector<32x1xf32>
    %698 = math.exp %697 : vector<32x1xf32>
    %699 = vector.broadcast %698 : vector<32x1xf32> to vector<32x65xf32>
    %700 = arith.mulf %699, %391 : vector<32x65xf32>
    %cst_137 = arith.constant dense<0.000000e+00> : vector<4x65xf32>
    %701 = tpu.matmul %423, %700, %cst_137 {dimension_numbers = #tpu.dot_dimension_numbers<[1], [0], [0], [1], [0, 0, 1, 1], [], []>} : vector<4x32xf32>, vector<32x65xf32>, vector<4x65xf32> -> vector<4x65xf32>
    %702 = vector.extract_strided_slice %701 {offsets = [0, 0], sizes = [4, 64], strides = [1, 1]} : vector<4x65xf32> to vector<4x64xf32>
    %703 = vector.extract_strided_slice %701 {offsets = [0, 64], sizes = [4, 1], strides = [1, 1]} : vector<4x65xf32> to vector<4x1xf32>
    %704 = tpu.reciprocal %703 {approx = true} : vector<4x1xf32> -> vector<4x1xf32>
    %705 = vector.broadcast %704 : vector<4x1xf32> to vector<4x64xf32>
    %706 = arith.mulf %702, %705 : vector<4x64xf32>
    %707 = vector.extract_strided_slice %400 {offsets = [24, 0], sizes = [4, 96], strides = [1, 1]} : vector<28x96xf32> to vector<4x96xf32>
    %cst_138 = arith.constant dense<0.000000e+00> : vector<4x96xf32>
    %708 = tpu.matmul %706, %396, %cst_138 {dimension_numbers = #tpu.dot_dimension_numbers<[1], [0], [0], [1], [0, 0, 1, 1], [], []>} : vector<4x64xf32>, vector<64x96xf32>, vector<4x96xf32> -> vector<4x96xf32>
    %709 = arith.addf %707, %708 : vector<4x96xf32>
    %710 = vector.extract_strided_slice %709 {offsets = [0, 0], sizes = [4, 64], strides = [1, 1]} : vector<4x96xf32> to vector<4x64xf32>
    %711 = vector.extract_strided_slice %691 {offsets = [0, 0], sizes = [4, 64], strides = [1, 1]} : vector<4x96xf32> to vector<4x64xf32>
    %712 = arith.addf %710, %711 : vector<4x64xf32>
    %713 = arith.negf %712 : vector<4x64xf32>
    %714 = math.exp %713 : vector<4x64xf32>
    %cst_139 = arith.constant 1.000000e+00 : f32
    %715 = vector.broadcast %cst_139 : f32 to vector<4x64xf32>
    %716 = arith.addf %715, %714 : vector<4x64xf32>
    %717 = arith.divf %715, %716 : vector<4x64xf32>
    %718 = vector.extract_strided_slice %717 {offsets = [0, 0], sizes = [4, 32], strides = [1, 1]} : vector<4x64xf32> to vector<4x32xf32>
    %719 = vector.extract_strided_slice %717 {offsets = [0, 32], sizes = [4, 32], strides = [1, 1]} : vector<4x64xf32> to vector<4x32xf32>
    %720 = vector.extract_strided_slice %709 {offsets = [0, 64], sizes = [4, 32], strides = [1, 1]} : vector<4x96xf32> to vector<4x32xf32>
    %721 = vector.extract_strided_slice %691 {offsets = [0, 64], sizes = [4, 32], strides = [1, 1]} : vector<4x96xf32> to vector<4x32xf32>
    %722 = arith.mulf %718, %721 : vector<4x32xf32>
    %723 = arith.addf %720, %722 : vector<4x32xf32>
    %724 = math.tanh %723 : vector<4x32xf32>
    %cst_140 = arith.constant 1.000000e+00 : f32
    %725 = vector.broadcast %cst_140 : f32 to vector<4x32xf32>
    %726 = arith.subf %725, %719 : vector<4x32xf32>
    %727 = arith.mulf %726, %724 : vector<4x32xf32>
    %728 = arith.mulf %719, %685 : vector<4x32xf32>
    %729 = arith.addf %727, %728 : vector<4x32xf32>
    %c24_141 = arith.constant 24 : index
    %c0_142 = arith.constant 0 : index
    %730 = vector.load %arg4[%c24_141, %c0_142] : memref<28x32xf32, #tpu.memory_space<vmem>>, vector<4x32xf32>
    tpu.vector_store %arg4[%c24_141, %c0_142], %729 {strides = array<i32>} : memref<28x32xf32, #tpu.memory_space<vmem>>, vector<4x32xf32>,
    %c24_143 = arith.constant 24 : index
    %c0_144 = arith.constant 0 : index
    %731 = vector.load %arg5[%c24_143, %c0_144] : memref<28x64xf32, #tpu.memory_space<vmem>>, vector<4x64xf32>
    tpu.vector_store %arg5[%c24_143, %c0_144], %706 {strides = array<i32>} : memref<28x64xf32, #tpu.memory_space<vmem>>, vector<4x64xf32>,
    %c0_145 = arith.constant 0 : index
    %c0_146 = arith.constant 0 : index
    %732 = vector.load %arg4[%c0_145, %c0_146] : memref<28x32xf32, #tpu.memory_space<vmem>>, vector<28x32xf32>
    %c432 = arith.constant 432 : index
    %c0_147 = arith.constant 0 : index
    %733 = vector.load %arg2[%c432, %c0_147] : memref<552x128xf32, #tpu.memory_space<vmem>>, vector<32x24xf32>
    %cst_148 = arith.constant dense<0.000000e+00> : vector<28x24xf32>
    %734 = tpu.matmul %732, %733, %cst_148 {dimension_numbers = #tpu.dot_dimension_numbers<[1], [0], [0], [1], [0, 0, 1, 1], [], []>} : vector<28x32xf32>, vector<32x24xf32>, vector<28x24xf32> -> vector<28x24xf32>
    %c0_149 = arith.constant 0 : index
    %c0_150 = arith.constant 0 : index
    %735 = vector.load %arg5[%c0_149, %c0_150] : memref<28x64xf32, #tpu.memory_space<vmem>>, vector<28x64xf32>
    %c464 = arith.constant 464 : index
    %c0_151 = arith.constant 0 : index
    %736 = vector.load %arg2[%c464, %c0_151] : memref<552x128xf32, #tpu.memory_space<vmem>>, vector<64x24xf32>
    %cst_152 = arith.constant dense<0.000000e+00> : vector<28x24xf32>
    %737 = tpu.matmul %735, %736, %cst_152 {dimension_numbers = #tpu.dot_dimension_numbers<[1], [0], [0], [1], [0, 0, 1, 1], [], []>} : vector<28x64xf32>, vector<64x24xf32>, vector<28x24xf32> -> vector<28x24xf32>
    %738 = arith.addf %734, %737 : vector<28x24xf32>
    %739 = arith.addf %738, %402 : vector<28x24xf32>
    %cst_153 = arith.constant 0.000000e+00 : f32
    %740 = vector.broadcast %cst_153 : f32 to vector<4x24xf32>
    %741 = tpu.concatenate %740, %739 in 0 : vector<4x24xf32>, vector<28x24xf32> -> vector<32x24xf32>
    %c0_154 = arith.constant 0 : index
    %c0_155 = arith.constant 0 : index
    %742 = vector.load %arg3[%c0_154, %c0_155] : memref<32x24xf32, #tpu.memory_space<vmem>>, vector<32x24xf32>
    tpu.vector_store %arg3[%c0_154, %c0_155], %741 {strides = array<i32>} : memref<32x24xf32, #tpu.memory_space<vmem>>, vector<32x24xf32>,
    return
  }
}

</mosaic_0001>

<llo_original>
// kernel: seq2seq_forward.1
$region0: #{seq2seq_forward.1}
  #allocation0 [shape = 'u32[]', space=smem, size = 0x4, offset = 0x4, fixed_abs, tag = 'smem constant byte address 0x4 - core index']
  #allocation1 [shape = 'u32[72,128]{1,0:T(1,128)}', space=vmem, size = 0x9000, scoped, tag = 'internal scratch']
  #allocation2 [shape = 'f32[28,32]{1,0:T(8,128)}', space=vmem, size = 0x4000, scoped, tag = 'scratch operand']
  #allocation3 [shape = 'f32[28,64]{1,0:T(8,128)}', space=vmem, size = 0x4000, scoped, tag = 'scratch operand']
  %s0 = inlined_call_operand.vmem [shape: f32[32,17], index: 0, kind: input, shape index: {}]
  %s1 = inlined_call_operand.vmem [shape: f32[28,17], index: 1, kind: input, shape index: {}]
  %s2 = inlined_call_operand.hbm [shape: f32[552,128], index: 2, kind: input, shape index: {}]
  %s3 = inlined_call_operand.hbm [shape: f32[32,24], index: 3, kind: output, shape index: {}]
  %s4 = sld [smem:[#allocation0]]
  $region26: #{seq2seq_forward.1} parent=0
    _
  %s6 = ssub.s32 1, %s4
  %s7 = scalar_select 0, %s6, %s4
  $region1: #{seq2seq_forward.1} parent=0
    #allocation4 [shape = 'u8[282624]{0}', space=vmem, size = 0x45000, scoped, tag = 'input window, operand 2, single buffered']
    #allocation5 [shape = 's32[1]{0}', space=sflag, size = 0x4, scoped, tag = 'scoped memory for seq2seq_forward.1']
    #allocation6 [shape = 's32[1]{0}', space=sflag, size = 0x4, scoped, tag = 'scoped memory for seq2seq_forward.1']
    #allocation7 [shape = 'u8[16384]{0}', space=vmem, size = 0x4000, scoped, tag = 'output window, operand 0, single buffered']
    %8 = vsyncpa [#allocation5], 0
    %9 = vsyncpa [#allocation6], 0
    // Predicated region
    $region2: #{seq2seq_forward.1} parent=1 // pred_check
      _
    $region3: #{seq2seq_forward.1} parent=1 // pred_check_branch
      %11 = sbr.rel (0) target = $region5
    $region4: #{seq2seq_forward.1} parent=1 // pred_region
      _
    $region5: #{seq2seq_forward.1} parent=1 // pred_fallthru
      _
    // Predicated region
    $region6: #{seq2seq_forward.1} parent=1 // pred_check
      _
    $region7: #{seq2seq_forward.1} parent=1 // pred_check_branch
      %13 = sbr.rel (0) target = $region9
    $region8: #{seq2seq_forward.1} parent=1 // pred_region
      _
    $region9: #{seq2seq_forward.1} parent=1 // pred_fallthru
      _
    // Predicated region
    $region10: #{seq2seq_forward.1} parent=1 // pred_check
      _
    $region11: #{seq2seq_forward.1} parent=1 // pred_check_branch
      %15 = sbr.rel (0) target = $region13
    $region12: #{seq2seq_forward.1} parent=1 // pred_region
      %17 = vsyncadd [#allocation5], 0
      %s18 = sshll.u32 %s2, 4
      %s19 = int_to_ptr.hbm [resolvable:$true] %s18
      %s20 = sshll.u32 [#allocation4], 4
      %s21 = int_to_ptr.vmem [resolvable:$true] %s20
      %26 = dma.hbm_to_vmem [thread:$0]  %s19, 8832, %s21, [#allocation5], 128, 128, 8
    $region13: #{seq2seq_forward.1} parent=1 // pred_fallthru
      _
    // Predicated region
    $region14: #{seq2seq_forward.1} parent=1 // pred_check
      _
    $region15: #{seq2seq_forward.1} parent=1 // pred_check_branch
      %28 = sbr.rel (0) target = $region17
    $region16: #{seq2seq_forward.1} parent=1 // pred_region
      %30 = dma.done [#allocation5], 8832
    $region17: #{seq2seq_forward.1} parent=1 // pred_fallthru
      _
    %v31 = vld [vmem:[%s0] sm:$0xff]
    %v32 = vld [vmem:[%s0 + $0x8] sm:$0xff]
    %v33 = vld [vmem:[%s0 + $0x10] sm:$0xff]
    %v34 = vld [vmem:[%s0 + $0x18] sm:$0xff]
    %v35 = vld [vmem:[#allocation4] sm:$0xff]
    %v36 = vld [vmem:[#allocation4 + $0x8] sm:$0xff]
    %v37 = vld [vmem:[#allocation4 + $0x10] sm:$0x1]
    %vm38 = vcmask 138240
    %v40 = vsel %vm38, %v31, 0
    %v43 = vsel %vm38, %v32, 0
    %v46 = vsel %vm38, %v33, 0
    %v49 = vsel %vm38, %v34, 0
    %vm51 = vcmask 1040384
    %v53 = vsel %vm51, %v37, 0
    %55 = vmatpush.msra.mxu0 0.0
    %56 = vmatpush.msra.mxu0 0.0
    %57 = vmatpush.msra.mxu0 0.0
    %58 = vmatpush.msra.mxu0 0.0
    %59 = vmatpush.msra.mxu0 0.0
    %60 = vmatpush.msra.mxu0 0.0
    %61 = vmatpush.msra.mxu0 0.0
    %62 = vmatpush.msra.mxu0 0.0
    %63 = vmatpush.msra.mxu0 0.0
    %64 = vmatpush.msra.mxu0 0.0
    %65 = vmatpush.msra.mxu0 0.0
    %66 = vmatpush.msra.mxu0 0.0
    %67 = vmatpush.msra.mxu0 0.0
    %68 = vmatpush.msra.mxu0 %v53
    %69 = vmatpush.msra.mxu0 %v36
    %70 = vmatpush.msra.mxu0 %v35
    %71 = vmatmul.f32.gmra.mxu0 %v40
    %v72 = vpop.f32.mrf.mxu0
    %v73 = vadd.f32 0.0, %v72
    %74 = vmatmul.f32.gmra.mxu0 %v43
    %v75 = vpop.f32.mrf.mxu0
    %v76 = vadd.f32 0.0, %v75
    %77 = vmatmul.f32.gmra.mxu0 %v46
    %v78 = vpop.f32.mrf.mxu0
    %v79 = vadd.f32 0.0, %v78
    %80 = vmatmul.f32.gmra.mxu0 %v49
    %v81 = vpop.f32.mrf.mxu0
    %v82 = vadd.f32 0.0, %v81
    %83 = vdwg.mxu0
    %v84 = vld [vmem:[#allocation4 + $0x18] sm:$0xff]
    %v85 = vld [vmem:[#allocation4 + $0x20] sm:$0xff]
    %v86 = vld [vmem:[#allocation4 + $0x28] sm:$0x1]
    %v88 = vsel %vm51, %v86, 0
    %90 = vmatpush.msra.mxu0 0.0
    %91 = vmatpush.msra.mxu0 0.0
    %92 = vmatpush.msra.mxu0 0.0
    %93 = vmatpush.msra.mxu0 0.0
    %94 = vmatpush.msra.mxu0 0.0
    %95 = vmatpush.msra.mxu0 0.0
    %96 = vmatpush.msra.mxu0 0.0
    %97 = vmatpush.msra.mxu0 0.0
    %98 = vmatpush.msra.mxu0 0.0
    %99 = vmatpush.msra.mxu0 0.0
    %100 = vmatpush.msra.mxu0 0.0
    %101 = vmatpush.msra.mxu0 0.0
    %102 = vmatpush.msra.mxu0 0.0
    %103 = vmatpush.msra.mxu0 %v88
    %104 = vmatpush.msra.mxu0 %v85
    %105 = vmatpush.msra.mxu0 %v84
    %106 = vmatmul.f32.gmra.mxu0 %v40
    %v107 = vpop.f32.mrf.mxu0
    %v108 = vadd.f32 0.0, %v107
    %109 = vmatmul.f32.gmra.mxu0 %v43
    %v110 = vpop.f32.mrf.mxu0
    %v111 = vadd.f32 0.0, %v110
    %112 = vmatmul.f32.gmra.mxu0 %v46
    %v113 = vpop.f32.mrf.mxu0
    %v114 = vadd.f32 0.0, %v113
    %115 = vmatmul.f32.gmra.mxu0 %v49
    %v116 = vpop.f32.mrf.mxu0
    %v117 = vadd.f32 0.0, %v116
    %118 = vdwg.mxu0
    %v119 = vld [vmem:[#allocation4 + $0x30] sm:$0xff]
    %v120 = vld [vmem:[#allocation4 + $0x38] sm:$0xff]
    %v121 = vld [vmem:[#allocation4 + $0x40] sm:$0xff]
    %v122 = vld [vmem:[#allocation4 + $0x48] sm:$0xff]
    %v123 = vld [vmem:[#allocation4 + $0x50] sm:$0xff]
    %v124 = vld [vmem:[#allocation4 + $0x58] sm:$0xff]
    %v125 = vld [vmem:[#allocation4 + $0x60] sm:$0xff]
    %v126 = vld [vmem:[#allocation4 + $0x68] sm:$0xff]
    %v127 = vld [vmem:[#allocation4 + $0x70] sm:$0xf]
    %v128 = vld [vmem:[#allocation4 + $0x78] sm:$0xf]
    %vm129 = vcmask 261120
    %v131 = vsel %vm129, 0.0, 0
    %133 = vmatpush.msra.mxu0 0.0
    %134 = vmatpush.msra.mxu0 0.0
    %135 = vmatpush.msra.mxu0 0.0
    %136 = vmatpush.msra.mxu0 0.0
    %137 = vmatpush.msra.mxu0 0.0
    %138 = vmatpush.msra.mxu0 0.0
    %139 = vmatpush.msra.mxu0 0.0
    %140 = vmatpush.msra.mxu0 0.0
    %141 = vmatpush.msra.mxu0 0.0
    %142 = vmatpush.msra.mxu0 0.0
    %143 = vmatpush.msra.mxu0 0.0
    %144 = vmatpush.msra.mxu0 0.0
    %145 = vmatpush.msra.mxu0 %v122
    %146 = vmatpush.msra.mxu0 %v121
    %147 = vmatpush.msra.mxu0 %v120
    %148 = vmatpush.msra.mxu0 %v119
    %149 = vmatmul.f32.gmra.mxu0 %v131
    %v150 = vpop.f32.mrf.mxu0
    %v151 = vadd.f32 %v127, %v150
    %152 = vdwg.mxu0
    %v153 = vadd.f32 %v73, %v151
    %v154 = vxor.u32 %v153, 2147483648
    %v155 = vmul.f32 %v154, 1.442695
    %v156 = vpow.pop %v155
    %v157 = vadd.f32 %v156, 1.0
    %v158 = vrcp.pop %v157
    %v159 = vmul.f32 %v157, %v158
    %v160 = vsub.f32 1.0, %v159
    %v161 = vmul.f32 %v158, %v160
    %v162 = vadd.f32 %v158, %v161
    %vm163 = vweird.f32 %v157
    %vm164 = vweird.f32 %v158
    %vm165 = vmor %vm163, %vm164
    %v166 = vsel %vm165, %v158, %v162
    %v167 = vand.u32 2147483647, %v157
    %vm168 = vcmp.eq.f32.partialorder %v167, 8.507059e+37
    %v169 = vand.u32 %v157, 2147483648
    %v170 = vor.u32 1.1754944e-38, %v169
    %v171 = vsel %vm168, %v170, %v166
    %v172 = vmul.f32 1.0, %v171
    %174 = vrot.lane.b32.xlu0 %v151, 64
    %v175 = vpop.permute.xlu0 %174
    %v177 = vmul.f32 %v172, %v175
    %179 = vrot.lane.b32.xlu0 %v177, 64
    %v180 = vpop.permute.xlu0 %179
    %v182 = vadd.f32 %v73, %v180
    %v183 = vtanh.pop %v182
    %v184 = vsub.f32 1.0, %v172
    %186 = vrot.lane.b32.xlu0 %v183, 96
    %v187 = vpop.permute.xlu0 %186
    %v189 = vmul.f32 %v184, %v187
    %v190 = vmul.f32 %v172, 0.0
    %v191 = vadd.f32 %v189, %v190
    %192 = vmatpush.msra.mxu0 0.0
    %193 = vmatpush.msra.mxu0 0.0
    %194 = vmatpush.msra.mxu0 0.0
    %195 = vmatpush.msra.mxu0 0.0
    %196 = vmatpush.msra.mxu0 0.0
    %197 = vmatpush.msra.mxu0 0.0
    %198 = vmatpush.msra.mxu0 0.0
    %199 = vmatpush.msra.mxu0 0.0
    %200 = vmatpush.msra.mxu0 0.0
    %201 = vmatpush.msra.mxu0 0.0
    %202 = vmatpush.msra.mxu0 0.0
    %203 = vmatpush.msra.mxu0 0.0
    %204 = vmatpush.msra.mxu0 %v126
    %205 = vmatpush.msra.mxu0 %v125
    %206 = vmatpush.msra.mxu0 %v124
    %207 = vmatpush.msra.mxu0 %v123
    %208 = vmatmul.f32.gmra.mxu0 %v131
    %v209 = vpop.f32.mrf.mxu0
    %v210 = vadd.f32 %v128, %v209
    %211 = vdwg.mxu0
    %v213 = vrot.slane %v210, 4
    %v215 = vadd.f32 %v117, %v213
    %v216 = vxor.u32 %v215, 2147483648
    %v217 = vmul.f32 %v216, 1.442695
    %v218 = vpow.pop %v217
    %v219 = vadd.f32 %v218, 1.0
    %v220 = vrcp.pop %v219
    %v221 = vmul.f32 %v219, %v220
    %v222 = vsub.f32 1.0, %v221
    %v223 = vmul.f32 %v220, %v222
    %v224 = vadd.f32 %v220, %v223
    %vm225 = vweird.f32 %v219
    %vm226 = vweird.f32 %v220
    %vm227 = vmor %vm225, %vm226
    %v228 = vsel %vm227, %v220, %v224
    %v229 = vand.u32 2147483647, %v219
    %vm230 = vcmp.eq.f32.partialorder %v229, 8.507059e+37
    %v231 = vand.u32 %v219, 2147483648
    %v232 = vor.u32 1.1754944e-38, %v231
    %v233 = vsel %vm230, %v232, %v228
    %v234 = vmul.f32 1.0, %v233
    %235 = vrot.lane.b32.xlu0 %v213, 64
    %v236 = vpop.permute.xlu0 %235
    %v238 = vmul.f32 %v234, %v236
    %240 = vrot.lane.b32.xlu0 %v238, 64
    %v241 = vpop.permute.xlu0 %240
    %v243 = vadd.f32 %v117, %v241
    %v244 = vtanh.pop %v243
    %v245 = vsub.f32 1.0, %v234
    %247 = vrot.lane.b32.xlu0 %v244, 96
    %v248 = vpop.permute.xlu0 %247
    %v250 = vmul.f32 %v245, %v248
    %v251 = vmul.f32 %v234, 0.0
    %v252 = vadd.f32 %v250, %v251
    %254 = vrot.lane.b32.xlu0 %v191, 96
    %v255 = vpop.permute.xlu0 %254
    %v256 = vsel %vm129, %v255, 0
    %258 = vmatpush.msra.mxu0 0.0
    %259 = vmatpush.msra.mxu0 0.0
    %260 = vmatpush.msra.mxu0 0.0
    %261 = vmatpush.msra.mxu0 0.0
    %262 = vmatpush.msra.mxu0 0.0
    %263 = vmatpush.msra.mxu0 0.0
    %264 = vmatpush.msra.mxu0 0.0
    %265 = vmatpush.msra.mxu0 0.0
    %266 = vmatpush.msra.mxu0 0.0
    %267 = vmatpush.msra.mxu0 0.0
    %268 = vmatpush.msra.mxu0 0.0
    %269 = vmatpush.msra.mxu0 0.0
    %270 = vmatpush.msra.mxu0 %v122
    %271 = vmatpush.msra.mxu0 %v121
    %272 = vmatpush.msra.mxu0 %v120
    %273 = vmatpush.msra.mxu0 %v119
    %274 = vmatmul.f32.gmra.mxu0 %v256
    %v275 = vpop.f32.mrf.mxu0
    %v276 = vadd.f32 %v127, %v275
    %277 = vdwg.mxu0
    %v279 = vrot.slane %v276, 4
    %v281 = vadd.f32 %v73, %v279
    %v282 = vxor.u32 %v281, 2147483648
    %v283 = vmul.f32 %v282, 1.442695
    %v284 = vpow.pop %v283
    %v285 = vadd.f32 %v284, 1.0
    %v286 = vrcp.pop %v285
    %v287 = vmul.f32 %v285, %v286
    %v288 = vsub.f32 1.0, %v287
    %v289 = vmul.f32 %v286, %v288
    %v290 = vadd.f32 %v286, %v289
    %vm291 = vweird.f32 %v285
    %vm292 = vweird.f32 %v286
    %vm293 = vmor %vm291, %vm292
    %v294 = vsel %vm293, %v286, %v290
    %v295 = vand.u32 2147483647, %v285
    %vm296 = vcmp.eq.f32.partialorder %v295, 8.507059e+37
    %v297 = vand.u32 %v285, 2147483648
    %v298 = vor.u32 1.1754944e-38, %v297
    %v299 = vsel %vm296, %v298, %v294
    %v300 = vmul.f32 1.0, %v299
    %301 = vrot.lane.b32.xlu0 %v279, 64
    %v302 = vpop.permute.xlu0 %301
    %v304 = vmul.f32 %v300, %v302
    %306 = vrot.lane.b32.xlu0 %v304, 64
    %v307 = vpop.permute.xlu0 %306
    %v309 = vadd.f32 %v73, %v307
    %v310 = vtanh.pop %v309
    %v311 = vsub.f32 1.0, %v300
    %313 = vrot.lane.b32.xlu0 %v310, 96
    %v314 = vpop.permute.xlu0 %313
    %v316 = vmul.f32 %v311, %v314
    %v317 = vrot.slane %v191, 4
    %v319 = vmul.f32 %v300, %v317
    %v320 = vadd.f32 %v316, %v319
    %v322 = vrot.slane %v252, 4
    %323 = vrot.lane.b32.xlu0 %v322, 96
    %v324 = vpop.permute.xlu0 %323
    %v325 = vsel %vm129, %v324, 0
    %327 = vmatpush.msra.mxu0 0.0
    %328 = vmatpush.msra.mxu0 0.0
    %329 = vmatpush.msra.mxu0 0.0
    %330 = vmatpush.msra.mxu0 0.0
    %331 = vmatpush.msra.mxu0 0.0
    %332 = vmatpush.msra.mxu0 0.0
    %333 = vmatpush.msra.mxu0 0.0
    %334 = vmatpush.msra.mxu0 0.0
    %335 = vmatpush.msra.mxu0 0.0
    %336 = vmatpush.msra.mxu0 0.0
    %337 = vmatpush.msra.mxu0 0.0
    %338 = vmatpush.msra.mxu0 0.0
    %339 = vmatpush.msra.mxu0 %v126
    %340 = vmatpush.msra.mxu0 %v125
    %341 = vmatpush.msra.mxu0 %v124
    %342 = vmatpush.msra.mxu0 %v123
    %343 = vmatmul.f32.gmra.mxu0 %v325
    %v344 = vpop.f32.mrf.mxu0
    %v345 = vadd.f32 %v128, %v344
    %346 = vdwg.mxu0
    %v347 = vadd.f32 %v117, %v345
    %v348 = vxor.u32 %v347, 2147483648
    %v349 = vmul.f32 %v348, 1.442695
    %v350 = vpow.pop %v349
    %v351 = vadd.f32 %v350, 1.0
    %v352 = vrcp.pop %v351
    %v353 = vmul.f32 %v351, %v352
    %v354 = vsub.f32 1.0, %v353
    %v355 = vmul.f32 %v352, %v354
    %v356 = vadd.f32 %v352, %v355
    %vm357 = vweird.f32 %v351
    %vm358 = vweird.f32 %v352
    %vm359 = vmor %vm357, %vm358
    %v360 = vsel %vm359, %v352, %v356
    %v361 = vand.u32 2147483647, %v351
    %vm362 = vcmp.eq.f32.partialorder %v361, 8.507059e+37
    %v363 = vand.u32 %v351, 2147483648
    %v364 = vor.u32 1.1754944e-38, %v363
    %v365 = vsel %vm362, %v364, %v360
    %v366 = vmul.f32 1.0, %v365
    %368 = vrot.lane.b32.xlu0 %v345, 64
    %v369 = vpop.permute.xlu0 %368
    %v371 = vmul.f32 %v366, %v369
    %373 = vrot.lane.b32.xlu0 %v371, 64
    %v374 = vpop.permute.xlu0 %373
    %v376 = vadd.f32 %v117, %v374
    %v377 = vtanh.pop %v376
    %v378 = vsub.f32 1.0, %v366
    %380 = vrot.lane.b32.xlu0 %v377, 96
    %v381 = vpop.permute.xlu0 %380
    %v383 = vmul.f32 %v378, %v381
    %v385 = vmul.f32 %v366, %v322
    %v386 = vadd.f32 %v383, %v385
    %v388 = vrot.slane %v320, 4
    %389 = vrot.lane.b32.xlu0 %v388, 96
    %v390 = vpop.permute.xlu0 %389
    %v391 = vsel %vm129, %v390, 0
    %393 = vmatpush.msra.mxu0 0.0
    %394 = vmatpush.msra.mxu0 0.0
    %395 = vmatpush.msra.mxu0 0.0
    %396 = vmatpush.msra.mxu0 0.0
    %397 = vmatpush.msra.mxu0 0.0
    %398 = vmatpush.msra.mxu0 0.0
    %399 = vmatpush.msra.mxu0 0.0
    %400 = vmatpush.msra.mxu0 0.0
    %401 = vmatpush.msra.mxu0 0.0
    %402 = vmatpush.msra.mxu0 0.0
    %403 = vmatpush.msra.mxu0 0.0
    %404 = vmatpush.msra.mxu0 0.0
    %405 = vmatpush.msra.mxu0 %v122
    %406 = vmatpush.msra.mxu0 %v121
    %407 = vmatpush.msra.mxu0 %v120
    %408 = vmatpush.msra.mxu0 %v119
    %409 = vmatmul.f32.gmra.mxu0 %v391
    %v410 = vpop.f32.mrf.mxu0
    %v411 = vadd.f32 %v127, %v410
    %412 = vdwg.mxu0
    %v413 = vadd.f32 %v76, %v411
    %v414 = vxor.u32 %v413, 2147483648
    %v415 = vmul.f32 %v414, 1.442695
    %v416 = vpow.pop %v415
    %v417 = vadd.f32 %v416, 1.0
    %v418 = vrcp.pop %v417
    %v419 = vmul.f32 %v417, %v418
    %v420 = vsub.f32 1.0, %v419
    %v421 = vmul.f32 %v418, %v420
    %v422 = vadd.f32 %v418, %v421
    %vm423 = vweird.f32 %v417
    %vm424 = vweird.f32 %v418
    %vm425 = vmor %vm423, %vm424
    %v426 = vsel %vm425, %v418, %v422
    %v427 = vand.u32 2147483647, %v417
    %vm428 = vcmp.eq.f32.partialorder %v427, 8.507059e+37
    %v429 = vand.u32 %v417, 2147483648
    %v430 = vor.u32 1.1754944e-38, %v429
    %v431 = vsel %vm428, %v430, %v426
    %v432 = vmul.f32 1.0, %v431
    %434 = vrot.lane.b32.xlu0 %v411, 64
    %v435 = vpop.permute.xlu0 %434
    %v437 = vmul.f32 %v432, %v435
    %439 = vrot.lane.b32.xlu0 %v437, 64
    %v440 = vpop.permute.xlu0 %439
    %v442 = vadd.f32 %v76, %v440
    %v443 = vtanh.pop %v442
    %v444 = vsub.f32 1.0, %v432
    %446 = vrot.lane.b32.xlu0 %v443, 96
    %v447 = vpop.permute.xlu0 %446
    %v449 = vmul.f32 %v444, %v447
    %v451 = vmul.f32 %v432, %v388
    %v452 = vadd.f32 %v449, %v451
    %454 = vrot.lane.b32.xlu0 %v386, 96
    %v455 = vpop.permute.xlu0 %454
    %v456 = vsel %vm129, %v455, 0
    %458 = vmatpush.msra.mxu0 0.0
    %459 = vmatpush.msra.mxu0 0.0
    %460 = vmatpush.msra.mxu0 0.0
    %461 = vmatpush.msra.mxu0 0.0
    %462 = vmatpush.msra.mxu0 0.0
    %463 = vmatpush.msra.mxu0 0.0
    %464 = vmatpush.msra.mxu0 0.0
    %465 = vmatpush.msra.mxu0 0.0
    %466 = vmatpush.msra.mxu0 0.0
    %467 = vmatpush.msra.mxu0 0.0
    %468 = vmatpush.msra.mxu0 0.0
    %469 = vmatpush.msra.mxu0 0.0
    %470 = vmatpush.msra.mxu0 %v126
    %471 = vmatpush.msra.mxu0 %v125
    %472 = vmatpush.msra.mxu0 %v124
    %473 = vmatpush.msra.mxu0 %v123
    %474 = vmatmul.f32.gmra.mxu0 %v456
    %v475 = vpop.f32.mrf.mxu0
    %v476 = vadd.f32 %v128, %v475
    %477 = vdwg.mxu0
    %v479 = vrot.slane %v476, 4
    %v481 = vadd.f32 %v114, %v479
    %v482 = vxor.u32 %v481, 2147483648
    %v483 = vmul.f32 %v482, 1.442695
    %v484 = vpow.pop %v483
    %v485 = vadd.f32 %v484, 1.0
    %v486 = vrcp.pop %v485
    %v487 = vmul.f32 %v485, %v486
    %v488 = vsub.f32 1.0, %v487
    %v489 = vmul.f32 %v486, %v488
    %v490 = vadd.f32 %v486, %v489
    %vm491 = vweird.f32 %v485
    %vm492 = vweird.f32 %v486
    %vm493 = vmor %vm491, %vm492
    %v494 = vsel %vm493, %v486, %v490
    %v495 = vand.u32 2147483647, %v485
    %vm496 = vcmp.eq.f32.partialorder %v495, 8.507059e+37
    %v497 = vand.u32 %v485, 2147483648
    %v498 = vor.u32 1.1754944e-38, %v497
    %v499 = vsel %vm496, %v498, %v494
    %v500 = vmul.f32 1.0, %v499
    %501 = vrot.lane.b32.xlu0 %v479, 64
    %v502 = vpop.permute.xlu0 %501
    %v504 = vmul.f32 %v500, %v502
    %506 = vrot.lane.b32.xlu0 %v504, 64
    %v507 = vpop.permute.xlu0 %506
    %v509 = vadd.f32 %v114, %v507
    %v510 = vtanh.pop %v509
    %v511 = vsub.f32 1.0, %v500
    %513 = vrot.lane.b32.xlu0 %v510, 96
    %v514 = vpop.permute.xlu0 %513
    %v516 = vmul.f32 %v511, %v514
    %v517 = vrot.slane %v386, 4
    %v519 = vmul.f32 %v500, %v517
    %v520 = vadd.f32 %v516, %v519
    %522 = vrot.lane.b32.xlu0 %v452, 96
    %v523 = vpop.permute.xlu0 %522
    %v524 = vsel %vm129, %v523, 0
    %526 = vmatpush.msra.mxu0 0.0
    %527 = vmatpush.msra.mxu0 0.0
    %528 = vmatpush.msra.mxu0 0.0
    %529 = vmatpush.msra.mxu0 0.0
    %530 = vmatpush.msra.mxu0 0.0
    %531 = vmatpush.msra.mxu0 0.0
    %532 = vmatpush.msra.mxu0 0.0
    %533 = vmatpush.msra.mxu0 0.0
    %534 = vmatpush.msra.mxu0 0.0
    %535 = vmatpush.msra.mxu0 0.0
    %536 = vmatpush.msra.mxu0 0.0
    %537 = vmatpush.msra.mxu0 0.0
    %538 = vmatpush.msra.mxu0 %v122
    %539 = vmatpush.msra.mxu0 %v121
    %540 = vmatpush.msra.mxu0 %v120
    %541 = vmatpush.msra.mxu0 %v119
    %542 = vmatmul.f32.gmra.mxu0 %v524
    %v543 = vpop.f32.mrf.mxu0
    %v544 = vadd.f32 %v127, %v543
    %545 = vdwg.mxu0
    %v547 = vrot.slane %v544, 4
    %v549 = vadd.f32 %v76, %v547
    %v550 = vxor.u32 %v549, 2147483648
    %v551 = vmul.f32 %v550, 1.442695
    %v552 = vpow.pop %v551
    %v553 = vadd.f32 %v552, 1.0
    %v554 = vrcp.pop %v553
    %v555 = vmul.f32 %v553, %v554
    %v556 = vsub.f32 1.0, %v555
    %v557 = vmul.f32 %v554, %v556
    %v558 = vadd.f32 %v554, %v557
    %vm559 = vweird.f32 %v553
    %vm560 = vweird.f32 %v554
    %vm561 = vmor %vm559, %vm560
    %v562 = vsel %vm561, %v554, %v558
    %v563 = vand.u32 2147483647, %v553
    %vm564 = vcmp.eq.f32.partialorder %v563, 8.507059e+37
    %v565 = vand.u32 %v553, 2147483648
    %v566 = vor.u32 1.1754944e-38, %v565
    %v567 = vsel %vm564, %v566, %v562
    %v568 = vmul.f32 1.0, %v567
    %569 = vrot.lane.b32.xlu0 %v547, 64
    %v570 = vpop.permute.xlu0 %569
    %v572 = vmul.f32 %v568, %v570
    %574 = vrot.lane.b32.xlu0 %v572, 64
    %v575 = vpop.permute.xlu0 %574
    %v577 = vadd.f32 %v76, %v575
    %v578 = vtanh.pop %v577
    %v579 = vsub.f32 1.0, %v568
    %581 = vrot.lane.b32.xlu0 %v578, 96
    %v582 = vpop.permute.xlu0 %581
    %v584 = vmul.f32 %v579, %v582
    %v585 = vrot.slane %v452, 4
    %v587 = vmul.f32 %v568, %v585
    %v588 = vadd.f32 %v584, %v587
    %v590 = vrot.slane %v520, 4
    %591 = vrot.lane.b32.xlu0 %v590, 96
    %v592 = vpop.permute.xlu0 %591
    %v593 = vsel %vm129, %v592, 0
    %595 = vmatpush.msra.mxu0 0.0
    %596 = vmatpush.msra.mxu0 0.0
    %597 = vmatpush.msra.mxu0 0.0
    %598 = vmatpush.msra.mxu0 0.0
    %599 = vmatpush.msra.mxu0 0.0
    %600 = vmatpush.msra.mxu0 0.0
    %601 = vmatpush.msra.mxu0 0.0
    %602 = vmatpush.msra.mxu0 0.0
    %603 = vmatpush.msra.mxu0 0.0
    %604 = vmatpush.msra.mxu0 0.0
    %605 = vmatpush.msra.mxu0 0.0
    %606 = vmatpush.msra.mxu0 0.0
    %607 = vmatpush.msra.mxu0 %v126
    %608 = vmatpush.msra.mxu0 %v125
    %609 = vmatpush.msra.mxu0 %v124
    %610 = vmatpush.msra.mxu0 %v123
    %611 = vmatmul.f32.gmra.mxu0 %v593
    %v612 = vpop.f32.mrf.mxu0
    %v613 = vadd.f32 %v128, %v612
    %614 = vdwg.mxu0
    %v615 = vadd.f32 %v114, %v613
    %v616 = vxor.u32 %v615, 2147483648
    %v617 = vmul.f32 %v616, 1.442695
    %v618 = vpow.pop %v617
    %v619 = vadd.f32 %v618, 1.0
    %v620 = vrcp.pop %v619
    %v621 = vmul.f32 %v619, %v620
    %v622 = vsub.f32 1.0, %v621
    %v623 = vmul.f32 %v620, %v622
    %v624 = vadd.f32 %v620, %v623
    %vm625 = vweird.f32 %v619
    %vm626 = vweird.f32 %v620
    %vm627 = vmor %vm625, %vm626
    %v628 = vsel %vm627, %v620, %v624
    %v629 = vand.u32 2147483647, %v619
    %vm630 = vcmp.eq.f32.partialorder %v629, 8.507059e+37
    %v631 = vand.u32 %v619, 2147483648
    %v632 = vor.u32 1.1754944e-38, %v631
    %v633 = vsel %vm630, %v632, %v628
    %v634 = vmul.f32 1.0, %v633
    %636 = vrot.lane.b32.xlu0 %v613, 64
    %v637 = vpop.permute.xlu0 %636
    %v639 = vmul.f32 %v634, %v637
    %641 = vrot.lane.b32.xlu0 %v639, 64
    %v642 = vpop.permute.xlu0 %641
    %v644 = vadd.f32 %v114, %v642
    %v645 = vtanh.pop %v644
    %v646 = vsub.f32 1.0, %v634
    %648 = vrot.lane.b32.xlu0 %v645, 96
    %v649 = vpop.permute.xlu0 %648
    %v651 = vmul.f32 %v646, %v649
    %v653 = vmul.f32 %v634, %v590
    %v654 = vadd.f32 %v651, %v653
    %v656 = vrot.slane %v588, 4
    %657 = vrot.lane.b32.xlu0 %v656, 96
    %v658 = vpop.permute.xlu0 %657
    %v659 = vsel %vm129, %v658, 0
    %661 = vmatpush.msra.mxu0 0.0
    %662 = vmatpush.msra.mxu0 0.0
    %663 = vmatpush.msra.mxu0 0.0
    %664 = vmatpush.msra.mxu0 0.0
    %665 = vmatpush.msra.mxu0 0.0
    %666 = vmatpush.msra.mxu0 0.0
    %667 = vmatpush.msra.mxu0 0.0
    %668 = vmatpush.msra.mxu0 0.0
    %669 = vmatpush.msra.mxu0 0.0
    %670 = vmatpush.msra.mxu0 0.0
    %671 = vmatpush.msra.mxu0 0.0
    %672 = vmatpush.msra.mxu0 0.0
    %673 = vmatpush.msra.mxu0 %v122
    %674 = vmatpush.msra.mxu0 %v121
    %675 = vmatpush.msra.mxu0 %v120
    %676 = vmatpush.msra.mxu0 %v119
    %677 = vmatmul.f32.gmra.mxu0 %v659
    %v678 = vpop.f32.mrf.mxu0
    %v679 = vadd.f32 %v127, %v678
    %680 = vdwg.mxu0
    %v681 = vadd.f32 %v79, %v679
    %v682 = vxor.u32 %v681, 2147483648
    %v683 = vmul.f32 %v682, 1.442695
    %v684 = vpow.pop %v683
    %v685 = vadd.f32 %v684, 1.0
    %v686 = vrcp.pop %v685
    %v687 = vmul.f32 %v685, %v686
    %v688 = vsub.f32 1.0, %v687
    %v689 = vmul.f32 %v686, %v688
    %v690 = vadd.f32 %v686, %v689
    %vm691 = vweird.f32 %v685
    %vm692 = vweird.f32 %v686
    %vm693 = vmor %vm691, %vm692
    %v694 = vsel %vm693, %v686, %v690
    %v695 = vand.u32 2147483647, %v685
    %vm696 = vcmp.eq.f32.partialorder %v695, 8.507059e+37
    %v697 = vand.u32 %v685, 2147483648
    %v698 = vor.u32 1.1754944e-38, %v697
    %v699 = vsel %vm696, %v698, %v694
    %v700 = vmul.f32 1.0, %v699
    %702 = vrot.lane.b32.xlu0 %v679, 64
    %v703 = vpop.permute.xlu0 %702
    %v705 = vmul.f32 %v700, %v703
    %707 = vrot.lane.b32.xlu0 %v705, 64
    %v708 = vpop.permute.xlu0 %707
    %v710 = vadd.f32 %v79, %v708
    %v711 = vtanh.pop %v710
    %v712 = vsub.f32 1.0, %v700
    %714 = vrot.lane.b32.xlu0 %v711, 96
    %v715 = vpop.permute.xlu0 %714
    %v717 = vmul.f32 %v712, %v715
    %v719 = vmul.f32 %v700, %v656
    %v720 = vadd.f32 %v717, %v719
    %722 = vrot.lane.b32.xlu0 %v654, 96
    %v723 = vpop.permute.xlu0 %722
    %v724 = vsel %vm129, %v723, 0
    %726 = vmatpush.msra.mxu0 0.0
    %727 = vmatpush.msra.mxu0 0.0
    %728 = vmatpush.msra.mxu0 0.0
    %729 = vmatpush.msra.mxu0 0.0
    %730 = vmatpush.msra.mxu0 0.0
    %731 = vmatpush.msra.mxu0 0.0
    %732 = vmatpush.msra.mxu0 0.0
    %733 = vmatpush.msra.mxu0 0.0
    %734 = vmatpush.msra.mxu0 0.0
    %735 = vmatpush.msra.mxu0 0.0
    %736 = vmatpush.msra.mxu0 0.0
    %737 = vmatpush.msra.mxu0 0.0
    %738 = vmatpush.msra.mxu0 %v126
    %739 = vmatpush.msra.mxu0 %v125
    %740 = vmatpush.msra.mxu0 %v124
    %741 = vmatpush.msra.mxu0 %v123
    %742 = vmatmul.f32.gmra.mxu0 %v724
    %v743 = vpop.f32.mrf.mxu0
    %v744 = vadd.f32 %v128, %v743
    %745 = vdwg.mxu0
    %v747 = vrot.slane %v744, 4
    %v749 = vadd.f32 %v111, %v747
    %v750 = vxor.u32 %v749, 2147483648
    %v751 = vmul.f32 %v750, 1.442695
    %v752 = vpow.pop %v751
    %v753 = vadd.f32 %v752, 1.0
    %v754 = vrcp.pop %v753
    %v755 = vmul.f32 %v753, %v754
    %v756 = vsub.f32 1.0, %v755
    %v757 = vmul.f32 %v754, %v756
    %v758 = vadd.f32 %v754, %v757
    %vm759 = vweird.f32 %v753
    %vm760 = vweird.f32 %v754
    %vm761 = vmor %vm759, %vm760
    %v762 = vsel %vm761, %v754, %v758
    %v763 = vand.u32 2147483647, %v753
    %vm764 = vcmp.eq.f32.partialorder %v763, 8.507059e+37
    %v765 = vand.u32 %v753, 2147483648
    %v766 = vor.u32 1.1754944e-38, %v765
    %v767 = vsel %vm764, %v766, %v762
    %v768 = vmul.f32 1.0, %v767
    %769 = vrot.lane.b32.xlu0 %v747, 64
    %v770 = vpop.permute.xlu0 %769
    %v772 = vmul.f32 %v768, %v770
    %774 = vrot.lane.b32.xlu0 %v772, 64
    %v775 = vpop.permute.xlu0 %774
    %v777 = vadd.f32 %v111, %v775
    %v778 = vtanh.pop %v777
    %v779 = vsub.f32 1.0, %v768
    %781 = vrot.lane.b32.xlu0 %v778, 96
    %v782 = vpop.permute.xlu0 %781
    %v784 = vmul.f32 %v779, %v782
    %v785 = vrot.slane %v654, 4
    %v787 = vmul.f32 %v768, %v785
    %v788 = vadd.f32 %v784, %v787
    %790 = vrot.lane.b32.xlu0 %v720, 96
    %v791 = vpop.permute.xlu0 %790
    %v792 = vsel %vm129, %v791, 0
    %794 = vmatpush.msra.mxu0 0.0
    %795 = vmatpush.msra.mxu0 0.0
    %796 = vmatpush.msra.mxu0 0.0
    %797 = vmatpush.msra.mxu0 0.0
    %798 = vmatpush.msra.mxu0 0.0
    %799 = vmatpush.msra.mxu0 0.0
    %800 = vmatpush.msra.mxu0 0.0
    %801 = vmatpush.msra.mxu0 0.0
    %802 = vmatpush.msra.mxu0 0.0
    %803 = vmatpush.msra.mxu0 0.0
    %804 = vmatpush.msra.mxu0 0.0
    %805 = vmatpush.msra.mxu0 0.0
    %806 = vmatpush.msra.mxu0 %v122
    %807 = vmatpush.msra.mxu0 %v121
    %808 = vmatpush.msra.mxu0 %v120
    %809 = vmatpush.msra.mxu0 %v119
    %810 = vmatmul.f32.gmra.mxu0 %v792
    %v811 = vpop.f32.mrf.mxu0
    %v812 = vadd.f32 %v127, %v811
    %813 = vdwg.mxu0
    %v815 = vrot.slane %v812, 4
    %v817 = vadd.f32 %v79, %v815
    %v818 = vxor.u32 %v817, 2147483648
    %v819 = vmul.f32 %v818, 1.442695
    %v820 = vpow.pop %v819
    %v821 = vadd.f32 %v820, 1.0
    %v822 = vrcp.pop %v821
    %v823 = vmul.f32 %v821, %v822
    %v824 = vsub.f32 1.0, %v823
    %v825 = vmul.f32 %v822, %v824
    %v826 = vadd.f32 %v822, %v825
    %vm827 = vweird.f32 %v821
    %vm828 = vweird.f32 %v822
    %vm829 = vmor %vm827, %vm828
    %v830 = vsel %vm829, %v822, %v826
    %v831 = vand.u32 2147483647, %v821
    %vm832 = vcmp.eq.f32.partialorder %v831, 8.507059e+37
    %v833 = vand.u32 %v821, 2147483648
    %v834 = vor.u32 1.1754944e-38, %v833
    %v835 = vsel %vm832, %v834, %v830
    %v836 = vmul.f32 1.0, %v835
    %837 = vrot.lane.b32.xlu0 %v815, 64
    %v838 = vpop.permute.xlu0 %837
    %v840 = vmul.f32 %v836, %v838
    %842 = vrot.lane.b32.xlu0 %v840, 64
    %v843 = vpop.permute.xlu0 %842
    %v845 = vadd.f32 %v79, %v843
    %v846 = vtanh.pop %v845
    %v847 = vsub.f32 1.0, %v836
    %849 = vrot.lane.b32.xlu0 %v846, 96
    %v850 = vpop.permute.xlu0 %849
    %v852 = vmul.f32 %v847, %v850
    %v853 = vrot.slane %v720, 4
    %v855 = vmul.f32 %v836, %v853
    %v856 = vadd.f32 %v852, %v855
    %v858 = vrot.slane %v788, 4
    %859 = vrot.lane.b32.xlu0 %v858, 96
    %v860 = vpop.permute.xlu0 %859
    %v861 = vsel %vm129, %v860, 0
    %863 = vmatpush.msra.mxu0 0.0
    %864 = vmatpush.msra.mxu0 0.0
    %865 = vmatpush.msra.mxu0 0.0
    %866 = vmatpush.msra.mxu0 0.0
    %867 = vmatpush.msra.mxu0 0.0
    %868 = vmatpush.msra.mxu0 0.0
    %869 = vmatpush.msra.mxu0 0.0
    %870 = vmatpush.msra.mxu0 0.0
    %871 = vmatpush.msra.mxu0 0.0
    %872 = vmatpush.msra.mxu0 0.0
    %873 = vmatpush.msra.mxu0 0.0
    %874 = vmatpush.msra.mxu0 0.0
    %875 = vmatpush.msra.mxu0 %v126
    %876 = vmatpush.msra.mxu0 %v125
    %877 = vmatpush.msra.mxu0 %v124
    %878 = vmatpush.msra.mxu0 %v123
    %879 = vmatmul.f32.gmra.mxu0 %v861
    %v880 = vpop.f32.mrf.mxu0
    %v881 = vadd.f32 %v128, %v880
    %882 = vdwg.mxu0
    %v883 = vadd.f32 %v111, %v881
    %v884 = vxor.u32 %v883, 2147483648
    %v885 = vmul.f32 %v884, 1.442695
    %v886 = vpow.pop %v885
    %v887 = vadd.f32 %v886, 1.0
    %v888 = vrcp.pop %v887
    %v889 = vmul.f32 %v887, %v888
    %v890 = vsub.f32 1.0, %v889
    %v891 = vmul.f32 %v888, %v890
    %v892 = vadd.f32 %v888, %v891
    %vm893 = vweird.f32 %v887
    %vm894 = vweird.f32 %v888
    %vm895 = vmor %vm893, %vm894
    %v896 = vsel %vm895, %v888, %v892
    %v897 = vand.u32 2147483647, %v887
    %vm898 = vcmp.eq.f32.partialorder %v897, 8.507059e+37
    %v899 = vand.u32 %v887, 2147483648
    %v900 = vor.u32 1.1754944e-38, %v899
    %v901 = vsel %vm898, %v900, %v896
    %v902 = vmul.f32 1.0, %v901
    %904 = vrot.lane.b32.xlu0 %v881, 64
    %v905 = vpop.permute.xlu0 %904
    %v907 = vmul.f32 %v902, %v905
    %909 = vrot.lane.b32.xlu0 %v907, 64
    %v910 = vpop.permute.xlu0 %909
    %v912 = vadd.f32 %v111, %v910
    %v913 = vtanh.pop %v912
    %v914 = vsub.f32 1.0, %v902
    %916 = vrot.lane.b32.xlu0 %v913, 96
    %v917 = vpop.permute.xlu0 %916
    %v919 = vmul.f32 %v914, %v917
    %v921 = vmul.f32 %v902, %v858
    %v922 = vadd.f32 %v919, %v921
    %v924 = vrot.slane %v856, 4
    %925 = vrot.lane.b32.xlu0 %v924, 96
    %v926 = vpop.permute.xlu0 %925
    %v927 = vsel %vm129, %v926, 0
    %929 = vmatpush.msra.mxu0 0.0
    %930 = vmatpush.msra.mxu0 0.0
    %931 = vmatpush.msra.mxu0 0.0
    %932 = vmatpush.msra.mxu0 0.0
    %933 = vmatpush.msra.mxu0 0.0
    %934 = vmatpush.msra.mxu0 0.0
    %935 = vmatpush.msra.mxu0 0.0
    %936 = vmatpush.msra.mxu0 0.0
    %937 = vmatpush.msra.mxu0 0.0
    %938 = vmatpush.msra.mxu0 0.0
    %939 = vmatpush.msra.mxu0 0.0
    %940 = vmatpush.msra.mxu0 0.0
    %941 = vmatpush.msra.mxu0 %v122
    %942 = vmatpush.msra.mxu0 %v121
    %943 = vmatpush.msra.mxu0 %v120
    %944 = vmatpush.msra.mxu0 %v119
    %945 = vmatmul.f32.gmra.mxu0 %v927
    %v946 = vpop.f32.mrf.mxu0
    %v947 = vadd.f32 %v127, %v946
    %948 = vdwg.mxu0
    %v949 = vadd.f32 %v82, %v947
    %v950 = vxor.u32 %v949, 2147483648
    %v951 = vmul.f32 %v950, 1.442695
    %v952 = vpow.pop %v951
    %v953 = vadd.f32 %v952, 1.0
    %v954 = vrcp.pop %v953
    %v955 = vmul.f32 %v953, %v954
    %v956 = vsub.f32 1.0, %v955
    %v957 = vmul.f32 %v954, %v956
    %v958 = vadd.f32 %v954, %v957
    %vm959 = vweird.f32 %v953
    %vm960 = vweird.f32 %v954
    %vm961 = vmor %vm959, %vm960
    %v962 = vsel %vm961, %v954, %v958
    %v963 = vand.u32 2147483647, %v953
    %vm964 = vcmp.eq.f32.partialorder %v963, 8.507059e+37
    %v965 = vand.u32 %v953, 2147483648
    %v966 = vor.u32 1.1754944e-38, %v965
    %v967 = vsel %vm964, %v966, %v962
    %v968 = vmul.f32 1.0, %v967
    %970 = vrot.lane.b32.xlu0 %v947, 64
    %v971 = vpop.permute.xlu0 %970
    %v973 = vmul.f32 %v968, %v971
    %975 = vrot.lane.b32.xlu0 %v973, 64
    %v976 = vpop.permute.xlu0 %975
    %v978 = vadd.f32 %v82, %v976
    %v979 = vtanh.pop %v978
    %v980 = vsub.f32 1.0, %v968
    %982 = vrot.lane.b32.xlu0 %v979, 96
    %v983 = vpop.permute.xlu0 %982
    %v985 = vmul.f32 %v980, %v983
    %v987 = vmul.f32 %v968, %v924
    %v988 = vadd.f32 %v985, %v987
    %990 = vrot.lane.b32.xlu0 %v922, 96
    %v991 = vpop.permute.xlu0 %990
    %v992 = vsel %vm129, %v991, 0
    %994 = vmatpush.msra.mxu0 0.0
    %995 = vmatpush.msra.mxu0 0.0
    %996 = vmatpush.msra.mxu0 0.0
    %997 = vmatpush.msra.mxu0 0.0
    %998 = vmatpush.msra.mxu0 0.0
    %999 = vmatpush.msra.mxu0 0.0
    %1000 = vmatpush.msra.mxu0 0.0
    %1001 = vmatpush.msra.mxu0 0.0
    %1002 = vmatpush.msra.mxu0 0.0
    %1003 = vmatpush.msra.mxu0 0.0
    %1004 = vmatpush.msra.mxu0 0.0
    %1005 = vmatpush.msra.mxu0 0.0
    %1006 = vmatpush.msra.mxu0 %v126
    %1007 = vmatpush.msra.mxu0 %v125
    %1008 = vmatpush.msra.mxu0 %v124
    %1009 = vmatpush.msra.mxu0 %v123
    %1010 = vmatmul.f32.gmra.mxu0 %v992
    %v1011 = vpop.f32.mrf.mxu0
    %v1012 = vadd.f32 %v128, %v1011
    %1013 = vdwg.mxu0
    %v1015 = vrot.slane %v1012, 4
    %v1017 = vadd.f32 %v108, %v1015
    %v1018 = vxor.u32 %v1017, 2147483648
    %v1019 = vmul.f32 %v1018, 1.442695
    %v1020 = vpow.pop %v1019
    %v1021 = vadd.f32 %v1020, 1.0
    %v1022 = vrcp.pop %v1021
    %v1023 = vmul.f32 %v1021, %v1022
    %v1024 = vsub.f32 1.0, %v1023
    %v1025 = vmul.f32 %v1022, %v1024
    %v1026 = vadd.f32 %v1022, %v1025
    %vm1027 = vweird.f32 %v1021
    %vm1028 = vweird.f32 %v1022
    %vm1029 = vmor %vm1027, %vm1028
    %v1030 = vsel %vm1029, %v1022, %v1026
    %v1031 = vand.u32 2147483647, %v1021
    %vm1032 = vcmp.eq.f32.partialorder %v1031, 8.507059e+37
    %v1033 = vand.u32 %v1021, 2147483648
    %v1034 = vor.u32 1.1754944e-38, %v1033
    %v1035 = vsel %vm1032, %v1034, %v1030
    %v1036 = vmul.f32 1.0, %v1035
    %1037 = vrot.lane.b32.xlu0 %v1015, 64
    %v1038 = vpop.permute.xlu0 %1037
    %v1040 = vmul.f32 %v1036, %v1038
    %1042 = vrot.lane.b32.xlu0 %v1040, 64
    %v1043 = vpop.permute.xlu0 %1042
    %v1045 = vadd.f32 %v108, %v1043
    %v1046 = vtanh.pop %v1045
    %v1047 = vsub.f32 1.0, %v1036
    %1049 = vrot.lane.b32.xlu0 %v1046, 96
    %v1050 = vpop.permute.xlu0 %1049
    %v1052 = vmul.f32 %v1047, %v1050
    %v1053 = vrot.slane %v922, 4
    %v1055 = vmul.f32 %v1036, %v1053
    %v1056 = vadd.f32 %v1052, %v1055
    %1058 = vrot.lane.b32.xlu0 %v988, 96
    %v1059 = vpop.permute.xlu0 %1058
    %v1060 = vsel %vm129, %v1059, 0
    %1062 = vmatpush.msra.mxu0 0.0
    %1063 = vmatpush.msra.mxu0 0.0
    %1064 = vmatpush.msra.mxu0 0.0
    %1065 = vmatpush.msra.mxu0 0.0
    %1066 = vmatpush.msra.mxu0 0.0
    %1067 = vmatpush.msra.mxu0 0.0
    %1068 = vmatpush.msra.mxu0 0.0
    %1069 = vmatpush.msra.mxu0 0.0
    %1070 = vmatpush.msra.mxu0 0.0
    %1071 = vmatpush.msra.mxu0 0.0
    %1072 = vmatpush.msra.mxu0 0.0
    %1073 = vmatpush.msra.mxu0 0.0
    %1074 = vmatpush.msra.mxu0 %v122
    %1075 = vmatpush.msra.mxu0 %v121
    %1076 = vmatpush.msra.mxu0 %v120
    %1077 = vmatpush.msra.mxu0 %v119
    %1078 = vmatmul.f32.gmra.mxu0 %v1060
    %v1079 = vpop.f32.mrf.mxu0
    %v1080 = vadd.f32 %v127, %v1079
    %1081 = vdwg.mxu0
    %v1083 = vrot.slane %v1080, 4
    %v1085 = vadd.f32 %v82, %v1083
    %v1086 = vxor.u32 %v1085, 2147483648
    %v1087 = vmul.f32 %v1086, 1.442695
    %v1088 = vpow.pop %v1087
    %v1089 = vadd.f32 %v1088, 1.0
    %v1090 = vrcp.pop %v1089
    %v1091 = vmul.f32 %v1089, %v1090
    %v1092 = vsub.f32 1.0, %v1091
    %v1093 = vmul.f32 %v1090, %v1092
    %v1094 = vadd.f32 %v1090, %v1093
    %vm1095 = vweird.f32 %v1089
    %vm1096 = vweird.f32 %v1090
    %vm1097 = vmor %vm1095, %vm1096
    %v1098 = vsel %vm1097, %v1090, %v1094
    %v1099 = vand.u32 2147483647, %v1089
    %vm1100 = vcmp.eq.f32.partialorder %v1099, 8.507059e+37
    %v1101 = vand.u32 %v1089, 2147483648
    %v1102 = vor.u32 1.1754944e-38, %v1101
    %v1103 = vsel %vm1100, %v1102, %v1098
    %v1104 = vmul.f32 1.0, %v1103
    %1105 = vrot.lane.b32.xlu0 %v1083, 64
    %v1106 = vpop.permute.xlu0 %1105
    %v1108 = vmul.f32 %v1104, %v1106
    %1110 = vrot.lane.b32.xlu0 %v1108, 64
    %v1111 = vpop.permute.xlu0 %1110
    %v1113 = vadd.f32 %v82, %v1111
    %v1114 = vtanh.pop %v1113
    %v1115 = vsub.f32 1.0, %v1104
    %1117 = vrot.lane.b32.xlu0 %v1114, 96
    %v1118 = vpop.permute.xlu0 %1117
    %v1120 = vmul.f32 %v1115, %v1118
    %v1121 = vrot.slane %v988, 4
    %v1123 = vmul.f32 %v1104, %v1121
    %v1124 = vadd.f32 %v1120, %v1123
    %v1126 = vrot.slane %v1056, 4
    %1127 = vrot.lane.b32.xlu0 %v1126, 96
    %v1128 = vpop.permute.xlu0 %1127
    %v1129 = vsel %vm129, %v1128, 0
    %1131 = vmatpush.msra.mxu0 0.0
    %1132 = vmatpush.msra.mxu0 0.0
    %1133 = vmatpush.msra.mxu0 0.0
    %1134 = vmatpush.msra.mxu0 0.0
    %1135 = vmatpush.msra.mxu0 0.0
    %1136 = vmatpush.msra.mxu0 0.0
    %1137 = vmatpush.msra.mxu0 0.0
    %1138 = vmatpush.msra.mxu0 0.0
    %1139 = vmatpush.msra.mxu0 0.0
    %1140 = vmatpush.msra.mxu0 0.0
    %1141 = vmatpush.msra.mxu0 0.0
    %1142 = vmatpush.msra.mxu0 0.0
    %1143 = vmatpush.msra.mxu0 %v126
    %1144 = vmatpush.msra.mxu0 %v125
    %1145 = vmatpush.msra.mxu0 %v124
    %1146 = vmatpush.msra.mxu0 %v123
    %1147 = vmatmul.f32.gmra.mxu0 %v1129
    %v1148 = vpop.f32.mrf.mxu0
    %v1149 = vadd.f32 %v128, %v1148
    %1150 = vdwg.mxu0
    %v1151 = vadd.f32 %v108, %v1149
    %v1152 = vxor.u32 %v1151, 2147483648
    %v1153 = vmul.f32 %v1152, 1.442695
    %v1154 = vpow.pop %v1153
    %v1155 = vadd.f32 %v1154, 1.0
    %v1156 = vrcp.pop %v1155
    %v1157 = vmul.f32 %v1155, %v1156
    %v1158 = vsub.f32 1.0, %v1157
    %v1159 = vmul.f32 %v1156, %v1158
    %v1160 = vadd.f32 %v1156, %v1159
    %vm1161 = vweird.f32 %v1155
    %vm1162 = vweird.f32 %v1156
    %vm1163 = vmor %vm1161, %vm1162
    %v1164 = vsel %vm1163, %v1156, %v1160
    %v1165 = vand.u32 2147483647, %v1155
    %vm1166 = vcmp.eq.f32.partialorder %v1165, 8.507059e+37
    %v1167 = vand.u32 %v1155, 2147483648
    %v1168 = vor.u32 1.1754944e-38, %v1167
    %v1169 = vsel %vm1166, %v1168, %v1164
    %v1170 = vmul.f32 1.0, %v1169
    %1172 = vrot.lane.b32.xlu0 %v1149, 64
    %v1173 = vpop.permute.xlu0 %1172
    %v1175 = vmul.f32 %v1170, %v1173
    %1177 = vrot.lane.b32.xlu0 %v1175, 64
    %v1178 = vpop.permute.xlu0 %1177
    %v1180 = vadd.f32 %v108, %v1178
    %v1181 = vtanh.pop %v1180
    %v1182 = vsub.f32 1.0, %v1170
    %1184 = vrot.lane.b32.xlu0 %v1181, 96
    %v1185 = vpop.permute.xlu0 %1184
    %v1187 = vmul.f32 %v1182, %v1185
    %v1189 = vmul.f32 %v1170, %v1126
    %v1190 = vadd.f32 %v1187, %v1189
    %v1191 = vld [vmem:[#allocation4 + $0x80] sm:$0xff]
    %v1192 = vld [vmem:[#allocation4 + $0x88] sm:$0xff]
    %v1193 = vld [vmem:[#allocation4 + $0x90] sm:$0xff]
    %v1194 = vld [vmem:[#allocation4 + $0x98] sm:$0xff]
    %v1195 = vld [vmem:[#allocation4 + $0xa0] sm:$0xff]
    %v1196 = vld [vmem:[#allocation4 + $0xa8] sm:$0xff]
    %v1197 = vld [vmem:[#allocation4 + $0xb0] sm:$0xff]
    %v1198 = vld [vmem:[#allocation4 + $0xb8] sm:$0xff]
    %1200 = vrot.lane.b32.xlu0 %v1190, 96
    %v1201 = vpop.permute.xlu0 %1200
    %v1202 = vsel %vm129, %v1201, 0
    %1204 = vmatpush.msra.mxu0 0.0
    %1205 = vmatpush.msra.mxu0 0.0
    %1206 = vmatpush.msra.mxu0 0.0
    %1207 = vmatpush.msra.mxu0 0.0
    %1208 = vmatpush.msra.mxu0 0.0
    %1209 = vmatpush.msra.mxu0 0.0
    %1210 = vmatpush.msra.mxu0 0.0
    %1211 = vmatpush.msra.mxu0 0.0
    %1212 = vmatpush.msra.mxu0 0.0
    %1213 = vmatpush.msra.mxu0 0.0
    %1214 = vmatpush.msra.mxu0 0.0
    %1215 = vmatpush.msra.mxu0 0.0
    %1216 = vmatpush.msra.mxu0 %v1198
    %1217 = vmatpush.msra.mxu0 %v1197
    %1218 = vmatpush.msra.mxu0 %v1196
    %1219 = vmatpush.msra.mxu0 %v1195
    %1220 = vmatmul.f32.gmra.mxu0 %v1202
    %v1221 = vpop.f32.mrf.mxu0
    %v1222 = vadd.f32 0.0, %v1221
    %1223 = vdwg.mxu0
    %v1225 = vrot.slane %v1124, 4
    %1226 = vrot.lane.b32.xlu0 %v1225, 96
    %v1227 = vpop.permute.xlu0 %1226
    %v1228 = vsel %vm129, %v1227, 0
    %1230 = vmatpush.msra.mxu0 0.0
    %1231 = vmatpush.msra.mxu0 0.0
    %1232 = vmatpush.msra.mxu0 0.0
    %1233 = vmatpush.msra.mxu0 0.0
    %1234 = vmatpush.msra.mxu0 0.0
    %1235 = vmatpush.msra.mxu0 0.0
    %1236 = vmatpush.msra.mxu0 0.0
    %1237 = vmatpush.msra.mxu0 0.0
    %1238 = vmatpush.msra.mxu0 0.0
    %1239 = vmatpush.msra.mxu0 0.0
    %1240 = vmatpush.msra.mxu0 0.0
    %1241 = vmatpush.msra.mxu0 0.0
    %1242 = vmatpush.msra.mxu0 %v1194
    %1243 = vmatpush.msra.mxu0 %v1193
    %1244 = vmatpush.msra.mxu0 %v1192
    %1245 = vmatpush.msra.mxu0 %v1191
    %1246 = vmatmul.f32.gmra.mxu0 %v1228
    %v1247 = vpop.f32.mrf.mxu0
    %v1248 = vadd.f32 %v1222, %v1247
    %1249 = vdwg.mxu0
    %v1250 = vld [vmem:[#allocation4 + $0xc0] sm:$0xf]
    %v1251 = vadd.f32 %v1248, %v1250
    %v1252 = vtanh.pop %v1251
    %vm1253 = vcmask 1043456
    %v1254 = vsel %vm1253, %v191, %v320
    %v1255 = vsel %vm1253, %v452, %v588
    %v1256 = vsel %vm1253, %v720, %v856
    %v1257 = vsel %vm1253, %v988, %v1124
    %v1258 = vsel %vm1253, %v1190, %v1056
    %v1259 = vsel %vm1253, %v922, %v788
    %v1260 = vsel %vm1253, %v654, %v520
    %v1261 = vsel %vm1253, %v386, %v252
    %1266 = vrot.lane.b32.xlu0 %v1254, 96
    %v1267 = vpop.permute.xlu0 %1266
    %1268 = vrot.lane.b32.xlu0 %v1255, 96
    %v1269 = vpop.permute.xlu0 %1268
    %1270 = vrot.lane.b32.xlu0 %v1256, 96
    %v1271 = vpop.permute.xlu0 %1270
    %1272 = vrot.lane.b32.xlu0 %v1257, 96
    %v1273 = vpop.permute.xlu0 %1272
    %v1278 = vsel %vm129, %v1267, %v1258
    %v1279 = vsel %vm129, %v1269, %v1259
    %v1280 = vsel %vm129, %v1271, %v1260
    %v1281 = vsel %vm129, %v1273, %v1261
    %vm1282 = vcmask 523264
    %v1283 = vsel %vm1282, %v1278, 1.0
    %v1284 = vsel %vm1282, %v1279, 1.0
    %v1285 = vsel %vm1282, %v1280, 1.0
    %v1286 = vsel %vm1282, %v1281, 1.0
    %v1287 = vld [vmem:[#allocation4 + $0xc8] sm:$0xff]
    %v1288 = vld [vmem:[#allocation4 + $0xd0] sm:$0xff]
    %v1289 = vld [vmem:[#allocation4 + $0xd8] sm:$0xff]
    %v1290 = vld [vmem:[#allocation4 + $0xe0] sm:$0xff]
    %v1291 = vld [vmem:[#allocation4 + $0xe8] sm:$0xff]
    %v1292 = vld [vmem:[#allocation4 + $0xf0] sm:$0xff]
    %v1293 = vld [vmem:[#allocation4 + $0xf8] sm:$0xff]
    %v1294 = vld [vmem:[#allocation4 + $0x100] sm:$0xff]
    %v1295 = vld [vmem:[#allocation4 + $0x108] sm:$0x1]
    %vm1296 = vcmask 531456
    %v1298 = vsel %vm1296, %v1283, 0
    %v1301 = vsel %vm1296, %v1284, 0
    %v1304 = vsel %vm1296, %v1285, 0
    %v1307 = vsel %vm1296, %v1286, 0
    %v1310 = vsel %vm51, %v1295, 0
    %1312 = vmatpush.msra.mxu0 0.0
    %1313 = vmatpush.msra.mxu0 0.0
    %1314 = vmatpush.msra.mxu0 0.0
    %1315 = vmatpush.msra.mxu0 0.0
    %1316 = vmatpush.msra.mxu0 0.0
    %1317 = vmatpush.msra.mxu0 0.0
    %1318 = vmatpush.msra.mxu0 0.0
    %1319 = vmatpush.msra.mxu0 %v1310
    %1320 = vmatpush.msra.mxu0 %v1294
    %1321 = vmatpush.msra.mxu0 %v1293
    %1322 = vmatpush.msra.mxu0 %v1292
    %1323 = vmatpush.msra.mxu0 %v1291
    %1324 = vmatpush.msra.mxu0 %v1290
    %1325 = vmatpush.msra.mxu0 %v1289
    %1326 = vmatpush.msra.mxu0 %v1288
    %1327 = vmatpush.msra.mxu0 %v1287
    %1328 = vmatmul.f32.gmra.mxu0 %v1298
    %v1329 = vpop.f32.mrf.mxu0
    %v1330 = vadd.f32 0.0, %v1329
    %1331 = vmatmul.f32.gmra.mxu0 %v1301
    %v1332 = vpop.f32.mrf.mxu0
    %v1333 = vadd.f32 0.0, %v1332
    %1334 = vmatmul.f32.gmra.mxu0 %v1304
    %v1335 = vpop.f32.mrf.mxu0
    %v1336 = vadd.f32 0.0, %v1335
    %1337 = vmatmul.f32.gmra.mxu0 %v1307
    %v1338 = vpop.f32.mrf.mxu0
    %v1339 = vadd.f32 0.0, %v1338
    %1340 = vdwg.mxu0
    %v1341 = vld [vmem:[#allocation4 + $0x110] sm:$0xff]
    %v1342 = vld [vmem:[#allocation4 + $0x118] sm:$0xff]
    %v1343 = vld [vmem:[#allocation4 + $0x120] sm:$0xff]
    %v1344 = vld [vmem:[#allocation4 + $0x128] sm:$0xff]
    %v1345 = vld [vmem:[#allocation4 + $0x130] sm:$0xff]
    %v1346 = vld [vmem:[#allocation4 + $0x138] sm:$0xff]
    %v1347 = vld [vmem:[#allocation4 + $0x140] sm:$0xff]
    %v1348 = vld [vmem:[#allocation4 + $0x148] sm:$0xff]
    %v1349 = vld [vmem:[#allocation4 + $0x168] sm:$0xff]
    %v1350 = vld [vmem:[#allocation4 + $0x170] sm:$0xff]
    %v1351 = vld [vmem:[#allocation4 + $0x178] sm:$0xff]
    %v1352 = vld [vmem:[#allocation4 + $0x180] sm:$0xff]
    %v1353 = vld [vmem:[#allocation4 + $0x188] sm:$0xff]
    %v1354 = vld [vmem:[#allocation4 + $0x190] sm:$0xff]
    %v1355 = vld [vmem:[#allocation4 + $0x198] sm:$0xff]
    %v1356 = vld [vmem:[#allocation4 + $0x1a0] sm:$0xff]
    %v1357 = vld [vmem:[#allocation4 + $0x1a8] sm:$0xf]
    %v1358 = vld [vmem:[%s1] sm:$0xff]
    %v1359 = vld [vmem:[%s1 + $0x8] sm:$0xff]
    %v1360 = vld [vmem:[%s1 + $0x10] sm:$0xff]
    %v1361 = vld [vmem:[%s1 + $0x18] sm:$0xf]
    %v1362 = vld [vmem:[#allocation4 + $0x150] sm:$0xff]
    %v1363 = vld [vmem:[#allocation4 + $0x158] sm:$0xff]
    %v1364 = vld [vmem:[#allocation4 + $0x160] sm:$0x1]
    %v1366 = vsel %vm38, %v1358, 0
    %v1369 = vsel %vm38, %v1359, 0
    %v1372 = vsel %vm38, %v1360, 0
    %v1375 = vsel %vm38, %v1361, 0
    %v1378 = vsel %vm51, %v1364, 0
    %1380 = vmatpush.msra.mxu0 0.0
    %1381 = vmatpush.msra.mxu0 0.0
    %1382 = vmatpush.msra.mxu0 0.0
    %1383 = vmatpush.msra.mxu0 0.0
    %1384 = vmatpush.msra.mxu0 0.0
    %1385 = vmatpush.msra.mxu0 0.0
    %1386 = vmatpush.msra.mxu0 0.0
    %1387 = vmatpush.msra.mxu0 0.0
    %1388 = vmatpush.msra.mxu0 0.0
    %1389 = vmatpush.msra.mxu0 0.0
    %1390 = vmatpush.msra.mxu0 0.0
    %1391 = vmatpush.msra.mxu0 0.0
    %1392 = vmatpush.msra.mxu0 0.0
    %1393 = vmatpush.msra.mxu0 %v1378
    %1394 = vmatpush.msra.mxu0 %v1363
    %1395 = vmatpush.msra.mxu0 %v1362
    %1396 = vmatmul.f32.gmra.mxu0 %v1366
    %v1397 = vpop.f32.mrf.mxu0
    %v1398 = vadd.f32 0.0, %v1397
    %1399 = vmatmul.f32.gmra.mxu0 %v1369
    %v1400 = vpop.f32.mrf.mxu0
    %v1401 = vadd.f32 0.0, %v1400
    %1402 = vmatmul.f32.gmra.mxu0 %v1372
    %v1403 = vpop.f32.mrf.mxu0
    %v1404 = vadd.f32 0.0, %v1403
    %1405 = vmatmul.f32.gmra.mxu0 %v1375
    %v1406 = vpop.f32.mrf.mxu0
    %v1407 = vadd.f32 0.0, %v1406
    %1408 = vdwg.mxu0
    %v1409 = vld [vmem:[#allocation4 + $0x210] sm:$0xff]
    %v1410 = vld [vmem:[#allocation4 + $0x218] sm:$0xff]
    %v1411 = vld [vmem:[#allocation4 + $0x220] sm:$0x1]
    %v1413 = vsel %vm51, %v1411, 0
    %1415 = vmatpush.msra.mxu0 0.0
    %1416 = vmatpush.msra.mxu0 0.0
    %1417 = vmatpush.msra.mxu0 0.0
    %1418 = vmatpush.msra.mxu0 0.0
    %1419 = vmatpush.msra.mxu0 0.0
    %1420 = vmatpush.msra.mxu0 0.0
    %1421 = vmatpush.msra.mxu0 0.0
    %1422 = vmatpush.msra.mxu0 0.0
    %1423 = vmatpush.msra.mxu0 0.0
    %1424 = vmatpush.msra.mxu0 0.0
    %1425 = vmatpush.msra.mxu0 0.0
    %1426 = vmatpush.msra.mxu0 0.0
    %1427 = vmatpush.msra.mxu0 0.0
    %1428 = vmatpush.msra.mxu0 %v1413
    %1429 = vmatpush.msra.mxu0 %v1410
    %1430 = vmatpush.msra.mxu0 %v1409
    %1431 = vmatmul.f32.gmra.mxu0 %v1366
    %v1432 = vpop.f32.mrf.mxu0
    %v1433 = vadd.f32 0.0, %v1432
    %1434 = vmatmul.f32.gmra.mxu0 %v1369
    %v1435 = vpop.f32.mrf.mxu0
    %v1436 = vadd.f32 0.0, %v1435
    %1437 = vmatmul.f32.gmra.mxu0 %v1372
    %v1438 = vpop.f32.mrf.mxu0
    %v1439 = vadd.f32 0.0, %v1438
    %1440 = vmatmul.f32.gmra.mxu0 %v1375
    %v1441 = vpop.f32.mrf.mxu0
    %v1442 = vadd.f32 0.0, %v1441
    %1443 = vdwg.mxu0
    %v1444 = vlaneseq
    %v1445 = vshrl.u32 %v1444, 7
    %v1446 = vlaneseq
    %v1447 = vand.u32 %v1446, 127
    %vm1448 = vcmp.lt.s32.totalorder %v1447, 0
    %v1449 = vsub.s32 0, %v1447
    %v1450 = vsel %vm1448, %v1449, %v1447
    %v1451 = vshrl.u32 %v1450, 2
    %v1452 = vand.u32 %v1450, 3
    %v1453 = vsub.s32 0, %v1452
    %v1454 = vsel %vm1448, %v1453, %v1452
    %vm1455 = vcmp.ne.s32.totalorder %v1454, 0
    %vm1456 = vcmp.lt.s32.totalorder %v1454, 0
    %vm1457 = vmand %vm1456, %vm1455
    %v1458 = vadd.s32 %v1454, 4
    %v1459 = vsel %vm1457, %v1458, %v1454
    %vm1460 = vcmp.eq.s32.totalorder %v1445, %v1459
    %v1461 = vsel %vm1460, 1, 0
    %v1462 = vcvt.s32.f32 %v1461
    %v1464 = vsel %vm129, %v1252, 0
    %1466 = vmatpush.msra.mxu0 0.0
    %1467 = vmatpush.msra.mxu0 0.0
    %1468 = vmatpush.msra.mxu0 0.0
    %1469 = vmatpush.msra.mxu0 0.0
    %1470 = vmatpush.msra.mxu0 0.0
    %1471 = vmatpush.msra.mxu0 0.0
    %1472 = vmatpush.msra.mxu0 0.0
    %1473 = vmatpush.msra.mxu0 0.0
    %1474 = vmatpush.msra.mxu0 0.0
    %1475 = vmatpush.msra.mxu0 0.0
    %1476 = vmatpush.msra.mxu0 0.0
    %1477 = vmatpush.msra.mxu0 0.0
    %1478 = vmatpush.msra.mxu0 %v1344
    %1479 = vmatpush.msra.mxu0 %v1343
    %1480 = vmatpush.msra.mxu0 %v1342
    %1481 = vmatpush.msra.mxu0 %v1341
    %1482 = vmatmul.f32.gmra.mxu0 %v1464
    %v1483 = vpop.f32.mrf.mxu0
    %v1484 = vadd.f32 0.0, %v1483
    %1485 = vdwg.mxu0
    %1487 = vrot.lane.b32.xlu0 %v1357, 32
    %v1488 = vpop.permute.xlu0 %1487
    %v1490 = vadd.f32 %v1484, %v1488
    %v1492 = vrot.slane %v1484, 4
    %v1494 = vsel %vm1253, %v1484, %v1492
    %v1495 = vadd.f32 %v1330, %v1494
    %v1496 = vadd.f32 %v1333, %v1494
    %v1497 = vadd.f32 %v1336, %v1494
    %v1498 = vadd.f32 %v1339, %v1494
    %v1499 = vtanh.pop %v1495
    %v1500 = vtanh.pop %v1496
    %v1501 = vtanh.pop %v1497
    %v1502 = vtanh.pop %v1498
    %v1504 = vsel %vm129, %v1499, 0
    %v1507 = vsel %vm129, %v1500, 0
    %v1510 = vsel %vm129, %v1501, 0
    %v1513 = vsel %vm129, %v1502, 0
    %1515 = vmatpush.msra.mxu0 0.0
    %1516 = vmatpush.msra.mxu0 0.0
    %1517 = vmatpush.msra.mxu0 0.0
    %1518 = vmatpush.msra.mxu0 0.0
    %1519 = vmatpush.msra.mxu0 0.0
    %1520 = vmatpush.msra.mxu0 0.0
    %1521 = vmatpush.msra.mxu0 0.0
    %1522 = vmatpush.msra.mxu0 0.0
    %1523 = vmatpush.msra.mxu0 0.0
    %1524 = vmatpush.msra.mxu0 0.0
    %1525 = vmatpush.msra.mxu0 0.0
    %1526 = vmatpush.msra.mxu0 0.0
    %1527 = vmatpush.msra.mxu0 %v1348
    %1528 = vmatpush.msra.mxu0 %v1347
    %1529 = vmatpush.msra.mxu0 %v1346
    %1530 = vmatpush.msra.mxu0 %v1345
    %1531 = vmatmul.f32.gmra.mxu0 %v1504
    %v1532 = vpop.f32.mrf.mxu0
    %v1533 = vadd.f32 0.0, %v1532
    %1534 = vmatmul.f32.gmra.mxu0 %v1507
    %v1535 = vpop.f32.mrf.mxu0
    %v1536 = vadd.f32 0.0, %v1535
    %1537 = vmatmul.f32.gmra.mxu0 %v1510
    %v1538 = vpop.f32.mrf.mxu0
    %v1539 = vadd.f32 0.0, %v1538
    %1540 = vmatmul.f32.gmra.mxu0 %v1513
    %v1541 = vpop.f32.mrf.mxu0
    %v1542 = vadd.f32 0.0, %v1541
    %1543 = vdwg.mxu0
    %v1544 = vmul.f32 %v1533, 1.442695
    %v1545 = vpow.pop %v1544
    %v1546 = vmul.f32 %v1536, 1.442695
    %v1547 = vpow.pop %v1546
    %v1548 = vmul.f32 %v1539, 1.442695
    %v1549 = vpow.pop %v1548
    %v1550 = vmul.f32 %v1542, 1.442695
    %v1551 = vpow.pop %v1550
    %1553 = vset.pattern.permute.xlu0 0
    %1554 = vperm.xlu0 %1553, %v1545
    %v1555 = vpop.permute.xlu0 %1554
    %1558 = vset.pattern.permute.xlu0 0
    %1559 = vperm.xlu0 %1558, %v1547
    %v1560 = vpop.permute.xlu0 %1559
    %1563 = vset.pattern.permute.xlu0 0
    %1564 = vperm.xlu0 %1563, %v1549
    %v1565 = vpop.permute.xlu0 %1564
    %1568 = vset.pattern.permute.xlu0 0
    %1569 = vperm.xlu0 %1568, %v1551
    %v1570 = vpop.permute.xlu0 %1569
    %v1572 = vmul.f32 %v1555, %v1283
    %v1573 = vmul.f32 %v1560, %v1284
    %v1574 = vmul.f32 %v1565, %v1285
    %v1575 = vmul.f32 %v1570, %v1286
    %v1577 = vsel %vm129, %v1462, 0
    %1579 = vmatpush.msra.mxu0 0.0
    %1580 = vmatpush.msra.mxu0 0.0
    %1581 = vmatpush.msra.mxu0 0.0
    %1582 = vmatpush.msra.mxu0 0.0
    %1583 = vmatpush.msra.mxu0 0.0
    %1584 = vmatpush.msra.mxu0 0.0
    %1585 = vmatpush.msra.mxu0 0.0
    %1586 = vmatpush.msra.mxu0 0.0
    %1587 = vmatpush.msra.mxu0 0.0
    %1588 = vmatpush.msra.mxu0 0.0
    %1589 = vmatpush.msra.mxu0 0.0
    %1590 = vmatpush.msra.mxu0 0.0
    %1591 = vmatpush.msra.mxu0 %v1575
    %1592 = vmatpush.msra.mxu0 %v1574
    %1593 = vmatpush.msra.mxu0 %v1573
    %1594 = vmatpush.msra.mxu0 %v1572
    %1595 = vmatmul.f32.gmra.mxu0 %v1577
    %v1596 = vpop.f32.mrf.mxu0
    %v1597 = vadd.f32 0.0, %v1596
    %1598 = vdwg.mxu0
    %v1599 = vrcp.pop %v1597
    %1601 = vset.pattern.permute.xlu0 64
    %1602 = vperm.xlu0 %1601, %v1599
    %v1603 = vpop.permute.xlu0 %1602
    %v1605 = vmul.f32 %v1597, %v1603
    %v1607 = vsel %vm1282, %v1605, 0
    %1609 = vmatpush.msra.mxu0 0.0
    %1610 = vmatpush.msra.mxu0 0.0
    %1611 = vmatpush.msra.mxu0 0.0
    %1612 = vmatpush.msra.mxu0 0.0
    %1613 = vmatpush.msra.mxu0 0.0
    %1614 = vmatpush.msra.mxu0 0.0
    %1615 = vmatpush.msra.mxu0 0.0
    %1616 = vmatpush.msra.mxu0 0.0
    %1617 = vmatpush.msra.mxu0 %v1356
    %1618 = vmatpush.msra.mxu0 %v1355
    %1619 = vmatpush.msra.mxu0 %v1354
    %1620 = vmatpush.msra.mxu0 %v1353
    %1621 = vmatpush.msra.mxu0 %v1352
    %1622 = vmatpush.msra.mxu0 %v1351
    %1623 = vmatpush.msra.mxu0 %v1350
    %1624 = vmatpush.msra.mxu0 %v1349
    %1625 = vmatmul.f32.gmra.mxu0 %v1607
    %v1626 = vpop.f32.mrf.mxu0
    %v1627 = vadd.f32 0.0, %v1626
    %1628 = vdwg.mxu0
    %v1629 = vadd.f32 %v1398, %v1627
    %1631 = vrot.lane.b32.xlu0 %v1490, 96
    %v1632 = vpop.permute.xlu0 %1631
    %v1634 = vadd.f32 %v1629, %v1632
    %v1635 = vxor.u32 %v1634, 2147483648
    %v1636 = vmul.f32 %v1635, 1.442695
    %v1637 = vpow.pop %v1636
    %v1638 = vadd.f32 %v1637, 1.0
    %v1639 = vrcp.pop %v1638
    %v1640 = vmul.f32 %v1638, %v1639
    %v1641 = vsub.f32 1.0, %v1640
    %v1642 = vmul.f32 %v1639, %v1641
    %v1643 = vadd.f32 %v1639, %v1642
    %vm1644 = vweird.f32 %v1638
    %vm1645 = vweird.f32 %v1639
    %vm1646 = vmor %vm1644, %vm1645
    %v1647 = vsel %vm1646, %v1639, %v1643
    %v1648 = vand.u32 2147483647, %v1638
    %vm1649 = vcmp.eq.f32.partialorder %v1648, 8.507059e+37
    %v1650 = vand.u32 %v1638, 2147483648
    %v1651 = vor.u32 1.1754944e-38, %v1650
    %v1652 = vsel %vm1649, %v1651, %v1647
    %v1653 = vmul.f32 1.0, %v1652
    %1654 = vrot.lane.b32.xlu0 %v1490, 32
    %v1655 = vpop.permute.xlu0 %1654
    %v1657 = vmul.f32 %v1653, %v1655
    %1659 = vrot.lane.b32.xlu0 %v1657, 64
    %v1660 = vpop.permute.xlu0 %1659
    %v1662 = vadd.f32 %v1629, %v1660
    %v1663 = vtanh.pop %v1662
    %v1664 = vsub.f32 1.0, %v1653
    %1666 = vrot.lane.b32.xlu0 %v1663, 96
    %v1667 = vpop.permute.xlu0 %1666
    %v1669 = vmul.f32 %v1664, %v1667
    %1670 = vrot.lane.b32.xlu0 %v1252, 32
    %v1671 = vpop.permute.xlu0 %1670
    %v1673 = vmul.f32 %v1653, %v1671
    %v1674 = vadd.f32 %v1669, %v1673
    %1676 = vrot.lane.b32.xlu0 %v1674, 96
    %v1677 = vpop.permute.xlu0 %1676
    %vm1679 = vcmask 257024
    %1680 = vst.msk [vmem:[#allocation2] sm:$0xf] %vm1679, %v1677
    %vm1681 = vcmask 519168
    %1682 = vst.msk [vmem:[#allocation3] sm:$0xf] %vm1681, %v1605
    %v1683 = vsel %vm129, %v1677, 0
    %1685 = vmatpush.msra.mxu0 0.0
    %1686 = vmatpush.msra.mxu0 0.0
    %1687 = vmatpush.msra.mxu0 0.0
    %1688 = vmatpush.msra.mxu0 0.0
    %1689 = vmatpush.msra.mxu0 0.0
    %1690 = vmatpush.msra.mxu0 0.0
    %1691 = vmatpush.msra.mxu0 0.0
    %1692 = vmatpush.msra.mxu0 0.0
    %1693 = vmatpush.msra.mxu0 0.0
    %1694 = vmatpush.msra.mxu0 0.0
    %1695 = vmatpush.msra.mxu0 0.0
    %1696 = vmatpush.msra.mxu0 0.0
    %1697 = vmatpush.msra.mxu0 %v1344
    %1698 = vmatpush.msra.mxu0 %v1343
    %1699 = vmatpush.msra.mxu0 %v1342
    %1700 = vmatpush.msra.mxu0 %v1341
    %1701 = vmatmul.f32.gmra.mxu0 %v1683
    %v1702 = vpop.f32.mrf.mxu0
    %v1703 = vadd.f32 0.0, %v1702
    %1704 = vdwg.mxu0
    %v1705 = vadd.f32 %v1703, %v1488
    %v1707 = vrot.slane %v1703, 4
    %v1709 = vsel %vm1253, %v1703, %v1707
    %v1710 = vadd.f32 %v1330, %v1709
    %v1711 = vadd.f32 %v1333, %v1709
    %v1712 = vadd.f32 %v1336, %v1709
    %v1713 = vadd.f32 %v1339, %v1709
    %v1714 = vtanh.pop %v1710
    %v1715 = vtanh.pop %v1711
    %v1716 = vtanh.pop %v1712
    %v1717 = vtanh.pop %v1713
    %v1719 = vsel %vm129, %v1714, 0
    %v1722 = vsel %vm129, %v1715, 0
    %v1725 = vsel %vm129, %v1716, 0
    %v1728 = vsel %vm129, %v1717, 0
    %1730 = vmatpush.msra.mxu0 0.0
    %1731 = vmatpush.msra.mxu0 0.0
    %1732 = vmatpush.msra.mxu0 0.0
    %1733 = vmatpush.msra.mxu0 0.0
    %1734 = vmatpush.msra.mxu0 0.0
    %1735 = vmatpush.msra.mxu0 0.0
    %1736 = vmatpush.msra.mxu0 0.0
    %1737 = vmatpush.msra.mxu0 0.0
    %1738 = vmatpush.msra.mxu0 0.0
    %1739 = vmatpush.msra.mxu0 0.0
    %1740 = vmatpush.msra.mxu0 0.0
    %1741 = vmatpush.msra.mxu0 0.0
    %1742 = vmatpush.msra.mxu0 %v1348
    %1743 = vmatpush.msra.mxu0 %v1347
    %1744 = vmatpush.msra.mxu0 %v1346
    %1745 = vmatpush.msra.mxu0 %v1345
    %1746 = vmatmul.f32.gmra.mxu0 %v1719
    %v1747 = vpop.f32.mrf.mxu0
    %v1748 = vadd.f32 0.0, %v1747
    %1749 = vmatmul.f32.gmra.mxu0 %v1722
    %v1750 = vpop.f32.mrf.mxu0
    %v1751 = vadd.f32 0.0, %v1750
    %1752 = vmatmul.f32.gmra.mxu0 %v1725
    %v1753 = vpop.f32.mrf.mxu0
    %v1754 = vadd.f32 0.0, %v1753
    %1755 = vmatmul.f32.gmra.mxu0 %v1728
    %v1756 = vpop.f32.mrf.mxu0
    %v1757 = vadd.f32 0.0, %v1756
    %1758 = vdwg.mxu0
    %v1759 = vmul.f32 %v1748, 1.442695
    %v1760 = vpow.pop %v1759
    %v1761 = vmul.f32 %v1751, 1.442695
    %v1762 = vpow.pop %v1761
    %v1763 = vmul.f32 %v1754, 1.442695
    %v1764 = vpow.pop %v1763
    %v1765 = vmul.f32 %v1757, 1.442695
    %v1766 = vpow.pop %v1765
    %1768 = vset.pattern.permute.xlu0 0
    %1769 = vperm.xlu0 %1768, %v1760
    %v1770 = vpop.permute.xlu0 %1769
    %1773 = vset.pattern.permute.xlu0 0
    %1774 = vperm.xlu0 %1773, %v1762
    %v1775 = vpop.permute.xlu0 %1774
    %1778 = vset.pattern.permute.xlu0 0
    %1779 = vperm.xlu0 %1778, %v1764
    %v1780 = vpop.permute.xlu0 %1779
    %1783 = vset.pattern.permute.xlu0 0
    %1784 = vperm.xlu0 %1783, %v1766
    %v1785 = vpop.permute.xlu0 %1784
    %v1787 = vmul.f32 %v1770, %v1283
    %v1788 = vmul.f32 %v1775, %v1284
    %v1789 = vmul.f32 %v1780, %v1285
    %v1790 = vmul.f32 %v1785, %v1286
    %1791 = vmatpush.msra.mxu0 0.0
    %1792 = vmatpush.msra.mxu0 0.0
    %1793 = vmatpush.msra.mxu0 0.0
    %1794 = vmatpush.msra.mxu0 0.0
    %1795 = vmatpush.msra.mxu0 0.0
    %1796 = vmatpush.msra.mxu0 0.0
    %1797 = vmatpush.msra.mxu0 0.0
    %1798 = vmatpush.msra.mxu0 0.0
    %1799 = vmatpush.msra.mxu0 0.0
    %1800 = vmatpush.msra.mxu0 0.0
    %1801 = vmatpush.msra.mxu0 0.0
    %1802 = vmatpush.msra.mxu0 0.0
    %1803 = vmatpush.msra.mxu0 %v1790
    %1804 = vmatpush.msra.mxu0 %v1789
    %1805 = vmatpush.msra.mxu0 %v1788
    %1806 = vmatpush.msra.mxu0 %v1787
    %1807 = vmatmul.f32.gmra.mxu0 %v1577
    %v1808 = vpop.f32.mrf.mxu0
    %v1809 = vadd.f32 0.0, %v1808
    %1810 = vdwg.mxu0
    %v1811 = vrcp.pop %v1809
    %1813 = vset.pattern.permute.xlu0 64
    %1814 = vperm.xlu0 %1813, %v1811
    %v1815 = vpop.permute.xlu0 %1814
    %v1817 = vmul.f32 %v1809, %v1815
    %v1819 = vsel %vm1282, %v1817, 0
    %1821 = vmatpush.msra.mxu0 0.0
    %1822 = vmatpush.msra.mxu0 0.0
    %1823 = vmatpush.msra.mxu0 0.0
    %1824 = vmatpush.msra.mxu0 0.0
    %1825 = vmatpush.msra.mxu0 0.0
    %1826 = vmatpush.msra.mxu0 0.0
    %1827 = vmatpush.msra.mxu0 0.0
    %1828 = vmatpush.msra.mxu0 0.0
    %1829 = vmatpush.msra.mxu0 %v1356
    %1830 = vmatpush.msra.mxu0 %v1355
    %1831 = vmatpush.msra.mxu0 %v1354
    %1832 = vmatpush.msra.mxu0 %v1353
    %1833 = vmatpush.msra.mxu0 %v1352
    %1834 = vmatpush.msra.mxu0 %v1351
    %1835 = vmatpush.msra.mxu0 %v1350
    %1836 = vmatpush.msra.mxu0 %v1349
    %1837 = vmatmul.f32.gmra.mxu0 %v1819
    %v1838 = vpop.f32.mrf.mxu0
    %v1839 = vadd.f32 0.0, %v1838
    %1840 = vdwg.mxu0
    %v1842 = vrot.slane %v1839, 4
    %v1844 = vadd.f32 %v1398, %v1842
    %v1846 = vrot.slane %v1705, 4
    %1847 = vrot.lane.b32.xlu0 %v1846, 96
    %v1848 = vpop.permute.xlu0 %1847
    %v1850 = vadd.f32 %v1844, %v1848
    %v1851 = vxor.u32 %v1850, 2147483648
    %v1852 = vmul.f32 %v1851, 1.442695
    %v1853 = vpow.pop %v1852
    %v1854 = vadd.f32 %v1853, 1.0
    %v1855 = vrcp.pop %v1854
    %v1856 = vmul.f32 %v1854, %v1855
    %v1857 = vsub.f32 1.0, %v1856
    %v1858 = vmul.f32 %v1855, %v1857
    %v1859 = vadd.f32 %v1855, %v1858
    %vm1860 = vweird.f32 %v1854
    %vm1861 = vweird.f32 %v1855
    %vm1862 = vmor %vm1860, %vm1861
    %v1863 = vsel %vm1862, %v1855, %v1859
    %v1864 = vand.u32 2147483647, %v1854
    %vm1865 = vcmp.eq.f32.partialorder %v1864, 8.507059e+37
    %v1866 = vand.u32 %v1854, 2147483648
    %v1867 = vor.u32 1.1754944e-38, %v1866
    %v1868 = vsel %vm1865, %v1867, %v1863
    %v1869 = vmul.f32 1.0, %v1868
    %1870 = vrot.lane.b32.xlu0 %v1846, 32
    %v1871 = vpop.permute.xlu0 %1870
    %v1873 = vmul.f32 %v1869, %v1871
    %1875 = vrot.lane.b32.xlu0 %v1873, 64
    %v1876 = vpop.permute.xlu0 %1875
    %v1878 = vadd.f32 %v1844, %v1876
    %v1879 = vtanh.pop %v1878
    %v1880 = vsub.f32 1.0, %v1869
    %1882 = vrot.lane.b32.xlu0 %v1879, 96
    %v1883 = vpop.permute.xlu0 %1882
    %v1885 = vmul.f32 %v1880, %v1883
    %v1886 = vrot.slane %v1674, 4
    %v1888 = vmul.f32 %v1869, %v1886
    %v1889 = vadd.f32 %v1885, %v1888
    %1891 = vrot.lane.b32.xlu0 %v1889, 96
    %v1892 = vpop.permute.xlu0 %1891
    %vm1894 = vcmask 261124
    %1895 = vst.msk [vmem:[#allocation2] sm:$0xf0] %vm1894, %v1892
    %1896 = vst.msk [vmem:[#allocation3 + $0x4] sm:$0xf] %vm1681, %v1817
    %v1897 = vrot.slane %v1889, 4
    %1898 = vrot.lane.b32.xlu0 %v1897, 96
    %v1899 = vpop.permute.xlu0 %1898
    %v1900 = vsel %vm129, %v1899, 0
    %1902 = vmatpush.msra.mxu0 0.0
    %1903 = vmatpush.msra.mxu0 0.0
    %1904 = vmatpush.msra.mxu0 0.0
    %1905 = vmatpush.msra.mxu0 0.0
    %1906 = vmatpush.msra.mxu0 0.0
    %1907 = vmatpush.msra.mxu0 0.0
    %1908 = vmatpush.msra.mxu0 0.0
    %1909 = vmatpush.msra.mxu0 0.0
    %1910 = vmatpush.msra.mxu0 0.0
    %1911 = vmatpush.msra.mxu0 0.0
    %1912 = vmatpush.msra.mxu0 0.0
    %1913 = vmatpush.msra.mxu0 0.0
    %1914 = vmatpush.msra.mxu0 %v1344
    %1915 = vmatpush.msra.mxu0 %v1343
    %1916 = vmatpush.msra.mxu0 %v1342
    %1917 = vmatpush.msra.mxu0 %v1341
    %1918 = vmatmul.f32.gmra.mxu0 %v1900
    %v1919 = vpop.f32.mrf.mxu0
    %v1920 = vadd.f32 0.0, %v1919
    %1921 = vdwg.mxu0
    %v1922 = vadd.f32 %v1920, %v1488
    %v1924 = vrot.slane %v1920, 4
    %v1926 = vsel %vm1253, %v1920, %v1924
    %v1927 = vadd.f32 %v1330, %v1926
    %v1928 = vadd.f32 %v1333, %v1926
    %v1929 = vadd.f32 %v1336, %v1926
    %v1930 = vadd.f32 %v1339, %v1926
    %v1931 = vtanh.pop %v1927
    %v1932 = vtanh.pop %v1928
    %v1933 = vtanh.pop %v1929
    %v1934 = vtanh.pop %v1930
    %v1936 = vsel %vm129, %v1931, 0
    %v1939 = vsel %vm129, %v1932, 0
    %v1942 = vsel %vm129, %v1933, 0
    %v1945 = vsel %vm129, %v1934, 0
    %1947 = vmatpush.msra.mxu0 0.0
    %1948 = vmatpush.msra.mxu0 0.0
    %1949 = vmatpush.msra.mxu0 0.0
    %1950 = vmatpush.msra.mxu0 0.0
    %1951 = vmatpush.msra.mxu0 0.0
    %1952 = vmatpush.msra.mxu0 0.0
    %1953 = vmatpush.msra.mxu0 0.0
    %1954 = vmatpush.msra.mxu0 0.0
    %1955 = vmatpush.msra.mxu0 0.0
    %1956 = vmatpush.msra.mxu0 0.0
    %1957 = vmatpush.msra.mxu0 0.0
    %1958 = vmatpush.msra.mxu0 0.0
    %1959 = vmatpush.msra.mxu0 %v1348
    %1960 = vmatpush.msra.mxu0 %v1347
    %1961 = vmatpush.msra.mxu0 %v1346
    %1962 = vmatpush.msra.mxu0 %v1345
    %1963 = vmatmul.f32.gmra.mxu0 %v1936
    %v1964 = vpop.f32.mrf.mxu0
    %v1965 = vadd.f32 0.0, %v1964
    %1966 = vmatmul.f32.gmra.mxu0 %v1939
    %v1967 = vpop.f32.mrf.mxu0
    %v1968 = vadd.f32 0.0, %v1967
    %1969 = vmatmul.f32.gmra.mxu0 %v1942
    %v1970 = vpop.f32.mrf.mxu0
    %v1971 = vadd.f32 0.0, %v1970
    %1972 = vmatmul.f32.gmra.mxu0 %v1945
    %v1973 = vpop.f32.mrf.mxu0
    %v1974 = vadd.f32 0.0, %v1973
    %1975 = vdwg.mxu0
    %v1976 = vmul.f32 %v1965, 1.442695
    %v1977 = vpow.pop %v1976
    %v1978 = vmul.f32 %v1968, 1.442695
    %v1979 = vpow.pop %v1978
    %v1980 = vmul.f32 %v1971, 1.442695
    %v1981 = vpow.pop %v1980
    %v1982 = vmul.f32 %v1974, 1.442695
    %v1983 = vpow.pop %v1982
    %1985 = vset.pattern.permute.xlu0 0
    %1986 = vperm.xlu0 %1985, %v1977
    %v1987 = vpop.permute.xlu0 %1986
    %1990 = vset.pattern.permute.xlu0 0
    %1991 = vperm.xlu0 %1990, %v1979
    %v1992 = vpop.permute.xlu0 %1991
    %1995 = vset.pattern.permute.xlu0 0
    %1996 = vperm.xlu0 %1995, %v1981
    %v1997 = vpop.permute.xlu0 %1996
    %2000 = vset.pattern.permute.xlu0 0
    %2001 = vperm.xlu0 %2000, %v1983
    %v2002 = vpop.permute.xlu0 %2001
    %v2004 = vmul.f32 %v1987, %v1283
    %v2005 = vmul.f32 %v1992, %v1284
    %v2006 = vmul.f32 %v1997, %v1285
    %v2007 = vmul.f32 %v2002, %v1286
    %2008 = vmatpush.msra.mxu0 0.0
    %2009 = vmatpush.msra.mxu0 0.0
    %2010 = vmatpush.msra.mxu0 0.0
    %2011 = vmatpush.msra.mxu0 0.0
    %2012 = vmatpush.msra.mxu0 0.0
    %2013 = vmatpush.msra.mxu0 0.0
    %2014 = vmatpush.msra.mxu0 0.0
    %2015 = vmatpush.msra.mxu0 0.0
    %2016 = vmatpush.msra.mxu0 0.0
    %2017 = vmatpush.msra.mxu0 0.0
    %2018 = vmatpush.msra.mxu0 0.0
    %2019 = vmatpush.msra.mxu0 0.0
    %2020 = vmatpush.msra.mxu0 %v2007
    %2021 = vmatpush.msra.mxu0 %v2006
    %2022 = vmatpush.msra.mxu0 %v2005
    %2023 = vmatpush.msra.mxu0 %v2004
    %2024 = vmatmul.f32.gmra.mxu0 %v1577
    %v2025 = vpop.f32.mrf.mxu0
    %v2026 = vadd.f32 0.0, %v2025
    %2027 = vdwg.mxu0
    %v2028 = vrcp.pop %v2026
    %2030 = vset.pattern.permute.xlu0 64
    %2031 = vperm.xlu0 %2030, %v2028
    %v2032 = vpop.permute.xlu0 %2031
    %v2034 = vmul.f32 %v2026, %v2032
    %v2036 = vsel %vm1282, %v2034, 0
    %2038 = vmatpush.msra.mxu0 0.0
    %2039 = vmatpush.msra.mxu0 0.0
    %2040 = vmatpush.msra.mxu0 0.0
    %2041 = vmatpush.msra.mxu0 0.0
    %2042 = vmatpush.msra.mxu0 0.0
    %2043 = vmatpush.msra.mxu0 0.0
    %2044 = vmatpush.msra.mxu0 0.0
    %2045 = vmatpush.msra.mxu0 0.0
    %2046 = vmatpush.msra.mxu0 %v1356
    %2047 = vmatpush.msra.mxu0 %v1355
    %2048 = vmatpush.msra.mxu0 %v1354
    %2049 = vmatpush.msra.mxu0 %v1353
    %2050 = vmatpush.msra.mxu0 %v1352
    %2051 = vmatpush.msra.mxu0 %v1351
    %2052 = vmatpush.msra.mxu0 %v1350
    %2053 = vmatpush.msra.mxu0 %v1349
    %2054 = vmatmul.f32.gmra.mxu0 %v2036
    %v2055 = vpop.f32.mrf.mxu0
    %v2056 = vadd.f32 0.0, %v2055
    %2057 = vdwg.mxu0
    %v2058 = vadd.f32 %v1401, %v2056
    %2060 = vrot.lane.b32.xlu0 %v1922, 96
    %v2061 = vpop.permute.xlu0 %2060
    %v2063 = vadd.f32 %v2058, %v2061
    %v2064 = vxor.u32 %v2063, 2147483648
    %v2065 = vmul.f32 %v2064, 1.442695
    %v2066 = vpow.pop %v2065
    %v2067 = vadd.f32 %v2066, 1.0
    %v2068 = vrcp.pop %v2067
    %v2069 = vmul.f32 %v2067, %v2068
    %v2070 = vsub.f32 1.0, %v2069
    %v2071 = vmul.f32 %v2068, %v2070
    %v2072 = vadd.f32 %v2068, %v2071
    %vm2073 = vweird.f32 %v2067
    %vm2074 = vweird.f32 %v2068
    %vm2075 = vmor %vm2073, %vm2074
    %v2076 = vsel %vm2075, %v2068, %v2072
    %v2077 = vand.u32 2147483647, %v2067
    %vm2078 = vcmp.eq.f32.partialorder %v2077, 8.507059e+37
    %v2079 = vand.u32 %v2067, 2147483648
    %v2080 = vor.u32 1.1754944e-38, %v2079
    %v2081 = vsel %vm2078, %v2080, %v2076
    %v2082 = vmul.f32 1.0, %v2081
    %2083 = vrot.lane.b32.xlu0 %v1922, 32
    %v2084 = vpop.permute.xlu0 %2083
    %v2086 = vmul.f32 %v2082, %v2084
    %2088 = vrot.lane.b32.xlu0 %v2086, 64
    %v2089 = vpop.permute.xlu0 %2088
    %v2091 = vadd.f32 %v2058, %v2089
    %v2092 = vtanh.pop %v2091
    %v2093 = vsub.f32 1.0, %v2082
    %2095 = vrot.lane.b32.xlu0 %v2092, 96
    %v2096 = vpop.permute.xlu0 %2095
    %v2098 = vmul.f32 %v2093, %v2096
    %v2100 = vmul.f32 %v2082, %v1897
    %v2101 = vadd.f32 %v2098, %v2100
    %2103 = vrot.lane.b32.xlu0 %v2101, 96
    %v2104 = vpop.permute.xlu0 %2103
    %2106 = vst.msk [vmem:[#allocation2 + $0x8] sm:$0xf] %vm1679, %v2104
    %2107 = vst.msk [vmem:[#allocation3 + $0x8] sm:$0xf] %vm1681, %v2034
    %v2108 = vsel %vm129, %v2104, 0
    %2110 = vmatpush.msra.mxu0 0.0
    %2111 = vmatpush.msra.mxu0 0.0
    %2112 = vmatpush.msra.mxu0 0.0
    %2113 = vmatpush.msra.mxu0 0.0
    %2114 = vmatpush.msra.mxu0 0.0
    %2115 = vmatpush.msra.mxu0 0.0
    %2116 = vmatpush.msra.mxu0 0.0
    %2117 = vmatpush.msra.mxu0 0.0
    %2118 = vmatpush.msra.mxu0 0.0
    %2119 = vmatpush.msra.mxu0 0.0
    %2120 = vmatpush.msra.mxu0 0.0
    %2121 = vmatpush.msra.mxu0 0.0
    %2122 = vmatpush.msra.mxu0 %v1344
    %2123 = vmatpush.msra.mxu0 %v1343
    %2124 = vmatpush.msra.mxu0 %v1342
    %2125 = vmatpush.msra.mxu0 %v1341
    %2126 = vmatmul.f32.gmra.mxu0 %v2108
    %v2127 = vpop.f32.mrf.mxu0
    %v2128 = vadd.f32 0.0, %v2127
    %2129 = vdwg.mxu0
    %v2130 = vadd.f32 %v2128, %v1488
    %v2132 = vrot.slane %v2128, 4
    %v2134 = vsel %vm1253, %v2128, %v2132
    %v2135 = vadd.f32 %v1330, %v2134
    %v2136 = vadd.f32 %v1333, %v2134
    %v2137 = vadd.f32 %v1336, %v2134
    %v2138 = vadd.f32 %v1339, %v2134
    %v2139 = vtanh.pop %v2135
    %v2140 = vtanh.pop %v2136
    %v2141 = vtanh.pop %v2137
    %v2142 = vtanh.pop %v2138
    %v2144 = vsel %vm129, %v2139, 0
    %v2147 = vsel %vm129, %v2140, 0
    %v2150 = vsel %vm129, %v2141, 0
    %v2153 = vsel %vm129, %v2142, 0
    %2155 = vmatpush.msra.mxu0 0.0
    %2156 = vmatpush.msra.mxu0 0.0
    %2157 = vmatpush.msra.mxu0 0.0
    %2158 = vmatpush.msra.mxu0 0.0
    %2159 = vmatpush.msra.mxu0 0.0
    %2160 = vmatpush.msra.mxu0 0.0
    %2161 = vmatpush.msra.mxu0 0.0
    %2162 = vmatpush.msra.mxu0 0.0
    %2163 = vmatpush.msra.mxu0 0.0
    %2164 = vmatpush.msra.mxu0 0.0
    %2165 = vmatpush.msra.mxu0 0.0
    %2166 = vmatpush.msra.mxu0 0.0
    %2167 = vmatpush.msra.mxu0 %v1348
    %2168 = vmatpush.msra.mxu0 %v1347
    %2169 = vmatpush.msra.mxu0 %v1346
    %2170 = vmatpush.msra.mxu0 %v1345
    %2171 = vmatmul.f32.gmra.mxu0 %v2144
    %v2172 = vpop.f32.mrf.mxu0
    %v2173 = vadd.f32 0.0, %v2172
    %2174 = vmatmul.f32.gmra.mxu0 %v2147
    %v2175 = vpop.f32.mrf.mxu0
    %v2176 = vadd.f32 0.0, %v2175
    %2177 = vmatmul.f32.gmra.mxu0 %v2150
    %v2178 = vpop.f32.mrf.mxu0
    %v2179 = vadd.f32 0.0, %v2178
    %2180 = vmatmul.f32.gmra.mxu0 %v2153
    %v2181 = vpop.f32.mrf.mxu0
    %v2182 = vadd.f32 0.0, %v2181
    %2183 = vdwg.mxu0
    %v2184 = vmul.f32 %v2173, 1.442695
    %v2185 = vpow.pop %v2184
    %v2186 = vmul.f32 %v2176, 1.442695
    %v2187 = vpow.pop %v2186
    %v2188 = vmul.f32 %v2179, 1.442695
    %v2189 = vpow.pop %v2188
    %v2190 = vmul.f32 %v2182, 1.442695
    %v2191 = vpow.pop %v2190
    %2193 = vset.pattern.permute.xlu0 0
    %2194 = vperm.xlu0 %2193, %v2185
    %v2195 = vpop.permute.xlu0 %2194
    %2198 = vset.pattern.permute.xlu0 0
    %2199 = vperm.xlu0 %2198, %v2187
    %v2200 = vpop.permute.xlu0 %2199
    %2203 = vset.pattern.permute.xlu0 0
    %2204 = vperm.xlu0 %2203, %v2189
    %v2205 = vpop.permute.xlu0 %2204
    %2208 = vset.pattern.permute.xlu0 0
    %2209 = vperm.xlu0 %2208, %v2191
    %v2210 = vpop.permute.xlu0 %2209
    %v2212 = vmul.f32 %v2195, %v1283
    %v2213 = vmul.f32 %v2200, %v1284
    %v2214 = vmul.f32 %v2205, %v1285
    %v2215 = vmul.f32 %v2210, %v1286
    %2216 = vmatpush.msra.mxu0 0.0
    %2217 = vmatpush.msra.mxu0 0.0
    %2218 = vmatpush.msra.mxu0 0.0
    %2219 = vmatpush.msra.mxu0 0.0
    %2220 = vmatpush.msra.mxu0 0.0
    %2221 = vmatpush.msra.mxu0 0.0
    %2222 = vmatpush.msra.mxu0 0.0
    %2223 = vmatpush.msra.mxu0 0.0
    %2224 = vmatpush.msra.mxu0 0.0
    %2225 = vmatpush.msra.mxu0 0.0
    %2226 = vmatpush.msra.mxu0 0.0
    %2227 = vmatpush.msra.mxu0 0.0
    %2228 = vmatpush.msra.mxu0 %v2215
    %2229 = vmatpush.msra.mxu0 %v2214
    %2230 = vmatpush.msra.mxu0 %v2213
    %2231 = vmatpush.msra.mxu0 %v2212
    %2232 = vmatmul.f32.gmra.mxu0 %v1577
    %v2233 = vpop.f32.mrf.mxu0
    %v2234 = vadd.f32 0.0, %v2233
    %2235 = vdwg.mxu0
    %v2236 = vrcp.pop %v2234
    %2238 = vset.pattern.permute.xlu0 64
    %2239 = vperm.xlu0 %2238, %v2236
    %v2240 = vpop.permute.xlu0 %2239
    %v2242 = vmul.f32 %v2234, %v2240
    %v2244 = vsel %vm1282, %v2242, 0
    %2246 = vmatpush.msra.mxu0 0.0
    %2247 = vmatpush.msra.mxu0 0.0
    %2248 = vmatpush.msra.mxu0 0.0
    %2249 = vmatpush.msra.mxu0 0.0
    %2250 = vmatpush.msra.mxu0 0.0
    %2251 = vmatpush.msra.mxu0 0.0
    %2252 = vmatpush.msra.mxu0 0.0
    %2253 = vmatpush.msra.mxu0 0.0
    %2254 = vmatpush.msra.mxu0 %v1356
    %2255 = vmatpush.msra.mxu0 %v1355
    %2256 = vmatpush.msra.mxu0 %v1354
    %2257 = vmatpush.msra.mxu0 %v1353
    %2258 = vmatpush.msra.mxu0 %v1352
    %2259 = vmatpush.msra.mxu0 %v1351
    %2260 = vmatpush.msra.mxu0 %v1350
    %2261 = vmatpush.msra.mxu0 %v1349
    %2262 = vmatmul.f32.gmra.mxu0 %v2244
    %v2263 = vpop.f32.mrf.mxu0
    %v2264 = vadd.f32 0.0, %v2263
    %2265 = vdwg.mxu0
    %v2267 = vrot.slane %v2264, 4
    %v2269 = vadd.f32 %v1401, %v2267
    %v2271 = vrot.slane %v2130, 4
    %2272 = vrot.lane.b32.xlu0 %v2271, 96
    %v2273 = vpop.permute.xlu0 %2272
    %v2275 = vadd.f32 %v2269, %v2273
    %v2276 = vxor.u32 %v2275, 2147483648
    %v2277 = vmul.f32 %v2276, 1.442695
    %v2278 = vpow.pop %v2277
    %v2279 = vadd.f32 %v2278, 1.0
    %v2280 = vrcp.pop %v2279
    %v2281 = vmul.f32 %v2279, %v2280
    %v2282 = vsub.f32 1.0, %v2281
    %v2283 = vmul.f32 %v2280, %v2282
    %v2284 = vadd.f32 %v2280, %v2283
    %vm2285 = vweird.f32 %v2279
    %vm2286 = vweird.f32 %v2280
    %vm2287 = vmor %vm2285, %vm2286
    %v2288 = vsel %vm2287, %v2280, %v2284
    %v2289 = vand.u32 2147483647, %v2279
    %vm2290 = vcmp.eq.f32.partialorder %v2289, 8.507059e+37
    %v2291 = vand.u32 %v2279, 2147483648
    %v2292 = vor.u32 1.1754944e-38, %v2291
    %v2293 = vsel %vm2290, %v2292, %v2288
    %v2294 = vmul.f32 1.0, %v2293
    %2295 = vrot.lane.b32.xlu0 %v2271, 32
    %v2296 = vpop.permute.xlu0 %2295
    %v2298 = vmul.f32 %v2294, %v2296
    %2300 = vrot.lane.b32.xlu0 %v2298, 64
    %v2301 = vpop.permute.xlu0 %2300
    %v2303 = vadd.f32 %v2269, %v2301
    %v2304 = vtanh.pop %v2303
    %v2305 = vsub.f32 1.0, %v2294
    %2307 = vrot.lane.b32.xlu0 %v2304, 96
    %v2308 = vpop.permute.xlu0 %2307
    %v2310 = vmul.f32 %v2305, %v2308
    %v2311 = vrot.slane %v2101, 4
    %v2313 = vmul.f32 %v2294, %v2311
    %v2314 = vadd.f32 %v2310, %v2313
    %2316 = vrot.lane.b32.xlu0 %v2314, 96
    %v2317 = vpop.permute.xlu0 %2316
    %2319 = vst.msk [vmem:[#allocation2 + $0x8] sm:$0xf0] %vm1894, %v2317
    %2320 = vst.msk [vmem:[#allocation3 + $0xc] sm:$0xf] %vm1681, %v2242
    %v2321 = vrot.slane %v2314, 4
    %2322 = vrot.lane.b32.xlu0 %v2321, 96
    %v2323 = vpop.permute.xlu0 %2322
    %v2324 = vsel %vm129, %v2323, 0
    %2326 = vmatpush.msra.mxu0 0.0
    %2327 = vmatpush.msra.mxu0 0.0
    %2328 = vmatpush.msra.mxu0 0.0
    %2329 = vmatpush.msra.mxu0 0.0
    %2330 = vmatpush.msra.mxu0 0.0
    %2331 = vmatpush.msra.mxu0 0.0
    %2332 = vmatpush.msra.mxu0 0.0
    %2333 = vmatpush.msra.mxu0 0.0
    %2334 = vmatpush.msra.mxu0 0.0
    %2335 = vmatpush.msra.mxu0 0.0
    %2336 = vmatpush.msra.mxu0 0.0
    %2337 = vmatpush.msra.mxu0 0.0
    %2338 = vmatpush.msra.mxu0 %v1344
    %2339 = vmatpush.msra.mxu0 %v1343
    %2340 = vmatpush.msra.mxu0 %v1342
    %2341 = vmatpush.msra.mxu0 %v1341
    %2342 = vmatmul.f32.gmra.mxu0 %v2324
    %v2343 = vpop.f32.mrf.mxu0
    %v2344 = vadd.f32 0.0, %v2343
    %2345 = vdwg.mxu0
    %v2346 = vadd.f32 %v2344, %v1488
    %v2348 = vrot.slane %v2344, 4
    %v2350 = vsel %vm1253, %v2344, %v2348
    %v2351 = vadd.f32 %v1330, %v2350
    %v2352 = vadd.f32 %v1333, %v2350
    %v2353 = vadd.f32 %v1336, %v2350
    %v2354 = vadd.f32 %v1339, %v2350
    %v2355 = vtanh.pop %v2351
    %v2356 = vtanh.pop %v2352
    %v2357 = vtanh.pop %v2353
    %v2358 = vtanh.pop %v2354
    %v2360 = vsel %vm129, %v2355, 0
    %v2363 = vsel %vm129, %v2356, 0
    %v2366 = vsel %vm129, %v2357, 0
    %v2369 = vsel %vm129, %v2358, 0
    %2371 = vmatpush.msra.mxu0 0.0
    %2372 = vmatpush.msra.mxu0 0.0
    %2373 = vmatpush.msra.mxu0 0.0
    %2374 = vmatpush.msra.mxu0 0.0
    %2375 = vmatpush.msra.mxu0 0.0
    %2376 = vmatpush.msra.mxu0 0.0
    %2377 = vmatpush.msra.mxu0 0.0
    %2378 = vmatpush.msra.mxu0 0.0
    %2379 = vmatpush.msra.mxu0 0.0
    %2380 = vmatpush.msra.mxu0 0.0
    %2381 = vmatpush.msra.mxu0 0.0
    %2382 = vmatpush.msra.mxu0 0.0
    %2383 = vmatpush.msra.mxu0 %v1348
    %2384 = vmatpush.msra.mxu0 %v1347
    %2385 = vmatpush.msra.mxu0 %v1346
    %2386 = vmatpush.msra.mxu0 %v1345
    %2387 = vmatmul.f32.gmra.mxu0 %v2360
    %v2388 = vpop.f32.mrf.mxu0
    %v2389 = vadd.f32 0.0, %v2388
    %2390 = vmatmul.f32.gmra.mxu0 %v2363
    %v2391 = vpop.f32.mrf.mxu0
    %v2392 = vadd.f32 0.0, %v2391
    %2393 = vmatmul.f32.gmra.mxu0 %v2366
    %v2394 = vpop.f32.mrf.mxu0
    %v2395 = vadd.f32 0.0, %v2394
    %2396 = vmatmul.f32.gmra.mxu0 %v2369
    %v2397 = vpop.f32.mrf.mxu0
    %v2398 = vadd.f32 0.0, %v2397
    %2399 = vdwg.mxu0
    %v2400 = vmul.f32 %v2389, 1.442695
    %v2401 = vpow.pop %v2400
    %v2402 = vmul.f32 %v2392, 1.442695
    %v2403 = vpow.pop %v2402
    %v2404 = vmul.f32 %v2395, 1.442695
    %v2405 = vpow.pop %v2404
    %v2406 = vmul.f32 %v2398, 1.442695
    %v2407 = vpow.pop %v2406
    %2409 = vset.pattern.permute.xlu0 0
    %2410 = vperm.xlu0 %2409, %v2401
    %v2411 = vpop.permute.xlu0 %2410
    %2414 = vset.pattern.permute.xlu0 0
    %2415 = vperm.xlu0 %2414, %v2403
    %v2416 = vpop.permute.xlu0 %2415
    %2419 = vset.pattern.permute.xlu0 0
    %2420 = vperm.xlu0 %2419, %v2405
    %v2421 = vpop.permute.xlu0 %2420
    %2424 = vset.pattern.permute.xlu0 0
    %2425 = vperm.xlu0 %2424, %v2407
    %v2426 = vpop.permute.xlu0 %2425
    %v2428 = vmul.f32 %v2411, %v1283
    %v2429 = vmul.f32 %v2416, %v1284
    %v2430 = vmul.f32 %v2421, %v1285
    %v2431 = vmul.f32 %v2426, %v1286
    %2432 = vmatpush.msra.mxu0 0.0
    %2433 = vmatpush.msra.mxu0 0.0
    %2434 = vmatpush.msra.mxu0 0.0
    %2435 = vmatpush.msra.mxu0 0.0
    %2436 = vmatpush.msra.mxu0 0.0
    %2437 = vmatpush.msra.mxu0 0.0
    %2438 = vmatpush.msra.mxu0 0.0
    %2439 = vmatpush.msra.mxu0 0.0
    %2440 = vmatpush.msra.mxu0 0.0
    %2441 = vmatpush.msra.mxu0 0.0
    %2442 = vmatpush.msra.mxu0 0.0
    %2443 = vmatpush.msra.mxu0 0.0
    %2444 = vmatpush.msra.mxu0 %v2431
    %2445 = vmatpush.msra.mxu0 %v2430
    %2446 = vmatpush.msra.mxu0 %v2429
    %2447 = vmatpush.msra.mxu0 %v2428
    %2448 = vmatmul.f32.gmra.mxu0 %v1577
    %v2449 = vpop.f32.mrf.mxu0
    %v2450 = vadd.f32 0.0, %v2449
    %2451 = vdwg.mxu0
    %v2452 = vrcp.pop %v2450
    %2454 = vset.pattern.permute.xlu0 64
    %2455 = vperm.xlu0 %2454, %v2452
    %v2456 = vpop.permute.xlu0 %2455
    %v2458 = vmul.f32 %v2450, %v2456
    %v2460 = vsel %vm1282, %v2458, 0
    %2462 = vmatpush.msra.mxu0 0.0
    %2463 = vmatpush.msra.mxu0 0.0
    %2464 = vmatpush.msra.mxu0 0.0
    %2465 = vmatpush.msra.mxu0 0.0
    %2466 = vmatpush.msra.mxu0 0.0
    %2467 = vmatpush.msra.mxu0 0.0
    %2468 = vmatpush.msra.mxu0 0.0
    %2469 = vmatpush.msra.mxu0 0.0
    %2470 = vmatpush.msra.mxu0 %v1356
    %2471 = vmatpush.msra.mxu0 %v1355
    %2472 = vmatpush.msra.mxu0 %v1354
    %2473 = vmatpush.msra.mxu0 %v1353
    %2474 = vmatpush.msra.mxu0 %v1352
    %2475 = vmatpush.msra.mxu0 %v1351
    %2476 = vmatpush.msra.mxu0 %v1350
    %2477 = vmatpush.msra.mxu0 %v1349
    %2478 = vmatmul.f32.gmra.mxu0 %v2460
    %v2479 = vpop.f32.mrf.mxu0
    %v2480 = vadd.f32 0.0, %v2479
    %2481 = vdwg.mxu0
    %v2482 = vadd.f32 %v1404, %v2480
    %2484 = vrot.lane.b32.xlu0 %v2346, 96
    %v2485 = vpop.permute.xlu0 %2484
    %v2487 = vadd.f32 %v2482, %v2485
    %v2488 = vxor.u32 %v2487, 2147483648
    %v2489 = vmul.f32 %v2488, 1.442695
    %v2490 = vpow.pop %v2489
    %v2491 = vadd.f32 %v2490, 1.0
    %v2492 = vrcp.pop %v2491
    %v2493 = vmul.f32 %v2491, %v2492
    %v2494 = vsub.f32 1.0, %v2493
    %v2495 = vmul.f32 %v2492, %v2494
    %v2496 = vadd.f32 %v2492, %v2495
    %vm2497 = vweird.f32 %v2491
    %vm2498 = vweird.f32 %v2492
    %vm2499 = vmor %vm2497, %vm2498
    %v2500 = vsel %vm2499, %v2492, %v2496
    %v2501 = vand.u32 2147483647, %v2491
    %vm2502 = vcmp.eq.f32.partialorder %v2501, 8.507059e+37
    %v2503 = vand.u32 %v2491, 2147483648
    %v2504 = vor.u32 1.1754944e-38, %v2503
    %v2505 = vsel %vm2502, %v2504, %v2500
    %v2506 = vmul.f32 1.0, %v2505
    %2507 = vrot.lane.b32.xlu0 %v2346, 32
    %v2508 = vpop.permute.xlu0 %2507
    %v2510 = vmul.f32 %v2506, %v2508
    %2512 = vrot.lane.b32.xlu0 %v2510, 64
    %v2513 = vpop.permute.xlu0 %2512
    %v2515 = vadd.f32 %v2482, %v2513
    %v2516 = vtanh.pop %v2515
    %v2517 = vsub.f32 1.0, %v2506
    %2519 = vrot.lane.b32.xlu0 %v2516, 96
    %v2520 = vpop.permute.xlu0 %2519
    %v2522 = vmul.f32 %v2517, %v2520
    %v2524 = vmul.f32 %v2506, %v2321
    %v2525 = vadd.f32 %v2522, %v2524
    %2527 = vrot.lane.b32.xlu0 %v2525, 96
    %v2528 = vpop.permute.xlu0 %2527
    %2530 = vst.msk [vmem:[#allocation2 + $0x10] sm:$0xf] %vm1679, %v2528
    %2531 = vst.msk [vmem:[#allocation3 + $0x10] sm:$0xf] %vm1681, %v2458
    %v2532 = vsel %vm129, %v2528, 0
    %2534 = vmatpush.msra.mxu0 0.0
    %2535 = vmatpush.msra.mxu0 0.0
    %2536 = vmatpush.msra.mxu0 0.0
    %2537 = vmatpush.msra.mxu0 0.0
    %2538 = vmatpush.msra.mxu0 0.0
    %2539 = vmatpush.msra.mxu0 0.0
    %2540 = vmatpush.msra.mxu0 0.0
    %2541 = vmatpush.msra.mxu0 0.0
    %2542 = vmatpush.msra.mxu0 0.0
    %2543 = vmatpush.msra.mxu0 0.0
    %2544 = vmatpush.msra.mxu0 0.0
    %2545 = vmatpush.msra.mxu0 0.0
    %2546 = vmatpush.msra.mxu0 %v1344
    %2547 = vmatpush.msra.mxu0 %v1343
    %2548 = vmatpush.msra.mxu0 %v1342
    %2549 = vmatpush.msra.mxu0 %v1341
    %2550 = vmatmul.f32.gmra.mxu0 %v2532
    %v2551 = vpop.f32.mrf.mxu0
    %v2552 = vadd.f32 0.0, %v2551
    %2553 = vdwg.mxu0
    %v2554 = vadd.f32 %v2552, %v1488
    %v2556 = vrot.slane %v2552, 4
    %v2558 = vsel %vm1253, %v2552, %v2556
    %v2559 = vadd.f32 %v1330, %v2558
    %v2560 = vadd.f32 %v1333, %v2558
    %v2561 = vadd.f32 %v1336, %v2558
    %v2562 = vadd.f32 %v1339, %v2558
    %v2563 = vtanh.pop %v2559
    %v2564 = vtanh.pop %v2560
    %v2565 = vtanh.pop %v2561
    %v2566 = vtanh.pop %v2562
    %v2568 = vsel %vm129, %v2563, 0
    %v2571 = vsel %vm129, %v2564, 0
    %v2574 = vsel %vm129, %v2565, 0
    %v2577 = vsel %vm129, %v2566, 0
    %2579 = vmatpush.msra.mxu0 0.0
    %2580 = vmatpush.msra.mxu0 0.0
    %2581 = vmatpush.msra.mxu0 0.0
    %2582 = vmatpush.msra.mxu0 0.0
    %2583 = vmatpush.msra.mxu0 0.0
    %2584 = vmatpush.msra.mxu0 0.0
    %2585 = vmatpush.msra.mxu0 0.0
    %2586 = vmatpush.msra.mxu0 0.0
    %2587 = vmatpush.msra.mxu0 0.0
    %2588 = vmatpush.msra.mxu0 0.0
    %2589 = vmatpush.msra.mxu0 0.0
    %2590 = vmatpush.msra.mxu0 0.0
    %2591 = vmatpush.msra.mxu0 %v1348
    %2592 = vmatpush.msra.mxu0 %v1347
    %2593 = vmatpush.msra.mxu0 %v1346
    %2594 = vmatpush.msra.mxu0 %v1345
    %2595 = vmatmul.f32.gmra.mxu0 %v2568
    %v2596 = vpop.f32.mrf.mxu0
    %v2597 = vadd.f32 0.0, %v2596
    %2598 = vmatmul.f32.gmra.mxu0 %v2571
    %v2599 = vpop.f32.mrf.mxu0
    %v2600 = vadd.f32 0.0, %v2599
    %2601 = vmatmul.f32.gmra.mxu0 %v2574
    %v2602 = vpop.f32.mrf.mxu0
    %v2603 = vadd.f32 0.0, %v2602
    %2604 = vmatmul.f32.gmra.mxu0 %v2577
    %v2605 = vpop.f32.mrf.mxu0
    %v2606 = vadd.f32 0.0, %v2605
    %2607 = vdwg.mxu0
    %v2608 = vmul.f32 %v2597, 1.442695
    %v2609 = vpow.pop %v2608
    %v2610 = vmul.f32 %v2600, 1.442695
    %v2611 = vpow.pop %v2610
    %v2612 = vmul.f32 %v2603, 1.442695
    %v2613 = vpow.pop %v2612
    %v2614 = vmul.f32 %v2606, 1.442695
    %v2615 = vpow.pop %v2614
    %2617 = vset.pattern.permute.xlu0 0
    %2618 = vperm.xlu0 %2617, %v2609
    %v2619 = vpop.permute.xlu0 %2618
    %2622 = vset.pattern.permute.xlu0 0
    %2623 = vperm.xlu0 %2622, %v2611
    %v2624 = vpop.permute.xlu0 %2623
    %2627 = vset.pattern.permute.xlu0 0
    %2628 = vperm.xlu0 %2627, %v2613
    %v2629 = vpop.permute.xlu0 %2628
    %2632 = vset.pattern.permute.xlu0 0
    %2633 = vperm.xlu0 %2632, %v2615
    %v2634 = vpop.permute.xlu0 %2633
    %v2636 = vmul.f32 %v2619, %v1283
    %v2637 = vmul.f32 %v2624, %v1284
    %v2638 = vmul.f32 %v2629, %v1285
    %v2639 = vmul.f32 %v2634, %v1286
    %2640 = vmatpush.msra.mxu0 0.0
    %2641 = vmatpush.msra.mxu0 0.0
    %2642 = vmatpush.msra.mxu0 0.0
    %2643 = vmatpush.msra.mxu0 0.0
    %2644 = vmatpush.msra.mxu0 0.0
    %2645 = vmatpush.msra.mxu0 0.0
    %2646 = vmatpush.msra.mxu0 0.0
    %2647 = vmatpush.msra.mxu0 0.0
    %2648 = vmatpush.msra.mxu0 0.0
    %2649 = vmatpush.msra.mxu0 0.0
    %2650 = vmatpush.msra.mxu0 0.0
    %2651 = vmatpush.msra.mxu0 0.0
    %2652 = vmatpush.msra.mxu0 %v2639
    %2653 = vmatpush.msra.mxu0 %v2638
    %2654 = vmatpush.msra.mxu0 %v2637
    %2655 = vmatpush.msra.mxu0 %v2636
    %2656 = vmatmul.f32.gmra.mxu0 %v1577
    %v2657 = vpop.f32.mrf.mxu0
    %v2658 = vadd.f32 0.0, %v2657
    %2659 = vdwg.mxu0
    %v2660 = vrcp.pop %v2658
    %2662 = vset.pattern.permute.xlu0 64
    %2663 = vperm.xlu0 %2662, %v2660
    %v2664 = vpop.permute.xlu0 %2663
    %v2666 = vmul.f32 %v2658, %v2664
    %v2668 = vsel %vm1282, %v2666, 0
    %2670 = vmatpush.msra.mxu0 0.0
    %2671 = vmatpush.msra.mxu0 0.0
    %2672 = vmatpush.msra.mxu0 0.0
    %2673 = vmatpush.msra.mxu0 0.0
    %2674 = vmatpush.msra.mxu0 0.0
    %2675 = vmatpush.msra.mxu0 0.0
    %2676 = vmatpush.msra.mxu0 0.0
    %2677 = vmatpush.msra.mxu0 0.0
    %2678 = vmatpush.msra.mxu0 %v1356
    %2679 = vmatpush.msra.mxu0 %v1355
    %2680 = vmatpush.msra.mxu0 %v1354
    %2681 = vmatpush.msra.mxu0 %v1353
    %2682 = vmatpush.msra.mxu0 %v1352
    %2683 = vmatpush.msra.mxu0 %v1351
    %2684 = vmatpush.msra.mxu0 %v1350
    %2685 = vmatpush.msra.mxu0 %v1349
    %2686 = vmatmul.f32.gmra.mxu0 %v2668
    %v2687 = vpop.f32.mrf.mxu0
    %v2688 = vadd.f32 0.0, %v2687
    %2689 = vdwg.mxu0
    %v2691 = vrot.slane %v2688, 4
    %v2693 = vadd.f32 %v1404, %v2691
    %v2695 = vrot.slane %v2554, 4
    %2696 = vrot.lane.b32.xlu0 %v2695, 96
    %v2697 = vpop.permute.xlu0 %2696
    %v2699 = vadd.f32 %v2693, %v2697
    %v2700 = vxor.u32 %v2699, 2147483648
    %v2701 = vmul.f32 %v2700, 1.442695
    %v2702 = vpow.pop %v2701
    %v2703 = vadd.f32 %v2702, 1.0
    %v2704 = vrcp.pop %v2703
    %v2705 = vmul.f32 %v2703, %v2704
    %v2706 = vsub.f32 1.0, %v2705
    %v2707 = vmul.f32 %v2704, %v2706
    %v2708 = vadd.f32 %v2704, %v2707
    %vm2709 = vweird.f32 %v2703
    %vm2710 = vweird.f32 %v2704
    %vm2711 = vmor %vm2709, %vm2710
    %v2712 = vsel %vm2711, %v2704, %v2708
    %v2713 = vand.u32 2147483647, %v2703
    %vm2714 = vcmp.eq.f32.partialorder %v2713, 8.507059e+37
    %v2715 = vand.u32 %v2703, 2147483648
    %v2716 = vor.u32 1.1754944e-38, %v2715
    %v2717 = vsel %vm2714, %v2716, %v2712
    %v2718 = vmul.f32 1.0, %v2717
    %2719 = vrot.lane.b32.xlu0 %v2695, 32
    %v2720 = vpop.permute.xlu0 %2719
    %v2722 = vmul.f32 %v2718, %v2720
    %2724 = vrot.lane.b32.xlu0 %v2722, 64
    %v2725 = vpop.permute.xlu0 %2724
    %v2727 = vadd.f32 %v2693, %v2725
    %v2728 = vtanh.pop %v2727
    %v2729 = vsub.f32 1.0, %v2718
    %2731 = vrot.lane.b32.xlu0 %v2728, 96
    %v2732 = vpop.permute.xlu0 %2731
    %v2734 = vmul.f32 %v2729, %v2732
    %v2735 = vrot.slane %v2525, 4
    %v2737 = vmul.f32 %v2718, %v2735
    %v2738 = vadd.f32 %v2734, %v2737
    %2740 = vrot.lane.b32.xlu0 %v2738, 96
    %v2741 = vpop.permute.xlu0 %2740
    %2743 = vst.msk [vmem:[#allocation2 + $0x10] sm:$0xf0] %vm1894, %v2741
    %2744 = vst.msk [vmem:[#allocation3 + $0x14] sm:$0xf] %vm1681, %v2666
    %v2745 = vrot.slane %v2738, 4
    %2746 = vrot.lane.b32.xlu0 %v2745, 96
    %v2747 = vpop.permute.xlu0 %2746
    %v2748 = vsel %vm129, %v2747, 0
    %2750 = vmatpush.msra.mxu0 0.0
    %2751 = vmatpush.msra.mxu0 0.0
    %2752 = vmatpush.msra.mxu0 0.0
    %2753 = vmatpush.msra.mxu0 0.0
    %2754 = vmatpush.msra.mxu0 0.0
    %2755 = vmatpush.msra.mxu0 0.0
    %2756 = vmatpush.msra.mxu0 0.0
    %2757 = vmatpush.msra.mxu0 0.0
    %2758 = vmatpush.msra.mxu0 0.0
    %2759 = vmatpush.msra.mxu0 0.0
    %2760 = vmatpush.msra.mxu0 0.0
    %2761 = vmatpush.msra.mxu0 0.0
    %2762 = vmatpush.msra.mxu0 %v1344
    %2763 = vmatpush.msra.mxu0 %v1343
    %2764 = vmatpush.msra.mxu0 %v1342
    %2765 = vmatpush.msra.mxu0 %v1341
    %2766 = vmatmul.f32.gmra.mxu0 %v2748
    %v2767 = vpop.f32.mrf.mxu0
    %v2768 = vadd.f32 0.0, %v2767
    %2769 = vdwg.mxu0
    %v2770 = vadd.f32 %v2768, %v1488
    %v2772 = vrot.slane %v2768, 4
    %v2774 = vsel %vm1253, %v2768, %v2772
    %v2775 = vadd.f32 %v1330, %v2774
    %v2776 = vadd.f32 %v1333, %v2774
    %v2777 = vadd.f32 %v1336, %v2774
    %v2778 = vadd.f32 %v1339, %v2774
    %v2779 = vtanh.pop %v2775
    %v2780 = vtanh.pop %v2776
    %v2781 = vtanh.pop %v2777
    %v2782 = vtanh.pop %v2778
    %v2784 = vsel %vm129, %v2779, 0
    %v2787 = vsel %vm129, %v2780, 0
    %v2790 = vsel %vm129, %v2781, 0
    %v2793 = vsel %vm129, %v2782, 0
    %2795 = vmatpush.msra.mxu0 0.0
    %2796 = vmatpush.msra.mxu0 0.0
    %2797 = vmatpush.msra.mxu0 0.0
    %2798 = vmatpush.msra.mxu0 0.0
    %2799 = vmatpush.msra.mxu0 0.0
    %2800 = vmatpush.msra.mxu0 0.0
    %2801 = vmatpush.msra.mxu0 0.0
    %2802 = vmatpush.msra.mxu0 0.0
    %2803 = vmatpush.msra.mxu0 0.0
    %2804 = vmatpush.msra.mxu0 0.0
    %2805 = vmatpush.msra.mxu0 0.0
    %2806 = vmatpush.msra.mxu0 0.0
    %2807 = vmatpush.msra.mxu0 %v1348
    %2808 = vmatpush.msra.mxu0 %v1347
    %2809 = vmatpush.msra.mxu0 %v1346
    %2810 = vmatpush.msra.mxu0 %v1345
    %2811 = vmatmul.f32.gmra.mxu0 %v2784
    %v2812 = vpop.f32.mrf.mxu0
    %v2813 = vadd.f32 0.0, %v2812
    %2814 = vmatmul.f32.gmra.mxu0 %v2787
    %v2815 = vpop.f32.mrf.mxu0
    %v2816 = vadd.f32 0.0, %v2815
    %2817 = vmatmul.f32.gmra.mxu0 %v2790
    %v2818 = vpop.f32.mrf.mxu0
    %v2819 = vadd.f32 0.0, %v2818
    %2820 = vmatmul.f32.gmra.mxu0 %v2793
    %v2821 = vpop.f32.mrf.mxu0
    %v2822 = vadd.f32 0.0, %v2821
    %2823 = vdwg.mxu0
    %v2824 = vmul.f32 %v2813, 1.442695
    %v2825 = vpow.pop %v2824
    %v2826 = vmul.f32 %v2816, 1.442695
    %v2827 = vpow.pop %v2826
    %v2828 = vmul.f32 %v2819, 1.442695
    %v2829 = vpow.pop %v2828
    %v2830 = vmul.f32 %v2822, 1.442695
    %v2831 = vpow.pop %v2830
    %2833 = vset.pattern.permute.xlu0 0
    %2834 = vperm.xlu0 %2833, %v2825
    %v2835 = vpop.permute.xlu0 %2834
    %2838 = vset.pattern.permute.xlu0 0
    %2839 = vperm.xlu0 %2838, %v2827
    %v2840 = vpop.permute.xlu0 %2839
    %2843 = vset.pattern.permute.xlu0 0
    %2844 = vperm.xlu0 %2843, %v2829
    %v2845 = vpop.permute.xlu0 %2844
    %2848 = vset.pattern.permute.xlu0 0
    %2849 = vperm.xlu0 %2848, %v2831
    %v2850 = vpop.permute.xlu0 %2849
    %v2852 = vmul.f32 %v2835, %v1283
    %v2853 = vmul.f32 %v2840, %v1284
    %v2854 = vmul.f32 %v2845, %v1285
    %v2855 = vmul.f32 %v2850, %v1286
    %2856 = vmatpush.msra.mxu0 0.0
    %2857 = vmatpush.msra.mxu0 0.0
    %2858 = vmatpush.msra.mxu0 0.0
    %2859 = vmatpush.msra.mxu0 0.0
    %2860 = vmatpush.msra.mxu0 0.0
    %2861 = vmatpush.msra.mxu0 0.0
    %2862 = vmatpush.msra.mxu0 0.0
    %2863 = vmatpush.msra.mxu0 0.0
    %2864 = vmatpush.msra.mxu0 0.0
    %2865 = vmatpush.msra.mxu0 0.0
    %2866 = vmatpush.msra.mxu0 0.0
    %2867 = vmatpush.msra.mxu0 0.0
    %2868 = vmatpush.msra.mxu0 %v2855
    %2869 = vmatpush.msra.mxu0 %v2854
    %2870 = vmatpush.msra.mxu0 %v2853
    %2871 = vmatpush.msra.mxu0 %v2852
    %2872 = vmatmul.f32.gmra.mxu0 %v1577
    %v2873 = vpop.f32.mrf.mxu0
    %v2874 = vadd.f32 0.0, %v2873
    %2875 = vdwg.mxu0
    %v2876 = vrcp.pop %v2874
    %2878 = vset.pattern.permute.xlu0 64
    %2879 = vperm.xlu0 %2878, %v2876
    %v2880 = vpop.permute.xlu0 %2879
    %v2882 = vmul.f32 %v2874, %v2880
    %v2884 = vsel %vm1282, %v2882, 0
    %2886 = vmatpush.msra.mxu0 0.0
    %2887 = vmatpush.msra.mxu0 0.0
    %2888 = vmatpush.msra.mxu0 0.0
    %2889 = vmatpush.msra.mxu0 0.0
    %2890 = vmatpush.msra.mxu0 0.0
    %2891 = vmatpush.msra.mxu0 0.0
    %2892 = vmatpush.msra.mxu0 0.0
    %2893 = vmatpush.msra.mxu0 0.0
    %2894 = vmatpush.msra.mxu0 %v1356
    %2895 = vmatpush.msra.mxu0 %v1355
    %2896 = vmatpush.msra.mxu0 %v1354
    %2897 = vmatpush.msra.mxu0 %v1353
    %2898 = vmatpush.msra.mxu0 %v1352
    %2899 = vmatpush.msra.mxu0 %v1351
    %2900 = vmatpush.msra.mxu0 %v1350
    %2901 = vmatpush.msra.mxu0 %v1349
    %2902 = vmatmul.f32.gmra.mxu0 %v2884
    %v2903 = vpop.f32.mrf.mxu0
    %v2904 = vadd.f32 0.0, %v2903
    %2905 = vdwg.mxu0
    %v2906 = vadd.f32 %v1407, %v2904
    %2908 = vrot.lane.b32.xlu0 %v2770, 96
    %v2909 = vpop.permute.xlu0 %2908
    %v2911 = vadd.f32 %v2906, %v2909
    %v2912 = vxor.u32 %v2911, 2147483648
    %v2913 = vmul.f32 %v2912, 1.442695
    %v2914 = vpow.pop %v2913
    %v2915 = vadd.f32 %v2914, 1.0
    %v2916 = vrcp.pop %v2915
    %v2917 = vmul.f32 %v2915, %v2916
    %v2918 = vsub.f32 1.0, %v2917
    %v2919 = vmul.f32 %v2916, %v2918
    %v2920 = vadd.f32 %v2916, %v2919
    %vm2921 = vweird.f32 %v2915
    %vm2922 = vweird.f32 %v2916
    %vm2923 = vmor %vm2921, %vm2922
    %v2924 = vsel %vm2923, %v2916, %v2920
    %v2925 = vand.u32 2147483647, %v2915
    %vm2926 = vcmp.eq.f32.partialorder %v2925, 8.507059e+37
    %v2927 = vand.u32 %v2915, 2147483648
    %v2928 = vor.u32 1.1754944e-38, %v2927
    %v2929 = vsel %vm2926, %v2928, %v2924
    %v2930 = vmul.f32 1.0, %v2929
    %2931 = vrot.lane.b32.xlu0 %v2770, 32
    %v2932 = vpop.permute.xlu0 %2931
    %v2934 = vmul.f32 %v2930, %v2932
    %2936 = vrot.lane.b32.xlu0 %v2934, 64
    %v2937 = vpop.permute.xlu0 %2936
    %v2939 = vadd.f32 %v2906, %v2937
    %v2940 = vtanh.pop %v2939
    %v2941 = vsub.f32 1.0, %v2930
    %2943 = vrot.lane.b32.xlu0 %v2940, 96
    %v2944 = vpop.permute.xlu0 %2943
    %v2946 = vmul.f32 %v2941, %v2944
    %v2948 = vmul.f32 %v2930, %v2745
    %v2949 = vadd.f32 %v2946, %v2948
    %2951 = vrot.lane.b32.xlu0 %v2949, 96
    %v2952 = vpop.permute.xlu0 %2951
    %2954 = vst.msk [vmem:[#allocation2 + $0x18] sm:$0xf] %vm1679, %v2952
    %2955 = vst.msk [vmem:[#allocation3 + $0x18] sm:$0xf] %vm1681, %v2882
    %v2956 = vld [vmem:[#allocation2] sm:$0xff]
    %v2957 = vld [vmem:[#allocation2 + $0x8] sm:$0xff]
    %v2958 = vld [vmem:[#allocation2 + $0x10] sm:$0xff]
    %v2959 = vld [vmem:[#allocation2 + $0x18] sm:$0xf]
    %v2960 = vld [vmem:[#allocation4 + $0x1b0] sm:$0xff]
    %v2961 = vld [vmem:[#allocation4 + $0x1b8] sm:$0xff]
    %v2962 = vld [vmem:[#allocation4 + $0x1c0] sm:$0xff]
    %v2963 = vld [vmem:[#allocation4 + $0x1c8] sm:$0xff]
    %v2964 = vld [vmem:[#allocation3] sm:$0xff]
    %v2965 = vld [vmem:[#allocation3 + $0x8] sm:$0xff]
    %v2966 = vld [vmem:[#allocation3 + $0x10] sm:$0xff]
    %v2967 = vld [vmem:[#allocation3 + $0x18] sm:$0xf]
    %v2968 = vld [vmem:[#allocation4 + $0x1d0] sm:$0xff]
    %v2969 = vld [vmem:[#allocation4 + $0x1d8] sm:$0xff]
    %v2970 = vld [vmem:[#allocation4 + $0x1e0] sm:$0xff]
    %v2971 = vld [vmem:[#allocation4 + $0x1e8] sm:$0xff]
    %v2972 = vld [vmem:[#allocation4 + $0x1f0] sm:$0xff]
    %v2973 = vld [vmem:[#allocation4 + $0x1f8] sm:$0xff]
    %v2974 = vld [vmem:[#allocation4 + $0x200] sm:$0xff]
    %v2975 = vld [vmem:[#allocation4 + $0x208] sm:$0xff]
    %v2977 = vsel %vm1282, %v2964, 0
    %v2980 = vsel %vm1282, %v2965, 0
    %v2983 = vsel %vm1282, %v2966, 0
    %v2986 = vsel %vm1282, %v2967, 0
    %2988 = vmatpush.msra.mxu0 0.0
    %2989 = vmatpush.msra.mxu0 0.0
    %2990 = vmatpush.msra.mxu0 0.0
    %2991 = vmatpush.msra.mxu0 0.0
    %2992 = vmatpush.msra.mxu0 0.0
    %2993 = vmatpush.msra.mxu0 0.0
    %2994 = vmatpush.msra.mxu0 0.0
    %2995 = vmatpush.msra.mxu0 0.0
    %2996 = vmatpush.msra.mxu0 %v2975
    %2997 = vmatpush.msra.mxu0 %v2974
    %2998 = vmatpush.msra.mxu0 %v2973
    %2999 = vmatpush.msra.mxu0 %v2972
    %3000 = vmatpush.msra.mxu0 %v2971
    %3001 = vmatpush.msra.mxu0 %v2970
    %3002 = vmatpush.msra.mxu0 %v2969
    %3003 = vmatpush.msra.mxu0 %v2968
    %3004 = vmatmul.f32.gmra.mxu0 %v2977
    %v3005 = vpop.f32.mrf.mxu0
    %v3006 = vadd.f32 0.0, %v3005
    %3007 = vmatmul.f32.gmra.mxu0 %v2980
    %v3008 = vpop.f32.mrf.mxu0
    %v3009 = vadd.f32 0.0, %v3008
    %3010 = vmatmul.f32.gmra.mxu0 %v2983
    %v3011 = vpop.f32.mrf.mxu0
    %v3012 = vadd.f32 0.0, %v3011
    %3013 = vmatmul.f32.gmra.mxu0 %v2986
    %v3014 = vpop.f32.mrf.mxu0
    %v3015 = vadd.f32 0.0, %v3014
    %3016 = vdwg.mxu0
    %v3018 = vsel %vm129, %v2956, 0
    %v3021 = vsel %vm129, %v2957, 0
    %v3024 = vsel %vm129, %v2958, 0
    %v3027 = vsel %vm129, %v2959, 0
    %3029 = vmatpush.msra.mxu0 0.0
    %3030 = vmatpush.msra.mxu0 0.0
    %3031 = vmatpush.msra.mxu0 0.0
    %3032 = vmatpush.msra.mxu0 0.0
    %3033 = vmatpush.msra.mxu0 0.0
    %3034 = vmatpush.msra.mxu0 0.0
    %3035 = vmatpush.msra.mxu0 0.0
    %3036 = vmatpush.msra.mxu0 0.0
    %3037 = vmatpush.msra.mxu0 0.0
    %3038 = vmatpush.msra.mxu0 0.0
    %3039 = vmatpush.msra.mxu0 0.0
    %3040 = vmatpush.msra.mxu0 0.0
    %3041 = vmatpush.msra.mxu0 %v2963
    %3042 = vmatpush.msra.mxu0 %v2962
    %3043 = vmatpush.msra.mxu0 %v2961
    %3044 = vmatpush.msra.mxu0 %v2960
    %3045 = vmatmul.f32.gmra.mxu0 %v3018
    %v3046 = vpop.f32.mrf.mxu0
    %v3047 = vadd.f32 %v3006, %v3046
    %3048 = vmatmul.f32.gmra.mxu0 %v3021
    %v3049 = vpop.f32.mrf.mxu0
    %v3050 = vadd.f32 %v3009, %v3049
    %3051 = vmatmul.f32.gmra.mxu0 %v3024
    %v3052 = vpop.f32.mrf.mxu0
    %v3053 = vadd.f32 %v3012, %v3052
    %3054 = vmatmul.f32.gmra.mxu0 %v3027
    %v3055 = vpop.f32.mrf.mxu0
    %v3056 = vadd.f32 %v3015, %v3055
    %3057 = vdwg.mxu0
    %v3058 = vadd.f32 %v3047, %v1433
    %v3059 = vadd.f32 %v3050, %v1436
    %v3060 = vadd.f32 %v3053, %v1439
    %v3061 = vadd.f32 %v3056, %v1442
    %v3066 = vrot.slane %v3058, 4
    %v3067 = vrot.slane %v3059, 4
    %v3068 = vsel %vm1253, %v3066, %v3067
    %v3069 = vrot.slane %v3060, 4
    %v3070 = vsel %vm1253, %v3067, %v3069
    %v3071 = vrot.slane %v3061, 4
    %v3072 = vsel %vm1253, %v3069, %v3071
    %v3077 = vsel %vm1253, 0.0, %v3066
    %vm3078 = vcmask 195584
    %3079 = vst.msk [vmem:[#allocation7] sm:$0xff] %vm3078, %v3077
    %3080 = vst.msk [vmem:[#allocation7 + $0x8] sm:$0xff] %vm3078, %v3068
    %3081 = vst.msk [vmem:[#allocation7 + $0x10] sm:$0xff] %vm3078, %v3070
    %3082 = vst.msk [vmem:[#allocation7 + $0x18] sm:$0xff] %vm3078, %v3072
    // Predicated region
    $region18: #{seq2seq_forward.1} parent=1 // pred_check
      _
    $region19: #{seq2seq_forward.1} parent=1 // pred_check_branch
      %3084 = sbr.rel (0) target = $region21
    $region20: #{seq2seq_forward.1} parent=1 // pred_region
      %3086 = vsyncadd [#allocation6], 0
      %s3087 = sshll.u32 [#allocation7], 4
      %s3088 = int_to_ptr.vmem [resolvable:$true] %s3087
      %s3089 = sshll.u32 %s3, 4
      %s3090 = int_to_ptr.hbm [resolvable:$true] %s3089
      %3095 = dma.vmem_to_hbm [thread:$0]  %s3088, 512, %s3090, [#allocation6], 128, 128, 8
    $region21: #{seq2seq_forward.1} parent=1 // pred_fallthru
      _
    // Predicated region
    $region22: #{seq2seq_forward.1} parent=1 // pred_check
      _
    $region23: #{seq2seq_forward.1} parent=1 // pred_check_branch
      %3097 = sbr.rel (0) target = $region25
    $region24: #{seq2seq_forward.1} parent=1 // pred_region
      %3099 = dma.done [#allocation6], 512
    $region25: #{seq2seq_forward.1} parent=1 // pred_fallthru
      _
    %3100 = vsyncpa [#allocation5], 1
    %3101 = vsyncpa [#allocation6], 1

</llo_original>
